<compile_context>
chip_gen: v7x
topology: tpu7x:2x2x1
jax: 0.10.0
libtpu: 0.0.40
codegen_flags: <defaults>
</compile_context>

<pallas_src>
import functools

import jax
import jax.numpy as jnp
import numpy as np
from jax import lax
from jax.experimental import pallas as pl
from jax.experimental.pallas import tpu as pltpu

K = 7           # kernel_size
P = 3           # padding (kernel_size == 7 -> padding 3)
KK = K * K


def _spatial_attention_kernel(w_ref, x_ref, o_ref,
                              sum_ref, max_ref, pa_ref, pm_ref,
                              *, c_total, h, w, nb, ct):
    # w_ref   : (2*K*K,)        SMEM  flattened conv weight [in_ch, ky, kx]
    # x_ref   : (Nb, Ct, H*W)   VMEM  lane-dense channel tile of Nb batch elems
    # o_ref   : (Nb, 1, H*W)    VMEM  lane-dense output (written on last c tile)
    # sum_ref : (Nb, H*W)       VMEM  running channel sum
    # max_ref : (Nb, H*W)       VMEM  running channel max
    # pa_ref  : (Nb, H+2P, W+2P) VMEM zero-padded avg map (finalize only)
    # pm_ref  : (Nb, H+2P, W+2P) VMEM zero-padded max map (finalize only)
    c_idx = pl.program_id(1)
    n_c = pl.num_programs(1)

    # ---- fused channel reduction: one load per channel feeds both sum & max
    v0 = x_ref[:, 0, :].astype(jnp.float32)             # (Nb, HW)
    if ct == 1:
        part_sum, part_max = v0, v0
    elif ct <= 32:
        s, m = v0, v0
        for ch in range(1, ct):                          # static unroll
            v = x_ref[:, ch, :].astype(jnp.float32)
            s = s + v
            m = jnp.maximum(m, v)
        part_sum, part_max = s, m
    else:
        def body(ch, carry):
            s, m = carry
            v = x_ref[:, ch, :].astype(jnp.float32)
            return s + v, jnp.maximum(m, v)
        part_sum, part_max = lax.fori_loop(1, ct, body, (v0, v0), unroll=8)

    @pl.when(c_idx == 0)
    def _init():
        # first tile supplies the init -> no -inf needed for the max
        sum_ref[...] = part_sum
        max_ref[...] = part_max

    @pl.when(c_idx > 0)
    def _accumulate():
        sum_ref[...] = sum_ref[...] + part_sum
        max_ref[...] = jnp.maximum(max_ref[...], part_max)

    @pl.when(c_idx == n_c - 1)
    def _finalize():
        inv_c = jnp.float32(1.0 / c_total)

        # Zero-padded maps (zero border == PyTorch zero-pad of the conv input).
        pa_ref[...] = jnp.zeros_like(pa_ref)
        pm_ref[...] = jnp.zeros_like(pm_ref)
        for r in range(h):                               # one-time, small H
            pa_ref[:, P + r, P:P + w] = sum_ref[:, r * w:(r + 1) * w] * inv_c
            pm_ref[:, P + r, P:P + w] = max_ref[:, r * w:(r + 1) * w]

        # Separable 7x7 conv per batch element (Nb <= 8, static unroll):
        # 7 hoisted lane (dx) slices per map, horizontal MAC chain on the VPU,
        # single sublane (dy) slice per kernel row.
        for b in range(nb):
            ap = pa_ref[b]                               # (H+2P, W+2P)
            mp = pm_ref[b]
            a_sh = [ap[:, dx:dx + w] for dx in range(K)]  # each (H+2P, W)
            m_sh = [mp[:, dx:dx + w] for dx in range(K)]
            acc = jnp.zeros((h, w), dtype=jnp.float32)
            for dy in range(K):
                hrow = a_sh[0] * w_ref[dy * K] + m_sh[0] * w_ref[KK + dy * K]
                for dx in range(1, K):
                    hrow = hrow + a_sh[dx] * w_ref[dy * K + dx]
                    hrow = hrow + m_sh[dx] * w_ref[KK + dy * K + dx]
                acc = acc + hrow[dy:dy + h, :]
            y = jax.nn.sigmoid(acc).astype(o_ref.dtype)  # (H, W)
            for r in range(h):
                o_ref[b, 0:1, r * w:(r + 1) * w] = y[r:r + 1, :]


def _round_up(a, b):
    return (a + b - 1) // b * b


def _budgets():
    """(per-block tile budget, vmem_limit_bytes) by TPU generation."""
    vmem_cap = None
    try:
        info = pltpu.get_tpu_info()
        vmem_cap = getattr(info, "vmem_capacity_bytes", None)
    except Exception:
        vmem_cap = None
    if vmem_cap is None:
        vmem_cap = 64 << 20                   # conservative (v7x per-TC)
    if vmem_cap >= (96 << 20):                # v5e / v6e: 128 MiB VMEM
        return 8 << 20, 64 << 20
    return 4 << 20, 32 << 20                  # v7x: 64 MiB per TC


def _pick_tiles(n, c, hw, itemsize, budget_bytes):
    """Choose (nb, ct) with nb|n, ct|c, using *padded* block bytes."""
    hw_pad = _round_up(hw, 128)

    def block_bytes(nb, ct):
        return nb * _round_up(ct, 8) * hw_pad * itemsize

    if block_bytes(1, c) <= budget_bytes:
        ct = c
    else:
        ct = None
        for cand in range(8, c, 8):           # multiple of 8 for (8,128) rule
            if c % cand == 0 and block_bytes(1, cand) <= budget_bytes:
                ct = cand
        if ct is None:
            ct = c                            # fall back; vmem_limit governs
    nb = 1
    if ct == c:
        for cand in range(1, min(n, 8) + 1):  # cap 8: bounds finalize unroll
            if n % cand == 0 and block_bytes(cand, c) <= budget_bytes:
                nb = cand
    return nb, ct


def spatial_attention(x, conv_weight):
    """x: (N, C, H, W); conv_weight: (1, 2, K, K). Returns sigmoid(conv([avg,max]))."""
    N, C, H, W = x.shape
    HW = H * W
    itemsize = jnp.dtype(x.dtype).itemsize
    tile_budget, vmem_limit = _budgets()
    nb, ct = _pick_tiles(N, C, HW, itemsize, tile_budget)
    n_c_tiles = C // ct
    Hp, Wp = H + 2 * P, W + 2 * P

    x3 = x.reshape(N, C, HW)                  # free view for contiguous NCHW
    w_flat = conv_weight.reshape(-1).astype(jnp.float32)     # (2*K*K,)

    kernel = functools.partial(_spatial_attention_kernel,
                               c_total=C, h=H, w=W, nb=nb, ct=ct)

    flops = 2 * N * C * HW + (4 * KK + 1) * N * HW
    bytes_accessed = (N * C * HW + N * HW) * itemsize + w_flat.size * 4

    out3 = pl.pallas_call(
        kernel,
        out_shape=jax.ShapeDtypeStruct((N, 1, HW), x.dtype),
        grid=(N // nb, n_c_tiles),            # reduction (channel) axis last
        in_specs=[
            pl.BlockSpec(memory_space=pltpu.MemorySpace.SMEM),     # conv weights
            pl.BlockSpec((nb, ct, HW), lambda n, c: (n, c, 0)),    # lane-dense x
        ],
        out_specs=pl.BlockSpec((nb, 1, HW), lambda n, c: (n, 0, 0)),
        scratch_shapes=[
            pltpu.VMEM((nb, HW), jnp.float32),      # running channel sum
            pltpu.VMEM((nb, HW), jnp.float32),      # running channel max
            pltpu.VMEM((nb, Hp, Wp), jnp.float32),  # zero-padded avg map
            pltpu.VMEM((nb, Hp, Wp), jnp.float32),  # zero-padded max map
        ],
        compiler_params=pltpu.CompilerParams(
            dimension_semantics=("parallel", "arbitrary"),
            vmem_limit_bytes=vmem_limit),
        cost_estimate=pl.CostEstimate(
            flops=flops,
            transcendentals=N * HW,
            bytes_accessed=bytes_accessed),
    )(w_flat, x3)
    return out3.reshape(N, 1, H, W)


def spatial_attention_ref(x, conv_weight):
    avg = jnp.mean(x, axis=1, keepdims=True)
    mx = jnp.max(x, axis=1, keepdims=True)
    xc = jnp.concatenate([avg, mx], axis=1)
    y = jax.lax.conv_general_dilated(
        xc, conv_weight, window_strides=(1, 1),
        padding=[(P, P), (P, P)],
        dimension_numbers=("NCHW", "OIHW", "NCHW"))
    return jax.nn.sigmoid(y)


if __name__ == "__main__":
    key = jax.random.PRNGKey(0)
    kx, kw = jax.random.split(key)

    N, C, H, W = 2, 4, 16, 16
    x = jax.random.normal(kx, (N, C, H, W), dtype=jnp.float32)

    # deterministic Conv2d(2, 1, 7, bias=False) weight init (kaiming-uniform-like)
    fan_in = 2 * K * K
    bound = 1.0 / np.sqrt(fan_in)
    conv_weight = jax.random.uniform(
        kw, (1, 2, K, K), dtype=jnp.float32, minval=-bound, maxval=bound)

    out = spatial_attention(x, conv_weight)
    out = jax.block_until_ready(out)

    ref = spatial_attention_ref(x, conv_weight)
    np.testing.assert_allclose(np.asarray(out), np.asarray(ref),
                               rtol=1e-5, atol=1e-5)
    print("KERNEL_OK")
</pallas_src>

<mosaic_0001>
module attributes {stable_mosaic.version = 11 : i64} {
  func.func @_spatial_attention_kernel(%arg0: i32, %arg1: i32, %arg2: memref<98xf32, #tpu.memory_space<smem>>, %arg3: memref<2x4x256xf32, #tpu.memory_space<vmem>>, %arg4: memref<2x1x256xf32, #tpu.memory_space<vmem>>, %arg5: memref<2x256xf32, #tpu.memory_space<vmem>>, %arg6: memref<2x256xf32, #tpu.memory_space<vmem>>, %arg7: memref<2x22x22xf32, #tpu.memory_space<vmem>>, %arg8: memref<2x22x22xf32, #tpu.memory_space<vmem>>) attributes {dimension_semantics = [#tpu.dimension_semantics<parallel>, #tpu.dimension_semantics<arbitrary>], iteration_bounds = array<i64: 1, 1>, scalar_prefetch = 0 : i64, scratch_operands = 4 : i64, tpu.core_type = #tpu.core_type<tc>, window_params = [{transform_indices = @transform_0, window_bounds = array<i64: 98>}, {transform_indices = @transform_1, window_bounds = array<i64: 2, 4, 256>}, {transform_indices = @transform_2, window_bounds = array<i64: 2, 1, 256>}]} {
    %c0 = arith.constant 0 : index
    %c0_0 = arith.constant 0 : index
    %c0_1 = arith.constant 0 : index
    %0 = vector.load %arg3[%c0, %c0_0, %c0_1] : memref<2x4x256xf32, #tpu.memory_space<vmem>>, vector<2x1x256xf32>
    %1 = vector.shape_cast %0 : vector<2x1x256xf32> to vector<2x256xf32>
    %c0_2 = arith.constant 0 : index
    %c1 = arith.constant 1 : index
    %c0_3 = arith.constant 0 : index
    %2 = vector.load %arg3[%c0_2, %c1, %c0_3] : memref<2x4x256xf32, #tpu.memory_space<vmem>>, vector<2x1x256xf32>
    %3 = vector.shape_cast %2 : vector<2x1x256xf32> to vector<2x256xf32>
    %4 = arith.addf %1, %3 : vector<2x256xf32>
    %5 = arith.maximumf %1, %3 : vector<2x256xf32>
    %c0_4 = arith.constant 0 : index
    %c2 = arith.constant 2 : index
    %c0_5 = arith.constant 0 : index
    %6 = vector.load %arg3[%c0_4, %c2, %c0_5] : memref<2x4x256xf32, #tpu.memory_space<vmem>>, vector<2x1x256xf32>
    %7 = vector.shape_cast %6 : vector<2x1x256xf32> to vector<2x256xf32>
    %8 = arith.addf %4, %7 : vector<2x256xf32>
    %9 = arith.maximumf %5, %7 : vector<2x256xf32>
    %c0_6 = arith.constant 0 : index
    %c3 = arith.constant 3 : index
    %c0_7 = arith.constant 0 : index
    %10 = vector.load %arg3[%c0_6, %c3, %c0_7] : memref<2x4x256xf32, #tpu.memory_space<vmem>>, vector<2x1x256xf32>
    %11 = vector.shape_cast %10 : vector<2x1x256xf32> to vector<2x256xf32>
    %12 = arith.addf %8, %11 : vector<2x256xf32>
    %13 = arith.maximumf %9, %11 : vector<2x256xf32>
    %c0_i32 = arith.constant 0 : i32
    %14 = arith.cmpi eq, %arg1, %c0_i32 : i32
    %15 = arith.extui %14 : i1 to i32
    %c0_i32_8 = arith.constant 0 : i32
    %16 = arith.cmpi ne, %15, %c0_i32_8 : i32
    scf.if %16 {
      %c0_13 = arith.constant 0 : index
      %c0_14 = arith.constant 0 : index
      %23 = vector.load %arg5[%c0_13, %c0_14] : memref<2x256xf32, #tpu.memory_space<vmem>>, vector<2x256xf32>
      tpu.vector_store %arg5[%c0_13, %c0_14], %12 {strides = array<i32>} : memref<2x256xf32, #tpu.memory_space<vmem>>, vector<2x256xf32>,
      %c0_15 = arith.constant 0 : index
      %c0_16 = arith.constant 0 : index
      %24 = vector.load %arg6[%c0_15, %c0_16] : memref<2x256xf32, #tpu.memory_space<vmem>>, vector<2x256xf32>
      tpu.vector_store %arg6[%c0_15, %c0_16], %13 {strides = array<i32>} : memref<2x256xf32, #tpu.memory_space<vmem>>, vector<2x256xf32>,
    } else {
    }
    %c0_i32_9 = arith.constant 0 : i32
    %17 = arith.cmpi sgt, %arg1, %c0_i32_9 : i32
    %18 = arith.extui %17 : i1 to i32
    %c0_i32_10 = arith.constant 0 : i32
    %19 = arith.cmpi ne, %18, %c0_i32_10 : i32
    scf.if %19 {
      %c0_13 = arith.constant 0 : index
      %c0_14 = arith.constant 0 : index
      %23 = vector.load %arg5[%c0_13, %c0_14] : memref<2x256xf32, #tpu.memory_space<vmem>>, vector<2x256xf32>
      %24 = arith.addf %23, %12 : vector<2x256xf32>
      %c0_15 = arith.constant 0 : index
      %c0_16 = arith.constant 0 : index
      %25 = vector.load %arg5[%c0_15, %c0_16] : memref<2x256xf32, #tpu.memory_space<vmem>>, vector<2x256xf32>
      tpu.vector_store %arg5[%c0_15, %c0_16], %24 {strides = array<i32>} : memref<2x256xf32, #tpu.memory_space<vmem>>, vector<2x256xf32>,
      %c0_17 = arith.constant 0 : index
      %c0_18 = arith.constant 0 : index
      %26 = vector.load %arg6[%c0_17, %c0_18] : memref<2x256xf32, #tpu.memory_space<vmem>>, vector<2x256xf32>
      %27 = arith.maximumf %26, %13 : vector<2x256xf32>
      %c0_19 = arith.constant 0 : index
      %c0_20 = arith.constant 0 : index
      %28 = vector.load %arg6[%c0_19, %c0_20] : memref<2x256xf32, #tpu.memory_space<vmem>>, vector<2x256xf32>
      tpu.vector_store %arg6[%c0_19, %c0_20], %27 {strides = array<i32>} : memref<2x256xf32, #tpu.memory_space<vmem>>, vector<2x256xf32>,
    } else {
    }
    %c0_i32_11 = arith.constant 0 : i32
    %20 = arith.cmpi eq, %arg1, %c0_i32_11 : i32
    %21 = arith.extui %20 : i1 to i32
    %c0_i32_12 = arith.constant 0 : i32
    %22 = arith.cmpi ne, %21, %c0_i32_12 : i32
    scf.if %22 {
      %cst = arith.constant 0.000000e+00 : f32
      %23 = vector.broadcast %cst : f32 to vector<2x22x22xf32>
      %c0_13 = arith.constant 0 : index
      %c0_14 = arith.constant 0 : index
      %c0_15 = arith.constant 0 : index
      %24 = vector.load %arg7[%c0_13, %c0_14, %c0_15] : memref<2x22x22xf32, #tpu.memory_space<vmem>>, vector<2x22x22xf32>
      tpu.vector_store %arg7[%c0_13, %c0_14, %c0_15], %23 {strides = array<i32>} : memref<2x22x22xf32, #tpu.memory_space<vmem>>, vector<2x22x22xf32>,
      %cst_16 = arith.constant 0.000000e+00 : f32
      %25 = vector.broadcast %cst_16 : f32 to vector<2x22x22xf32>
      %c0_17 = arith.constant 0 : index
      %c0_18 = arith.constant 0 : index
      %c0_19 = arith.constant 0 : index
      %26 = vector.load %arg8[%c0_17, %c0_18, %c0_19] : memref<2x22x22xf32, #tpu.memory_space<vmem>>, vector<2x22x22xf32>
      tpu.vector_store %arg8[%c0_17, %c0_18, %c0_19], %25 {strides = array<i32>} : memref<2x22x22xf32, #tpu.memory_space<vmem>>, vector<2x22x22xf32>,
      %c0_20 = arith.constant 0 : index
      %c0_21 = arith.constant 0 : index
      %27 = vector.load %arg5[%c0_20, %c0_21] : memref<2x256xf32, #tpu.memory_space<vmem>>, vector<2x16xf32>
      %cst_22 = arith.constant 2.500000e-01 : f32
      %28 = vector.broadcast %cst_22 : f32 to vector<2x16xf32>
      %29 = arith.mulf %27, %28 : vector<2x16xf32>
      %c0_23 = arith.constant 0 : index
      %c3_24 = arith.constant 3 : index
      %c3_25 = arith.constant 3 : index
      %30 = vector.load %arg7[%c0_23, %c3_24, %c3_25] : memref<2x22x22xf32, #tpu.memory_space<vmem>>, vector<2x1x16xf32>
      %31 = vector.shape_cast %30 : vector<2x1x16xf32> to vector<2x16xf32>
      %32 = vector.shape_cast %29 : vector<2x16xf32> to vector<2x1x16xf32>
      tpu.vector_store %arg7[%c0_23, %c3_24, %c3_25], %32 {strides = array<i32>} : memref<2x22x22xf32, #tpu.memory_space<vmem>>, vector<2x1x16xf32>,
      %c0_26 = arith.constant 0 : index
      %c0_27 = arith.constant 0 : index
      %33 = vector.load %arg6[%c0_26, %c0_27] : memref<2x256xf32, #tpu.memory_space<vmem>>, vector<2x16xf32>
      %c0_28 = arith.constant 0 : index
      %c3_29 = arith.constant 3 : index
      %c3_30 = arith.constant 3 : index
      %34 = vector.load %arg8[%c0_28, %c3_29, %c3_30] : memref<2x22x22xf32, #tpu.memory_space<vmem>>, vector<2x1x16xf32>
      %35 = vector.shape_cast %34 : vector<2x1x16xf32> to vector<2x16xf32>
      %36 = vector.shape_cast %33 : vector<2x16xf32> to vector<2x1x16xf32>
      tpu.vector_store %arg8[%c0_28, %c3_29, %c3_30], %36 {strides = array<i32>} : memref<2x22x22xf32, #tpu.memory_space<vmem>>, vector<2x1x16xf32>,
      %c0_31 = arith.constant 0 : index
      %c16 = arith.constant 16 : index
      %37 = vector.load %arg5[%c0_31, %c16] : memref<2x256xf32, #tpu.memory_space<vmem>>, vector<2x16xf32>
      %cst_32 = arith.constant 2.500000e-01 : f32
      %38 = vector.broadcast %cst_32 : f32 to vector<2x16xf32>
      %39 = arith.mulf %37, %38 : vector<2x16xf32>
      %c0_33 = arith.constant 0 : index
      %c4 = arith.constant 4 : index
      %c3_34 = arith.constant 3 : index
      %40 = vector.load %arg7[%c0_33, %c4, %c3_34] : memref<2x22x22xf32, #tpu.memory_space<vmem>>, vector<2x1x16xf32>
      %41 = vector.shape_cast %40 : vector<2x1x16xf32> to vector<2x16xf32>
      %42 = vector.shape_cast %39 : vector<2x16xf32> to vector<2x1x16xf32>
      tpu.vector_store %arg7[%c0_33, %c4, %c3_34], %42 {strides = array<i32>} : memref<2x22x22xf32, #tpu.memory_space<vmem>>, vector<2x1x16xf32>,
      %c0_35 = arith.constant 0 : index
      %c16_36 = arith.constant 16 : index
      %43 = vector.load %arg6[%c0_35, %c16_36] : memref<2x256xf32, #tpu.memory_space<vmem>>, vector<2x16xf32>
      %c0_37 = arith.constant 0 : index
      %c4_38 = arith.constant 4 : index
      %c3_39 = arith.constant 3 : index
      %44 = vector.load %arg8[%c0_37, %c4_38, %c3_39] : memref<2x22x22xf32, #tpu.memory_space<vmem>>, vector<2x1x16xf32>
      %45 = vector.shape_cast %44 : vector<2x1x16xf32> to vector<2x16xf32>
      %46 = vector.shape_cast %43 : vector<2x16xf32> to vector<2x1x16xf32>
      tpu.vector_store %arg8[%c0_37, %c4_38, %c3_39], %46 {strides = array<i32>} : memref<2x22x22xf32, #tpu.memory_space<vmem>>, vector<2x1x16xf32>,
      %c0_40 = arith.constant 0 : index
      %c32 = arith.constant 32 : index
      %47 = vector.load %arg5[%c0_40, %c32] : memref<2x256xf32, #tpu.memory_space<vmem>>, vector<2x16xf32>
      %cst_41 = arith.constant 2.500000e-01 : f32
      %48 = vector.broadcast %cst_41 : f32 to vector<2x16xf32>
      %49 = arith.mulf %47, %48 : vector<2x16xf32>
      %c0_42 = arith.constant 0 : index
      %c5 = arith.constant 5 : index
      %c3_43 = arith.constant 3 : index
      %50 = vector.load %arg7[%c0_42, %c5, %c3_43] : memref<2x22x22xf32, #tpu.memory_space<vmem>>, vector<2x1x16xf32>
      %51 = vector.shape_cast %50 : vector<2x1x16xf32> to vector<2x16xf32>
      %52 = vector.shape_cast %49 : vector<2x16xf32> to vector<2x1x16xf32>
      tpu.vector_store %arg7[%c0_42, %c5, %c3_43], %52 {strides = array<i32>} : memref<2x22x22xf32, #tpu.memory_space<vmem>>, vector<2x1x16xf32>,
      %c0_44 = arith.constant 0 : index
      %c32_45 = arith.constant 32 : index
      %53 = vector.load %arg6[%c0_44, %c32_45] : memref<2x256xf32, #tpu.memory_space<vmem>>, vector<2x16xf32>
      %c0_46 = arith.constant 0 : index
      %c5_47 = arith.constant 5 : index
      %c3_48 = arith.constant 3 : index
      %54 = vector.load %arg8[%c0_46, %c5_47, %c3_48] : memref<2x22x22xf32, #tpu.memory_space<vmem>>, vector<2x1x16xf32>
      %55 = vector.shape_cast %54 : vector<2x1x16xf32> to vector<2x16xf32>
      %56 = vector.shape_cast %53 : vector<2x16xf32> to vector<2x1x16xf32>
      tpu.vector_store %arg8[%c0_46, %c5_47, %c3_48], %56 {strides = array<i32>} : memref<2x22x22xf32, #tpu.memory_space<vmem>>, vector<2x1x16xf32>,
      %c0_49 = arith.constant 0 : index
      %c48 = arith.constant 48 : index
      %57 = vector.load %arg5[%c0_49, %c48] : memref<2x256xf32, #tpu.memory_space<vmem>>, vector<2x16xf32>
      %cst_50 = arith.constant 2.500000e-01 : f32
      %58 = vector.broadcast %cst_50 : f32 to vector<2x16xf32>
      %59 = arith.mulf %57, %58 : vector<2x16xf32>
      %c0_51 = arith.constant 0 : index
      %c6 = arith.constant 6 : index
      %c3_52 = arith.constant 3 : index
      %60 = vector.load %arg7[%c0_51, %c6, %c3_52] : memref<2x22x22xf32, #tpu.memory_space<vmem>>, vector<2x1x16xf32>
      %61 = vector.shape_cast %60 : vector<2x1x16xf32> to vector<2x16xf32>
      %62 = vector.shape_cast %59 : vector<2x16xf32> to vector<2x1x16xf32>
      tpu.vector_store %arg7[%c0_51, %c6, %c3_52], %62 {strides = array<i32>} : memref<2x22x22xf32, #tpu.memory_space<vmem>>, vector<2x1x16xf32>,
      %c0_53 = arith.constant 0 : index
      %c48_54 = arith.constant 48 : index
      %63 = vector.load %arg6[%c0_53, %c48_54] : memref<2x256xf32, #tpu.memory_space<vmem>>, vector<2x16xf32>
      %c0_55 = arith.constant 0 : index
      %c6_56 = arith.constant 6 : index
      %c3_57 = arith.constant 3 : index
      %64 = vector.load %arg8[%c0_55, %c6_56, %c3_57] : memref<2x22x22xf32, #tpu.memory_space<vmem>>, vector<2x1x16xf32>
      %65 = vector.shape_cast %64 : vector<2x1x16xf32> to vector<2x16xf32>
      %66 = vector.shape_cast %63 : vector<2x16xf32> to vector<2x1x16xf32>
      tpu.vector_store %arg8[%c0_55, %c6_56, %c3_57], %66 {strides = array<i32>} : memref<2x22x22xf32, #tpu.memory_space<vmem>>, vector<2x1x16xf32>,
      %c0_58 = arith.constant 0 : index
      %c64 = arith.constant 64 : index
      %67 = vector.load %arg5[%c0_58, %c64] : memref<2x256xf32, #tpu.memory_space<vmem>>, vector<2x16xf32>
      %cst_59 = arith.constant 2.500000e-01 : f32
      %68 = vector.broadcast %cst_59 : f32 to vector<2x16xf32>
      %69 = arith.mulf %67, %68 : vector<2x16xf32>
      %c0_60 = arith.constant 0 : index
      %c7 = arith.constant 7 : index
      %c3_61 = arith.constant 3 : index
      %70 = vector.load %arg7[%c0_60, %c7, %c3_61] : memref<2x22x22xf32, #tpu.memory_space<vmem>>, vector<2x1x16xf32>
      %71 = vector.shape_cast %70 : vector<2x1x16xf32> to vector<2x16xf32>
      %72 = vector.shape_cast %69 : vector<2x16xf32> to vector<2x1x16xf32>
      tpu.vector_store %arg7[%c0_60, %c7, %c3_61], %72 {strides = array<i32>} : memref<2x22x22xf32, #tpu.memory_space<vmem>>, vector<2x1x16xf32>,
      %c0_62 = arith.constant 0 : index
      %c64_63 = arith.constant 64 : index
      %73 = vector.load %arg6[%c0_62, %c64_63] : memref<2x256xf32, #tpu.memory_space<vmem>>, vector<2x16xf32>
      %c0_64 = arith.constant 0 : index
      %c7_65 = arith.constant 7 : index
      %c3_66 = arith.constant 3 : index
      %74 = vector.load %arg8[%c0_64, %c7_65, %c3_66] : memref<2x22x22xf32, #tpu.memory_space<vmem>>, vector<2x1x16xf32>
      %75 = vector.shape_cast %74 : vector<2x1x16xf32> to vector<2x16xf32>
      %76 = vector.shape_cast %73 : vector<2x16xf32> to vector<2x1x16xf32>
      tpu.vector_store %arg8[%c0_64, %c7_65, %c3_66], %76 {strides = array<i32>} : memref<2x22x22xf32, #tpu.memory_space<vmem>>, vector<2x1x16xf32>,
      %c0_67 = arith.constant 0 : index
      %c80 = arith.constant 80 : index
      %77 = vector.load %arg5[%c0_67, %c80] : memref<2x256xf32, #tpu.memory_space<vmem>>, vector<2x16xf32>
      %cst_68 = arith.constant 2.500000e-01 : f32
      %78 = vector.broadcast %cst_68 : f32 to vector<2x16xf32>
      %79 = arith.mulf %77, %78 : vector<2x16xf32>
      %c0_69 = arith.constant 0 : index
      %c8 = arith.constant 8 : index
      %c3_70 = arith.constant 3 : index
      %80 = vector.load %arg7[%c0_69, %c8, %c3_70] : memref<2x22x22xf32, #tpu.memory_space<vmem>>, vector<2x1x16xf32>
      %81 = vector.shape_cast %80 : vector<2x1x16xf32> to vector<2x16xf32>
      %82 = vector.shape_cast %79 : vector<2x16xf32> to vector<2x1x16xf32>
      tpu.vector_store %arg7[%c0_69, %c8, %c3_70], %82 {strides = array<i32>} : memref<2x22x22xf32, #tpu.memory_space<vmem>>, vector<2x1x16xf32>,
      %c0_71 = arith.constant 0 : index
      %c80_72 = arith.constant 80 : index
      %83 = vector.load %arg6[%c0_71, %c80_72] : memref<2x256xf32, #tpu.memory_space<vmem>>, vector<2x16xf32>
      %c0_73 = arith.constant 0 : index
      %c8_74 = arith.constant 8 : index
      %c3_75 = arith.constant 3 : index
      %84 = vector.load %arg8[%c0_73, %c8_74, %c3_75] : memref<2x22x22xf32, #tpu.memory_space<vmem>>, vector<2x1x16xf32>
      %85 = vector.shape_cast %84 : vector<2x1x16xf32> to vector<2x16xf32>
      %86 = vector.shape_cast %83 : vector<2x16xf32> to vector<2x1x16xf32>
      tpu.vector_store %arg8[%c0_73, %c8_74, %c3_75], %86 {strides = array<i32>} : memref<2x22x22xf32, #tpu.memory_space<vmem>>, vector<2x1x16xf32>,
      %c0_76 = arith.constant 0 : index
      %c96 = arith.constant 96 : index
      %87 = vector.load %arg5[%c0_76, %c96] : memref<2x256xf32, #tpu.memory_space<vmem>>, vector<2x16xf32>
      %cst_77 = arith.constant 2.500000e-01 : f32
      %88 = vector.broadcast %cst_77 : f32 to vector<2x16xf32>
      %89 = arith.mulf %87, %88 : vector<2x16xf32>
      %c0_78 = arith.constant 0 : index
      %c9 = arith.constant 9 : index
      %c3_79 = arith.constant 3 : index
      %90 = vector.load %arg7[%c0_78, %c9, %c3_79] : memref<2x22x22xf32, #tpu.memory_space<vmem>>, vector<2x1x16xf32>
      %91 = vector.shape_cast %90 : vector<2x1x16xf32> to vector<2x16xf32>
      %92 = vector.shape_cast %89 : vector<2x16xf32> to vector<2x1x16xf32>
      tpu.vector_store %arg7[%c0_78, %c9, %c3_79], %92 {strides = array<i32>} : memref<2x22x22xf32, #tpu.memory_space<vmem>>, vector<2x1x16xf32>,
      %c0_80 = arith.constant 0 : index
      %c96_81 = arith.constant 96 : index
      %93 = vector.load %arg6[%c0_80, %c96_81] : memref<2x256xf32, #tpu.memory_space<vmem>>, vector<2x16xf32>
      %c0_82 = arith.constant 0 : index
      %c9_83 = arith.constant 9 : index
      %c3_84 = arith.constant 3 : index
      %94 = vector.load %arg8[%c0_82, %c9_83, %c3_84] : memref<2x22x22xf32, #tpu.memory_space<vmem>>, vector<2x1x16xf32>
      %95 = vector.shape_cast %94 : vector<2x1x16xf32> to vector<2x16xf32>
      %96 = vector.shape_cast %93 : vector<2x16xf32> to vector<2x1x16xf32>
      tpu.vector_store %arg8[%c0_82, %c9_83, %c3_84], %96 {strides = array<i32>} : memref<2x22x22xf32, #tpu.memory_space<vmem>>, vector<2x1x16xf32>,
      %c0_85 = arith.constant 0 : index
      %c112 = arith.constant 112 : index
      %97 = vector.load %arg5[%c0_85, %c112] : memref<2x256xf32, #tpu.memory_space<vmem>>, vector<2x16xf32>
      %cst_86 = arith.constant 2.500000e-01 : f32
      %98 = vector.broadcast %cst_86 : f32 to vector<2x16xf32>
      %99 = arith.mulf %97, %98 : vector<2x16xf32>
      %c0_87 = arith.constant 0 : index
      %c10 = arith.constant 10 : index
      %c3_88 = arith.constant 3 : index
      %100 = vector.load %arg7[%c0_87, %c10, %c3_88] : memref<2x22x22xf32, #tpu.memory_space<vmem>>, vector<2x1x16xf32>
      %101 = vector.shape_cast %100 : vector<2x1x16xf32> to vector<2x16xf32>
      %102 = vector.shape_cast %99 : vector<2x16xf32> to vector<2x1x16xf32>
      tpu.vector_store %arg7[%c0_87, %c10, %c3_88], %102 {strides = array<i32>} : memref<2x22x22xf32, #tpu.memory_space<vmem>>, vector<2x1x16xf32>,
      %c0_89 = arith.constant 0 : index
      %c112_90 = arith.constant 112 : index
      %103 = vector.load %arg6[%c0_89, %c112_90] : memref<2x256xf32, #tpu.memory_space<vmem>>, vector<2x16xf32>
      %c0_91 = arith.constant 0 : index
      %c10_92 = arith.constant 10 : index
      %c3_93 = arith.constant 3 : index
      %104 = vector.load %arg8[%c0_91, %c10_92, %c3_93] : memref<2x22x22xf32, #tpu.memory_space<vmem>>, vector<2x1x16xf32>
      %105 = vector.shape_cast %104 : vector<2x1x16xf32> to vector<2x16xf32>
      %106 = vector.shape_cast %103 : vector<2x16xf32> to vector<2x1x16xf32>
      tpu.vector_store %arg8[%c0_91, %c10_92, %c3_93], %106 {strides = array<i32>} : memref<2x22x22xf32, #tpu.memory_space<vmem>>, vector<2x1x16xf32>,
      %c0_94 = arith.constant 0 : index
      %c128 = arith.constant 128 : index
      %107 = vector.load %arg5[%c0_94, %c128] : memref<2x256xf32, #tpu.memory_space<vmem>>, vector<2x16xf32>
      %cst_95 = arith.constant 2.500000e-01 : f32
      %108 = vector.broadcast %cst_95 : f32 to vector<2x16xf32>
      %109 = arith.mulf %107, %108 : vector<2x16xf32>
      %c0_96 = arith.constant 0 : index
      %c11 = arith.constant 11 : index
      %c3_97 = arith.constant 3 : index
      %110 = vector.load %arg7[%c0_96, %c11, %c3_97] : memref<2x22x22xf32, #tpu.memory_space<vmem>>, vector<2x1x16xf32>
      %111 = vector.shape_cast %110 : vector<2x1x16xf32> to vector<2x16xf32>
      %112 = vector.shape_cast %109 : vector<2x16xf32> to vector<2x1x16xf32>
      tpu.vector_store %arg7[%c0_96, %c11, %c3_97], %112 {strides = array<i32>} : memref<2x22x22xf32, #tpu.memory_space<vmem>>, vector<2x1x16xf32>,
      %c0_98 = arith.constant 0 : index
      %c128_99 = arith.constant 128 : index
      %113 = vector.load %arg6[%c0_98, %c128_99] : memref<2x256xf32, #tpu.memory_space<vmem>>, vector<2x16xf32>
      %c0_100 = arith.constant 0 : index
      %c11_101 = arith.constant 11 : index
      %c3_102 = arith.constant 3 : index
      %114 = vector.load %arg8[%c0_100, %c11_101, %c3_102] : memref<2x22x22xf32, #tpu.memory_space<vmem>>, vector<2x1x16xf32>
      %115 = vector.shape_cast %114 : vector<2x1x16xf32> to vector<2x16xf32>
      %116 = vector.shape_cast %113 : vector<2x16xf32> to vector<2x1x16xf32>
      tpu.vector_store %arg8[%c0_100, %c11_101, %c3_102], %116 {strides = array<i32>} : memref<2x22x22xf32, #tpu.memory_space<vmem>>, vector<2x1x16xf32>,
      %c0_103 = arith.constant 0 : index
      %c144 = arith.constant 144 : index
      %117 = vector.load %arg5[%c0_103, %c144] : memref<2x256xf32, #tpu.memory_space<vmem>>, vector<2x16xf32>
      %cst_104 = arith.constant 2.500000e-01 : f32
      %118 = vector.broadcast %cst_104 : f32 to vector<2x16xf32>
      %119 = arith.mulf %117, %118 : vector<2x16xf32>
      %c0_105 = arith.constant 0 : index
      %c12 = arith.constant 12 : index
      %c3_106 = arith.constant 3 : index
      %120 = vector.load %arg7[%c0_105, %c12, %c3_106] : memref<2x22x22xf32, #tpu.memory_space<vmem>>, vector<2x1x16xf32>
      %121 = vector.shape_cast %120 : vector<2x1x16xf32> to vector<2x16xf32>
      %122 = vector.shape_cast %119 : vector<2x16xf32> to vector<2x1x16xf32>
      tpu.vector_store %arg7[%c0_105, %c12, %c3_106], %122 {strides = array<i32>} : memref<2x22x22xf32, #tpu.memory_space<vmem>>, vector<2x1x16xf32>,
      %c0_107 = arith.constant 0 : index
      %c144_108 = arith.constant 144 : index
      %123 = vector.load %arg6[%c0_107, %c144_108] : memref<2x256xf32, #tpu.memory_space<vmem>>, vector<2x16xf32>
      %c0_109 = arith.constant 0 : index
      %c12_110 = arith.constant 12 : index
      %c3_111 = arith.constant 3 : index
      %124 = vector.load %arg8[%c0_109, %c12_110, %c3_111] : memref<2x22x22xf32, #tpu.memory_space<vmem>>, vector<2x1x16xf32>
      %125 = vector.shape_cast %124 : vector<2x1x16xf32> to vector<2x16xf32>
      %126 = vector.shape_cast %123 : vector<2x16xf32> to vector<2x1x16xf32>
      tpu.vector_store %arg8[%c0_109, %c12_110, %c3_111], %126 {strides = array<i32>} : memref<2x22x22xf32, #tpu.memory_space<vmem>>, vector<2x1x16xf32>,
      %c0_112 = arith.constant 0 : index
      %c160 = arith.constant 160 : index
      %127 = vector.load %arg5[%c0_112, %c160] : memref<2x256xf32, #tpu.memory_space<vmem>>, vector<2x16xf32>
      %cst_113 = arith.constant 2.500000e-01 : f32
      %128 = vector.broadcast %cst_113 : f32 to vector<2x16xf32>
      %129 = arith.mulf %127, %128 : vector<2x16xf32>
      %c0_114 = arith.constant 0 : index
      %c13 = arith.constant 13 : index
      %c3_115 = arith.constant 3 : index
      %130 = vector.load %arg7[%c0_114, %c13, %c3_115] : memref<2x22x22xf32, #tpu.memory_space<vmem>>, vector<2x1x16xf32>
      %131 = vector.shape_cast %130 : vector<2x1x16xf32> to vector<2x16xf32>
      %132 = vector.shape_cast %129 : vector<2x16xf32> to vector<2x1x16xf32>
      tpu.vector_store %arg7[%c0_114, %c13, %c3_115], %132 {strides = array<i32>} : memref<2x22x22xf32, #tpu.memory_space<vmem>>, vector<2x1x16xf32>,
      %c0_116 = arith.constant 0 : index
      %c160_117 = arith.constant 160 : index
      %133 = vector.load %arg6[%c0_116, %c160_117] : memref<2x256xf32, #tpu.memory_space<vmem>>, vector<2x16xf32>
      %c0_118 = arith.constant 0 : index
      %c13_119 = arith.constant 13 : index
      %c3_120 = arith.constant 3 : index
      %134 = vector.load %arg8[%c0_118, %c13_119, %c3_120] : memref<2x22x22xf32, #tpu.memory_space<vmem>>, vector<2x1x16xf32>
      %135 = vector.shape_cast %134 : vector<2x1x16xf32> to vector<2x16xf32>
      %136 = vector.shape_cast %133 : vector<2x16xf32> to vector<2x1x16xf32>
      tpu.vector_store %arg8[%c0_118, %c13_119, %c3_120], %136 {strides = array<i32>} : memref<2x22x22xf32, #tpu.memory_space<vmem>>, vector<2x1x16xf32>,
      %c0_121 = arith.constant 0 : index
      %c176 = arith.constant 176 : index
      %137 = vector.load %arg5[%c0_121, %c176] : memref<2x256xf32, #tpu.memory_space<vmem>>, vector<2x16xf32>
      %cst_122 = arith.constant 2.500000e-01 : f32
      %138 = vector.broadcast %cst_122 : f32 to vector<2x16xf32>
      %139 = arith.mulf %137, %138 : vector<2x16xf32>
      %c0_123 = arith.constant 0 : index
      %c14 = arith.constant 14 : index
      %c3_124 = arith.constant 3 : index
      %140 = vector.load %arg7[%c0_123, %c14, %c3_124] : memref<2x22x22xf32, #tpu.memory_space<vmem>>, vector<2x1x16xf32>
      %141 = vector.shape_cast %140 : vector<2x1x16xf32> to vector<2x16xf32>
      %142 = vector.shape_cast %139 : vector<2x16xf32> to vector<2x1x16xf32>
      tpu.vector_store %arg7[%c0_123, %c14, %c3_124], %142 {strides = array<i32>} : memref<2x22x22xf32, #tpu.memory_space<vmem>>, vector<2x1x16xf32>,
      %c0_125 = arith.constant 0 : index
      %c176_126 = arith.constant 176 : index
      %143 = vector.load %arg6[%c0_125, %c176_126] : memref<2x256xf32, #tpu.memory_space<vmem>>, vector<2x16xf32>
      %c0_127 = arith.constant 0 : index
      %c14_128 = arith.constant 14 : index
      %c3_129 = arith.constant 3 : index
      %144 = vector.load %arg8[%c0_127, %c14_128, %c3_129] : memref<2x22x22xf32, #tpu.memory_space<vmem>>, vector<2x1x16xf32>
      %145 = vector.shape_cast %144 : vector<2x1x16xf32> to vector<2x16xf32>
      %146 = vector.shape_cast %143 : vector<2x16xf32> to vector<2x1x16xf32>
      tpu.vector_store %arg8[%c0_127, %c14_128, %c3_129], %146 {strides = array<i32>} : memref<2x22x22xf32, #tpu.memory_space<vmem>>, vector<2x1x16xf32>,
      %c0_130 = arith.constant 0 : index
      %c192 = arith.constant 192 : index
      %147 = vector.load %arg5[%c0_130, %c192] : memref<2x256xf32, #tpu.memory_space<vmem>>, vector<2x16xf32>
      %cst_131 = arith.constant 2.500000e-01 : f32
      %148 = vector.broadcast %cst_131 : f32 to vector<2x16xf32>
      %149 = arith.mulf %147, %148 : vector<2x16xf32>
      %c0_132 = arith.constant 0 : index
      %c15 = arith.constant 15 : index
      %c3_133 = arith.constant 3 : index
      %150 = vector.load %arg7[%c0_132, %c15, %c3_133] : memref<2x22x22xf32, #tpu.memory_space<vmem>>, vector<2x1x16xf32>
      %151 = vector.shape_cast %150 : vector<2x1x16xf32> to vector<2x16xf32>
      %152 = vector.shape_cast %149 : vector<2x16xf32> to vector<2x1x16xf32>
      tpu.vector_store %arg7[%c0_132, %c15, %c3_133], %152 {strides = array<i32>} : memref<2x22x22xf32, #tpu.memory_space<vmem>>, vector<2x1x16xf32>,
      %c0_134 = arith.constant 0 : index
      %c192_135 = arith.constant 192 : index
      %153 = vector.load %arg6[%c0_134, %c192_135] : memref<2x256xf32, #tpu.memory_space<vmem>>, vector<2x16xf32>
      %c0_136 = arith.constant 0 : index
      %c15_137 = arith.constant 15 : index
      %c3_138 = arith.constant 3 : index
      %154 = vector.load %arg8[%c0_136, %c15_137, %c3_138] : memref<2x22x22xf32, #tpu.memory_space<vmem>>, vector<2x1x16xf32>
      %155 = vector.shape_cast %154 : vector<2x1x16xf32> to vector<2x16xf32>
      %156 = vector.shape_cast %153 : vector<2x16xf32> to vector<2x1x16xf32>
      tpu.vector_store %arg8[%c0_136, %c15_137, %c3_138], %156 {strides = array<i32>} : memref<2x22x22xf32, #tpu.memory_space<vmem>>, vector<2x1x16xf32>,
      %c0_139 = arith.constant 0 : index
      %c208 = arith.constant 208 : index
      %157 = vector.load %arg5[%c0_139, %c208] : memref<2x256xf32, #tpu.memory_space<vmem>>, vector<2x16xf32>
      %cst_140 = arith.constant 2.500000e-01 : f32
      %158 = vector.broadcast %cst_140 : f32 to vector<2x16xf32>
      %159 = arith.mulf %157, %158 : vector<2x16xf32>
      %c0_141 = arith.constant 0 : index
      %c16_142 = arith.constant 16 : index
      %c3_143 = arith.constant 3 : index
      %160 = vector.load %arg7[%c0_141, %c16_142, %c3_143] : memref<2x22x22xf32, #tpu.memory_space<vmem>>, vector<2x1x16xf32>
      %161 = vector.shape_cast %160 : vector<2x1x16xf32> to vector<2x16xf32>
      %162 = vector.shape_cast %159 : vector<2x16xf32> to vector<2x1x16xf32>
      tpu.vector_store %arg7[%c0_141, %c16_142, %c3_143], %162 {strides = array<i32>} : memref<2x22x22xf32, #tpu.memory_space<vmem>>, vector<2x1x16xf32>,
      %c0_144 = arith.constant 0 : index
      %c208_145 = arith.constant 208 : index
      %163 = vector.load %arg6[%c0_144, %c208_145] : memref<2x256xf32, #tpu.memory_space<vmem>>, vector<2x16xf32>
      %c0_146 = arith.constant 0 : index
      %c16_147 = arith.constant 16 : index
      %c3_148 = arith.constant 3 : index
      %164 = vector.load %arg8[%c0_146, %c16_147, %c3_148] : memref<2x22x22xf32, #tpu.memory_space<vmem>>, vector<2x1x16xf32>
      %165 = vector.shape_cast %164 : vector<2x1x16xf32> to vector<2x16xf32>
      %166 = vector.shape_cast %163 : vector<2x16xf32> to vector<2x1x16xf32>
      tpu.vector_store %arg8[%c0_146, %c16_147, %c3_148], %166 {strides = array<i32>} : memref<2x22x22xf32, #tpu.memory_space<vmem>>, vector<2x1x16xf32>,
      %c0_149 = arith.constant 0 : index
      %c224 = arith.constant 224 : index
      %167 = vector.load %arg5[%c0_149, %c224] : memref<2x256xf32, #tpu.memory_space<vmem>>, vector<2x16xf32>
      %cst_150 = arith.constant 2.500000e-01 : f32
      %168 = vector.broadcast %cst_150 : f32 to vector<2x16xf32>
      %169 = arith.mulf %167, %168 : vector<2x16xf32>
      %c0_151 = arith.constant 0 : index
      %c17 = arith.constant 17 : index
      %c3_152 = arith.constant 3 : index
      %170 = vector.load %arg7[%c0_151, %c17, %c3_152] : memref<2x22x22xf32, #tpu.memory_space<vmem>>, vector<2x1x16xf32>
      %171 = vector.shape_cast %170 : vector<2x1x16xf32> to vector<2x16xf32>
      %172 = vector.shape_cast %169 : vector<2x16xf32> to vector<2x1x16xf32>
      tpu.vector_store %arg7[%c0_151, %c17, %c3_152], %172 {strides = array<i32>} : memref<2x22x22xf32, #tpu.memory_space<vmem>>, vector<2x1x16xf32>,
      %c0_153 = arith.constant 0 : index
      %c224_154 = arith.constant 224 : index
      %173 = vector.load %arg6[%c0_153, %c224_154] : memref<2x256xf32, #tpu.memory_space<vmem>>, vector<2x16xf32>
      %c0_155 = arith.constant 0 : index
      %c17_156 = arith.constant 17 : index
      %c3_157 = arith.constant 3 : index
      %174 = vector.load %arg8[%c0_155, %c17_156, %c3_157] : memref<2x22x22xf32, #tpu.memory_space<vmem>>, vector<2x1x16xf32>
      %175 = vector.shape_cast %174 : vector<2x1x16xf32> to vector<2x16xf32>
      %176 = vector.shape_cast %173 : vector<2x16xf32> to vector<2x1x16xf32>
      tpu.vector_store %arg8[%c0_155, %c17_156, %c3_157], %176 {strides = array<i32>} : memref<2x22x22xf32, #tpu.memory_space<vmem>>, vector<2x1x16xf32>,
      %c0_158 = arith.constant 0 : index
      %c240 = arith.constant 240 : index
      %177 = vector.load %arg5[%c0_158, %c240] : memref<2x256xf32, #tpu.memory_space<vmem>>, vector<2x16xf32>
      %cst_159 = arith.constant 2.500000e-01 : f32
      %178 = vector.broadcast %cst_159 : f32 to vector<2x16xf32>
      %179 = arith.mulf %177, %178 : vector<2x16xf32>
      %c0_160 = arith.constant 0 : index
      %c18 = arith.constant 18 : index
      %c3_161 = arith.constant 3 : index
      %180 = vector.load %arg7[%c0_160, %c18, %c3_161] : memref<2x22x22xf32, #tpu.memory_space<vmem>>, vector<2x1x16xf32>
      %181 = vector.shape_cast %180 : vector<2x1x16xf32> to vector<2x16xf32>
      %182 = vector.shape_cast %179 : vector<2x16xf32> to vector<2x1x16xf32>
      tpu.vector_store %arg7[%c0_160, %c18, %c3_161], %182 {strides = array<i32>} : memref<2x22x22xf32, #tpu.memory_space<vmem>>, vector<2x1x16xf32>,
      %c0_162 = arith.constant 0 : index
      %c240_163 = arith.constant 240 : index
      %183 = vector.load %arg6[%c0_162, %c240_163] : memref<2x256xf32, #tpu.memory_space<vmem>>, vector<2x16xf32>
      %c0_164 = arith.constant 0 : index
      %c18_165 = arith.constant 18 : index
      %c3_166 = arith.constant 3 : index
      %184 = vector.load %arg8[%c0_164, %c18_165, %c3_166] : memref<2x22x22xf32, #tpu.memory_space<vmem>>, vector<2x1x16xf32>
      %185 = vector.shape_cast %184 : vector<2x1x16xf32> to vector<2x16xf32>
      %186 = vector.shape_cast %183 : vector<2x16xf32> to vector<2x1x16xf32>
      tpu.vector_store %arg8[%c0_164, %c18_165, %c3_166], %186 {strides = array<i32>} : memref<2x22x22xf32, #tpu.memory_space<vmem>>, vector<2x1x16xf32>,
      %c0_167 = arith.constant 0 : index
      %c0_168 = arith.constant 0 : index
      %c0_169 = arith.constant 0 : index
      %187 = vector.load %arg7[%c0_167, %c0_168, %c0_169] : memref<2x22x22xf32, #tpu.memory_space<vmem>>, vector<1x22x22xf32>
      %188 = vector.shape_cast %187 : vector<1x22x22xf32> to vector<22x22xf32>
      %c0_170 = arith.constant 0 : index
      %c0_171 = arith.constant 0 : index
      %c0_172 = arith.constant 0 : index
      %189 = vector.load %arg8[%c0_170, %c0_171, %c0_172] : memref<2x22x22xf32, #tpu.memory_space<vmem>>, vector<1x22x22xf32>
      %190 = vector.shape_cast %189 : vector<1x22x22xf32> to vector<22x22xf32>
      %191 = vector.extract_strided_slice %188 {offsets = [0, 0], sizes = [22, 16], strides = [1, 1]} : vector<22x22xf32> to vector<22x16xf32>
      %192 = vector.extract_strided_slice %188 {offsets = [0, 1], sizes = [22, 16], strides = [1, 1]} : vector<22x22xf32> to vector<22x16xf32>
      %193 = vector.extract_strided_slice %188 {offsets = [0, 2], sizes = [22, 16], strides = [1, 1]} : vector<22x22xf32> to vector<22x16xf32>
      %194 = vector.extract_strided_slice %188 {offsets = [0, 3], sizes = [22, 16], strides = [1, 1]} : vector<22x22xf32> to vector<22x16xf32>
      %195 = vector.extract_strided_slice %188 {offsets = [0, 4], sizes = [22, 16], strides = [1, 1]} : vector<22x22xf32> to vector<22x16xf32>
      %196 = vector.extract_strided_slice %188 {offsets = [0, 5], sizes = [22, 16], strides = [1, 1]} : vector<22x22xf32> to vector<22x16xf32>
      %197 = vector.extract_strided_slice %188 {offsets = [0, 6], sizes = [22, 16], strides = [1, 1]} : vector<22x22xf32> to vector<22x16xf32>
      %198 = vector.extract_strided_slice %190 {offsets = [0, 0], sizes = [22, 16], strides = [1, 1]} : vector<22x22xf32> to vector<22x16xf32>
      %199 = vector.extract_strided_slice %190 {offsets = [0, 1], sizes = [22, 16], strides = [1, 1]} : vector<22x22xf32> to vector<22x16xf32>
      %200 = vector.extract_strided_slice %190 {offsets = [0, 2], sizes = [22, 16], strides = [1, 1]} : vector<22x22xf32> to vector<22x16xf32>
      %201 = vector.extract_strided_slice %190 {offsets = [0, 3], sizes = [22, 16], strides = [1, 1]} : vector<22x22xf32> to vector<22x16xf32>
      %202 = vector.extract_strided_slice %190 {offsets = [0, 4], sizes = [22, 16], strides = [1, 1]} : vector<22x22xf32> to vector<22x16xf32>
      %203 = vector.extract_strided_slice %190 {offsets = [0, 5], sizes = [22, 16], strides = [1, 1]} : vector<22x22xf32> to vector<22x16xf32>
      %204 = vector.extract_strided_slice %190 {offsets = [0, 6], sizes = [22, 16], strides = [1, 1]} : vector<22x22xf32> to vector<22x16xf32>
      %cst_173 = arith.constant 0.000000e+00 : f32
      %205 = vector.broadcast %cst_173 : f32 to vector<16x16xf32>
      %c0_174 = arith.constant 0 : index
      %206 = memref.load %arg2[%c0_174] : memref<98xf32, #tpu.memory_space<smem>>
      %207 = vector.broadcast %206 : f32 to vector<22x16xf32>
      %208 = arith.mulf %191, %207 : vector<22x16xf32>
      %c49 = arith.constant 49 : index
      %209 = memref.load %arg2[%c49] : memref<98xf32, #tpu.memory_space<smem>>
      %210 = vector.broadcast %209 : f32 to vector<22x16xf32>
      %211 = arith.mulf %198, %210 : vector<22x16xf32>
      %212 = arith.addf %208, %211 : vector<22x16xf32>
      %c1_175 = arith.constant 1 : index
      %213 = memref.load %arg2[%c1_175] : memref<98xf32, #tpu.memory_space<smem>>
      %214 = vector.broadcast %213 : f32 to vector<22x16xf32>
      %215 = arith.mulf %192, %214 : vector<22x16xf32>
      %216 = arith.addf %212, %215 : vector<22x16xf32>
      %c50 = arith.constant 50 : index
      %217 = memref.load %arg2[%c50] : memref<98xf32, #tpu.memory_space<smem>>
      %218 = vector.broadcast %217 : f32 to vector<22x16xf32>
      %219 = arith.mulf %199, %218 : vector<22x16xf32>
      %220 = arith.addf %216, %219 : vector<22x16xf32>
      %c2_176 = arith.constant 2 : index
      %221 = memref.load %arg2[%c2_176] : memref<98xf32, #tpu.memory_space<smem>>
      %222 = vector.broadcast %221 : f32 to vector<22x16xf32>
      %223 = arith.mulf %193, %222 : vector<22x16xf32>
      %224 = arith.addf %220, %223 : vector<22x16xf32>
      %c51 = arith.constant 51 : index
      %225 = memref.load %arg2[%c51] : memref<98xf32, #tpu.memory_space<smem>>
      %226 = vector.broadcast %225 : f32 to vector<22x16xf32>
      %227 = arith.mulf %200, %226 : vector<22x16xf32>
      %228 = arith.addf %224, %227 : vector<22x16xf32>
      %c3_177 = arith.constant 3 : index
      %229 = memref.load %arg2[%c3_177] : memref<98xf32, #tpu.memory_space<smem>>
      %230 = vector.broadcast %229 : f32 to vector<22x16xf32>
      %231 = arith.mulf %194, %230 : vector<22x16xf32>
      %232 = arith.addf %228, %231 : vector<22x16xf32>
      %c52 = arith.constant 52 : index
      %233 = memref.load %arg2[%c52] : memref<98xf32, #tpu.memory_space<smem>>
      %234 = vector.broadcast %233 : f32 to vector<22x16xf32>
      %235 = arith.mulf %201, %234 : vector<22x16xf32>
      %236 = arith.addf %232, %235 : vector<22x16xf32>
      %c4_178 = arith.constant 4 : index
      %237 = memref.load %arg2[%c4_178] : memref<98xf32, #tpu.memory_space<smem>>
      %238 = vector.broadcast %237 : f32 to vector<22x16xf32>
      %239 = arith.mulf %195, %238 : vector<22x16xf32>
      %240 = arith.addf %236, %239 : vector<22x16xf32>
      %c53 = arith.constant 53 : index
      %241 = memref.load %arg2[%c53] : memref<98xf32, #tpu.memory_space<smem>>
      %242 = vector.broadcast %241 : f32 to vector<22x16xf32>
      %243 = arith.mulf %202, %242 : vector<22x16xf32>
      %244 = arith.addf %240, %243 : vector<22x16xf32>
      %c5_179 = arith.constant 5 : index
      %245 = memref.load %arg2[%c5_179] : memref<98xf32, #tpu.memory_space<smem>>
      %246 = vector.broadcast %245 : f32 to vector<22x16xf32>
      %247 = arith.mulf %196, %246 : vector<22x16xf32>
      %248 = arith.addf %244, %247 : vector<22x16xf32>
      %c54 = arith.constant 54 : index
      %249 = memref.load %arg2[%c54] : memref<98xf32, #tpu.memory_space<smem>>
      %250 = vector.broadcast %249 : f32 to vector<22x16xf32>
      %251 = arith.mulf %203, %250 : vector<22x16xf32>
      %252 = arith.addf %248, %251 : vector<22x16xf32>
      %c6_180 = arith.constant 6 : index
      %253 = memref.load %arg2[%c6_180] : memref<98xf32, #tpu.memory_space<smem>>
      %254 = vector.broadcast %253 : f32 to vector<22x16xf32>
      %255 = arith.mulf %197, %254 : vector<22x16xf32>
      %256 = arith.addf %252, %255 : vector<22x16xf32>
      %c55 = arith.constant 55 : index
      %257 = memref.load %arg2[%c55] : memref<98xf32, #tpu.memory_space<smem>>
      %258 = vector.broadcast %257 : f32 to vector<22x16xf32>
      %259 = arith.mulf %204, %258 : vector<22x16xf32>
      %260 = arith.addf %256, %259 : vector<22x16xf32>
      %261 = vector.extract_strided_slice %260 {offsets = [0, 0], sizes = [16, 16], strides = [1, 1]} : vector<22x16xf32> to vector<16x16xf32>
      %262 = arith.addf %205, %261 : vector<16x16xf32>
      %c7_181 = arith.constant 7 : index
      %263 = memref.load %arg2[%c7_181] : memref<98xf32, #tpu.memory_space<smem>>
      %264 = vector.broadcast %263 : f32 to vector<22x16xf32>
      %265 = arith.mulf %191, %264 : vector<22x16xf32>
      %c56 = arith.constant 56 : index
      %266 = memref.load %arg2[%c56] : memref<98xf32, #tpu.memory_space<smem>>
      %267 = vector.broadcast %266 : f32 to vector<22x16xf32>
      %268 = arith.mulf %198, %267 : vector<22x16xf32>
      %269 = arith.addf %265, %268 : vector<22x16xf32>
      %c8_182 = arith.constant 8 : index
      %270 = memref.load %arg2[%c8_182] : memref<98xf32, #tpu.memory_space<smem>>
      %271 = vector.broadcast %270 : f32 to vector<22x16xf32>
      %272 = arith.mulf %192, %271 : vector<22x16xf32>
      %273 = arith.addf %269, %272 : vector<22x16xf32>
      %c57 = arith.constant 57 : index
      %274 = memref.load %arg2[%c57] : memref<98xf32, #tpu.memory_space<smem>>
      %275 = vector.broadcast %274 : f32 to vector<22x16xf32>
      %276 = arith.mulf %199, %275 : vector<22x16xf32>
      %277 = arith.addf %273, %276 : vector<22x16xf32>
      %c9_183 = arith.constant 9 : index
      %278 = memref.load %arg2[%c9_183] : memref<98xf32, #tpu.memory_space<smem>>
      %279 = vector.broadcast %278 : f32 to vector<22x16xf32>
      %280 = arith.mulf %193, %279 : vector<22x16xf32>
      %281 = arith.addf %277, %280 : vector<22x16xf32>
      %c58 = arith.constant 58 : index
      %282 = memref.load %arg2[%c58] : memref<98xf32, #tpu.memory_space<smem>>
      %283 = vector.broadcast %282 : f32 to vector<22x16xf32>
      %284 = arith.mulf %200, %283 : vector<22x16xf32>
      %285 = arith.addf %281, %284 : vector<22x16xf32>
      %c10_184 = arith.constant 10 : index
      %286 = memref.load %arg2[%c10_184] : memref<98xf32, #tpu.memory_space<smem>>
      %287 = vector.broadcast %286 : f32 to vector<22x16xf32>
      %288 = arith.mulf %194, %287 : vector<22x16xf32>
      %289 = arith.addf %285, %288 : vector<22x16xf32>
      %c59 = arith.constant 59 : index
      %290 = memref.load %arg2[%c59] : memref<98xf32, #tpu.memory_space<smem>>
      %291 = vector.broadcast %290 : f32 to vector<22x16xf32>
      %292 = arith.mulf %201, %291 : vector<22x16xf32>
      %293 = arith.addf %289, %292 : vector<22x16xf32>
      %c11_185 = arith.constant 11 : index
      %294 = memref.load %arg2[%c11_185] : memref<98xf32, #tpu.memory_space<smem>>
      %295 = vector.broadcast %294 : f32 to vector<22x16xf32>
      %296 = arith.mulf %195, %295 : vector<22x16xf32>
      %297 = arith.addf %293, %296 : vector<22x16xf32>
      %c60 = arith.constant 60 : index
      %298 = memref.load %arg2[%c60] : memref<98xf32, #tpu.memory_space<smem>>
      %299 = vector.broadcast %298 : f32 to vector<22x16xf32>
      %300 = arith.mulf %202, %299 : vector<22x16xf32>
      %301 = arith.addf %297, %300 : vector<22x16xf32>
      %c12_186 = arith.constant 12 : index
      %302 = memref.load %arg2[%c12_186] : memref<98xf32, #tpu.memory_space<smem>>
      %303 = vector.broadcast %302 : f32 to vector<22x16xf32>
      %304 = arith.mulf %196, %303 : vector<22x16xf32>
      %305 = arith.addf %301, %304 : vector<22x16xf32>
      %c61 = arith.constant 61 : index
      %306 = memref.load %arg2[%c61] : memref<98xf32, #tpu.memory_space<smem>>
      %307 = vector.broadcast %306 : f32 to vector<22x16xf32>
      %308 = arith.mulf %203, %307 : vector<22x16xf32>
      %309 = arith.addf %305, %308 : vector<22x16xf32>
      %c13_187 = arith.constant 13 : index
      %310 = memref.load %arg2[%c13_187] : memref<98xf32, #tpu.memory_space<smem>>
      %311 = vector.broadcast %310 : f32 to vector<22x16xf32>
      %312 = arith.mulf %197, %311 : vector<22x16xf32>
      %313 = arith.addf %309, %312 : vector<22x16xf32>
      %c62 = arith.constant 62 : index
      %314 = memref.load %arg2[%c62] : memref<98xf32, #tpu.memory_space<smem>>
      %315 = vector.broadcast %314 : f32 to vector<22x16xf32>
      %316 = arith.mulf %204, %315 : vector<22x16xf32>
      %317 = arith.addf %313, %316 : vector<22x16xf32>
      %318 = vector.extract_strided_slice %317 {offsets = [1, 0], sizes = [16, 16], strides = [1, 1]} : vector<22x16xf32> to vector<16x16xf32>
      %319 = arith.addf %262, %318 : vector<16x16xf32>
      %c14_188 = arith.constant 14 : index
      %320 = memref.load %arg2[%c14_188] : memref<98xf32, #tpu.memory_space<smem>>
      %321 = vector.broadcast %320 : f32 to vector<22x16xf32>
      %322 = arith.mulf %191, %321 : vector<22x16xf32>
      %c63 = arith.constant 63 : index
      %323 = memref.load %arg2[%c63] : memref<98xf32, #tpu.memory_space<smem>>
      %324 = vector.broadcast %323 : f32 to vector<22x16xf32>
      %325 = arith.mulf %198, %324 : vector<22x16xf32>
      %326 = arith.addf %322, %325 : vector<22x16xf32>
      %c15_189 = arith.constant 15 : index
      %327 = memref.load %arg2[%c15_189] : memref<98xf32, #tpu.memory_space<smem>>
      %328 = vector.broadcast %327 : f32 to vector<22x16xf32>
      %329 = arith.mulf %192, %328 : vector<22x16xf32>
      %330 = arith.addf %326, %329 : vector<22x16xf32>
      %c64_190 = arith.constant 64 : index
      %331 = memref.load %arg2[%c64_190] : memref<98xf32, #tpu.memory_space<smem>>
      %332 = vector.broadcast %331 : f32 to vector<22x16xf32>
      %333 = arith.mulf %199, %332 : vector<22x16xf32>
      %334 = arith.addf %330, %333 : vector<22x16xf32>
      %c16_191 = arith.constant 16 : index
      %335 = memref.load %arg2[%c16_191] : memref<98xf32, #tpu.memory_space<smem>>
      %336 = vector.broadcast %335 : f32 to vector<22x16xf32>
      %337 = arith.mulf %193, %336 : vector<22x16xf32>
      %338 = arith.addf %334, %337 : vector<22x16xf32>
      %c65 = arith.constant 65 : index
      %339 = memref.load %arg2[%c65] : memref<98xf32, #tpu.memory_space<smem>>
      %340 = vector.broadcast %339 : f32 to vector<22x16xf32>
      %341 = arith.mulf %200, %340 : vector<22x16xf32>
      %342 = arith.addf %338, %341 : vector<22x16xf32>
      %c17_192 = arith.constant 17 : index
      %343 = memref.load %arg2[%c17_192] : memref<98xf32, #tpu.memory_space<smem>>
      %344 = vector.broadcast %343 : f32 to vector<22x16xf32>
      %345 = arith.mulf %194, %344 : vector<22x16xf32>
      %346 = arith.addf %342, %345 : vector<22x16xf32>
      %c66 = arith.constant 66 : index
      %347 = memref.load %arg2[%c66] : memref<98xf32, #tpu.memory_space<smem>>
      %348 = vector.broadcast %347 : f32 to vector<22x16xf32>
      %349 = arith.mulf %201, %348 : vector<22x16xf32>
      %350 = arith.addf %346, %349 : vector<22x16xf32>
      %c18_193 = arith.constant 18 : index
      %351 = memref.load %arg2[%c18_193] : memref<98xf32, #tpu.memory_space<smem>>
      %352 = vector.broadcast %351 : f32 to vector<22x16xf32>
      %353 = arith.mulf %195, %352 : vector<22x16xf32>
      %354 = arith.addf %350, %353 : vector<22x16xf32>
      %c67 = arith.constant 67 : index
      %355 = memref.load %arg2[%c67] : memref<98xf32, #tpu.memory_space<smem>>
      %356 = vector.broadcast %355 : f32 to vector<22x16xf32>
      %357 = arith.mulf %202, %356 : vector<22x16xf32>
      %358 = arith.addf %354, %357 : vector<22x16xf32>
      %c19 = arith.constant 19 : index
      %359 = memref.load %arg2[%c19] : memref<98xf32, #tpu.memory_space<smem>>
      %360 = vector.broadcast %359 : f32 to vector<22x16xf32>
      %361 = arith.mulf %196, %360 : vector<22x16xf32>
      %362 = arith.addf %358, %361 : vector<22x16xf32>
      %c68 = arith.constant 68 : index
      %363 = memref.load %arg2[%c68] : memref<98xf32, #tpu.memory_space<smem>>
      %364 = vector.broadcast %363 : f32 to vector<22x16xf32>
      %365 = arith.mulf %203, %364 : vector<22x16xf32>
      %366 = arith.addf %362, %365 : vector<22x16xf32>
      %c20 = arith.constant 20 : index
      %367 = memref.load %arg2[%c20] : memref<98xf32, #tpu.memory_space<smem>>
      %368 = vector.broadcast %367 : f32 to vector<22x16xf32>
      %369 = arith.mulf %197, %368 : vector<22x16xf32>
      %370 = arith.addf %366, %369 : vector<22x16xf32>
      %c69 = arith.constant 69 : index
      %371 = memref.load %arg2[%c69] : memref<98xf32, #tpu.memory_space<smem>>
      %372 = vector.broadcast %371 : f32 to vector<22x16xf32>
      %373 = arith.mulf %204, %372 : vector<22x16xf32>
      %374 = arith.addf %370, %373 : vector<22x16xf32>
      %375 = vector.extract_strided_slice %374 {offsets = [2, 0], sizes = [16, 16], strides = [1, 1]} : vector<22x16xf32> to vector<16x16xf32>
      %376 = arith.addf %319, %375 : vector<16x16xf32>
      %c21 = arith.constant 21 : index
      %377 = memref.load %arg2[%c21] : memref<98xf32, #tpu.memory_space<smem>>
      %378 = vector.broadcast %377 : f32 to vector<22x16xf32>
      %379 = arith.mulf %191, %378 : vector<22x16xf32>
      %c70 = arith.constant 70 : index
      %380 = memref.load %arg2[%c70] : memref<98xf32, #tpu.memory_space<smem>>
      %381 = vector.broadcast %380 : f32 to vector<22x16xf32>
      %382 = arith.mulf %198, %381 : vector<22x16xf32>
      %383 = arith.addf %379, %382 : vector<22x16xf32>
      %c22 = arith.constant 22 : index
      %384 = memref.load %arg2[%c22] : memref<98xf32, #tpu.memory_space<smem>>
      %385 = vector.broadcast %384 : f32 to vector<22x16xf32>
      %386 = arith.mulf %192, %385 : vector<22x16xf32>
      %387 = arith.addf %383, %386 : vector<22x16xf32>
      %c71 = arith.constant 71 : index
      %388 = memref.load %arg2[%c71] : memref<98xf32, #tpu.memory_space<smem>>
      %389 = vector.broadcast %388 : f32 to vector<22x16xf32>
      %390 = arith.mulf %199, %389 : vector<22x16xf32>
      %391 = arith.addf %387, %390 : vector<22x16xf32>
      %c23 = arith.constant 23 : index
      %392 = memref.load %arg2[%c23] : memref<98xf32, #tpu.memory_space<smem>>
      %393 = vector.broadcast %392 : f32 to vector<22x16xf32>
      %394 = arith.mulf %193, %393 : vector<22x16xf32>
      %395 = arith.addf %391, %394 : vector<22x16xf32>
      %c72 = arith.constant 72 : index
      %396 = memref.load %arg2[%c72] : memref<98xf32, #tpu.memory_space<smem>>
      %397 = vector.broadcast %396 : f32 to vector<22x16xf32>
      %398 = arith.mulf %200, %397 : vector<22x16xf32>
      %399 = arith.addf %395, %398 : vector<22x16xf32>
      %c24 = arith.constant 24 : index
      %400 = memref.load %arg2[%c24] : memref<98xf32, #tpu.memory_space<smem>>
      %401 = vector.broadcast %400 : f32 to vector<22x16xf32>
      %402 = arith.mulf %194, %401 : vector<22x16xf32>
      %403 = arith.addf %399, %402 : vector<22x16xf32>
      %c73 = arith.constant 73 : index
      %404 = memref.load %arg2[%c73] : memref<98xf32, #tpu.memory_space<smem>>
      %405 = vector.broadcast %404 : f32 to vector<22x16xf32>
      %406 = arith.mulf %201, %405 : vector<22x16xf32>
      %407 = arith.addf %403, %406 : vector<22x16xf32>
      %c25 = arith.constant 25 : index
      %408 = memref.load %arg2[%c25] : memref<98xf32, #tpu.memory_space<smem>>
      %409 = vector.broadcast %408 : f32 to vector<22x16xf32>
      %410 = arith.mulf %195, %409 : vector<22x16xf32>
      %411 = arith.addf %407, %410 : vector<22x16xf32>
      %c74 = arith.constant 74 : index
      %412 = memref.load %arg2[%c74] : memref<98xf32, #tpu.memory_space<smem>>
      %413 = vector.broadcast %412 : f32 to vector<22x16xf32>
      %414 = arith.mulf %202, %413 : vector<22x16xf32>
      %415 = arith.addf %411, %414 : vector<22x16xf32>
      %c26 = arith.constant 26 : index
      %416 = memref.load %arg2[%c26] : memref<98xf32, #tpu.memory_space<smem>>
      %417 = vector.broadcast %416 : f32 to vector<22x16xf32>
      %418 = arith.mulf %196, %417 : vector<22x16xf32>
      %419 = arith.addf %415, %418 : vector<22x16xf32>
      %c75 = arith.constant 75 : index
      %420 = memref.load %arg2[%c75] : memref<98xf32, #tpu.memory_space<smem>>
      %421 = vector.broadcast %420 : f32 to vector<22x16xf32>
      %422 = arith.mulf %203, %421 : vector<22x16xf32>
      %423 = arith.addf %419, %422 : vector<22x16xf32>
      %c27 = arith.constant 27 : index
      %424 = memref.load %arg2[%c27] : memref<98xf32, #tpu.memory_space<smem>>
      %425 = vector.broadcast %424 : f32 to vector<22x16xf32>
      %426 = arith.mulf %197, %425 : vector<22x16xf32>
      %427 = arith.addf %423, %426 : vector<22x16xf32>
      %c76 = arith.constant 76 : index
      %428 = memref.load %arg2[%c76] : memref<98xf32, #tpu.memory_space<smem>>
      %429 = vector.broadcast %428 : f32 to vector<22x16xf32>
      %430 = arith.mulf %204, %429 : vector<22x16xf32>
      %431 = arith.addf %427, %430 : vector<22x16xf32>
      %432 = vector.extract_strided_slice %431 {offsets = [3, 0], sizes = [16, 16], strides = [1, 1]} : vector<22x16xf32> to vector<16x16xf32>
      %433 = arith.addf %376, %432 : vector<16x16xf32>
      %c28 = arith.constant 28 : index
      %434 = memref.load %arg2[%c28] : memref<98xf32, #tpu.memory_space<smem>>
      %435 = vector.broadcast %434 : f32 to vector<22x16xf32>
      %436 = arith.mulf %191, %435 : vector<22x16xf32>
      %c77 = arith.constant 77 : index
      %437 = memref.load %arg2[%c77] : memref<98xf32, #tpu.memory_space<smem>>
      %438 = vector.broadcast %437 : f32 to vector<22x16xf32>
      %439 = arith.mulf %198, %438 : vector<22x16xf32>
      %440 = arith.addf %436, %439 : vector<22x16xf32>
      %c29 = arith.constant 29 : index
      %441 = memref.load %arg2[%c29] : memref<98xf32, #tpu.memory_space<smem>>
      %442 = vector.broadcast %441 : f32 to vector<22x16xf32>
      %443 = arith.mulf %192, %442 : vector<22x16xf32>
      %444 = arith.addf %440, %443 : vector<22x16xf32>
      %c78 = arith.constant 78 : index
      %445 = memref.load %arg2[%c78] : memref<98xf32, #tpu.memory_space<smem>>
      %446 = vector.broadcast %445 : f32 to vector<22x16xf32>
      %447 = arith.mulf %199, %446 : vector<22x16xf32>
      %448 = arith.addf %444, %447 : vector<22x16xf32>
      %c30 = arith.constant 30 : index
      %449 = memref.load %arg2[%c30] : memref<98xf32, #tpu.memory_space<smem>>
      %450 = vector.broadcast %449 : f32 to vector<22x16xf32>
      %451 = arith.mulf %193, %450 : vector<22x16xf32>
      %452 = arith.addf %448, %451 : vector<22x16xf32>
      %c79 = arith.constant 79 : index
      %453 = memref.load %arg2[%c79] : memref<98xf32, #tpu.memory_space<smem>>
      %454 = vector.broadcast %453 : f32 to vector<22x16xf32>
      %455 = arith.mulf %200, %454 : vector<22x16xf32>
      %456 = arith.addf %452, %455 : vector<22x16xf32>
      %c31 = arith.constant 31 : index
      %457 = memref.load %arg2[%c31] : memref<98xf32, #tpu.memory_space<smem>>
      %458 = vector.broadcast %457 : f32 to vector<22x16xf32>
      %459 = arith.mulf %194, %458 : vector<22x16xf32>
      %460 = arith.addf %456, %459 : vector<22x16xf32>
      %c80_194 = arith.constant 80 : index
      %461 = memref.load %arg2[%c80_194] : memref<98xf32, #tpu.memory_space<smem>>
      %462 = vector.broadcast %461 : f32 to vector<22x16xf32>
      %463 = arith.mulf %201, %462 : vector<22x16xf32>
      %464 = arith.addf %460, %463 : vector<22x16xf32>
      %c32_195 = arith.constant 32 : index
      %465 = memref.load %arg2[%c32_195] : memref<98xf32, #tpu.memory_space<smem>>
      %466 = vector.broadcast %465 : f32 to vector<22x16xf32>
      %467 = arith.mulf %195, %466 : vector<22x16xf32>
      %468 = arith.addf %464, %467 : vector<22x16xf32>
      %c81 = arith.constant 81 : index
      %469 = memref.load %arg2[%c81] : memref<98xf32, #tpu.memory_space<smem>>
      %470 = vector.broadcast %469 : f32 to vector<22x16xf32>
      %471 = arith.mulf %202, %470 : vector<22x16xf32>
      %472 = arith.addf %468, %471 : vector<22x16xf32>
      %c33 = arith.constant 33 : index
      %473 = memref.load %arg2[%c33] : memref<98xf32, #tpu.memory_space<smem>>
      %474 = vector.broadcast %473 : f32 to vector<22x16xf32>
      %475 = arith.mulf %196, %474 : vector<22x16xf32>
      %476 = arith.addf %472, %475 : vector<22x16xf32>
      %c82 = arith.constant 82 : index
      %477 = memref.load %arg2[%c82] : memref<98xf32, #tpu.memory_space<smem>>
      %478 = vector.broadcast %477 : f32 to vector<22x16xf32>
      %479 = arith.mulf %203, %478 : vector<22x16xf32>
      %480 = arith.addf %476, %479 : vector<22x16xf32>
      %c34 = arith.constant 34 : index
      %481 = memref.load %arg2[%c34] : memref<98xf32, #tpu.memory_space<smem>>
      %482 = vector.broadcast %481 : f32 to vector<22x16xf32>
      %483 = arith.mulf %197, %482 : vector<22x16xf32>
      %484 = arith.addf %480, %483 : vector<22x16xf32>
      %c83 = arith.constant 83 : index
      %485 = memref.load %arg2[%c83] : memref<98xf32, #tpu.memory_space<smem>>
      %486 = vector.broadcast %485 : f32 to vector<22x16xf32>
      %487 = arith.mulf %204, %486 : vector<22x16xf32>
      %488 = arith.addf %484, %487 : vector<22x16xf32>
      %489 = vector.extract_strided_slice %488 {offsets = [4, 0], sizes = [16, 16], strides = [1, 1]} : vector<22x16xf32> to vector<16x16xf32>
      %490 = arith.addf %433, %489 : vector<16x16xf32>
      %c35 = arith.constant 35 : index
      %491 = memref.load %arg2[%c35] : memref<98xf32, #tpu.memory_space<smem>>
      %492 = vector.broadcast %491 : f32 to vector<22x16xf32>
      %493 = arith.mulf %191, %492 : vector<22x16xf32>
      %c84 = arith.constant 84 : index
      %494 = memref.load %arg2[%c84] : memref<98xf32, #tpu.memory_space<smem>>
      %495 = vector.broadcast %494 : f32 to vector<22x16xf32>
      %496 = arith.mulf %198, %495 : vector<22x16xf32>
      %497 = arith.addf %493, %496 : vector<22x16xf32>
      %c36 = arith.constant 36 : index
      %498 = memref.load %arg2[%c36] : memref<98xf32, #tpu.memory_space<smem>>
      %499 = vector.broadcast %498 : f32 to vector<22x16xf32>
      %500 = arith.mulf %192, %499 : vector<22x16xf32>
      %501 = arith.addf %497, %500 : vector<22x16xf32>
      %c85 = arith.constant 85 : index
      %502 = memref.load %arg2[%c85] : memref<98xf32, #tpu.memory_space<smem>>
      %503 = vector.broadcast %502 : f32 to vector<22x16xf32>
      %504 = arith.mulf %199, %503 : vector<22x16xf32>
      %505 = arith.addf %501, %504 : vector<22x16xf32>
      %c37 = arith.constant 37 : index
      %506 = memref.load %arg2[%c37] : memref<98xf32, #tpu.memory_space<smem>>
      %507 = vector.broadcast %506 : f32 to vector<22x16xf32>
      %508 = arith.mulf %193, %507 : vector<22x16xf32>
      %509 = arith.addf %505, %508 : vector<22x16xf32>
      %c86 = arith.constant 86 : index
      %510 = memref.load %arg2[%c86] : memref<98xf32, #tpu.memory_space<smem>>
      %511 = vector.broadcast %510 : f32 to vector<22x16xf32>
      %512 = arith.mulf %200, %511 : vector<22x16xf32>
      %513 = arith.addf %509, %512 : vector<22x16xf32>
      %c38 = arith.constant 38 : index
      %514 = memref.load %arg2[%c38] : memref<98xf32, #tpu.memory_space<smem>>
      %515 = vector.broadcast %514 : f32 to vector<22x16xf32>
      %516 = arith.mulf %194, %515 : vector<22x16xf32>
      %517 = arith.addf %513, %516 : vector<22x16xf32>
      %c87 = arith.constant 87 : index
      %518 = memref.load %arg2[%c87] : memref<98xf32, #tpu.memory_space<smem>>
      %519 = vector.broadcast %518 : f32 to vector<22x16xf32>
      %520 = arith.mulf %201, %519 : vector<22x16xf32>
      %521 = arith.addf %517, %520 : vector<22x16xf32>
      %c39 = arith.constant 39 : index
      %522 = memref.load %arg2[%c39] : memref<98xf32, #tpu.memory_space<smem>>
      %523 = vector.broadcast %522 : f32 to vector<22x16xf32>
      %524 = arith.mulf %195, %523 : vector<22x16xf32>
      %525 = arith.addf %521, %524 : vector<22x16xf32>
      %c88 = arith.constant 88 : index
      %526 = memref.load %arg2[%c88] : memref<98xf32, #tpu.memory_space<smem>>
      %527 = vector.broadcast %526 : f32 to vector<22x16xf32>
      %528 = arith.mulf %202, %527 : vector<22x16xf32>
      %529 = arith.addf %525, %528 : vector<22x16xf32>
      %c40 = arith.constant 40 : index
      %530 = memref.load %arg2[%c40] : memref<98xf32, #tpu.memory_space<smem>>
      %531 = vector.broadcast %530 : f32 to vector<22x16xf32>
      %532 = arith.mulf %196, %531 : vector<22x16xf32>
      %533 = arith.addf %529, %532 : vector<22x16xf32>
      %c89 = arith.constant 89 : index
      %534 = memref.load %arg2[%c89] : memref<98xf32, #tpu.memory_space<smem>>
      %535 = vector.broadcast %534 : f32 to vector<22x16xf32>
      %536 = arith.mulf %203, %535 : vector<22x16xf32>
      %537 = arith.addf %533, %536 : vector<22x16xf32>
      %c41 = arith.constant 41 : index
      %538 = memref.load %arg2[%c41] : memref<98xf32, #tpu.memory_space<smem>>
      %539 = vector.broadcast %538 : f32 to vector<22x16xf32>
      %540 = arith.mulf %197, %539 : vector<22x16xf32>
      %541 = arith.addf %537, %540 : vector<22x16xf32>
      %c90 = arith.constant 90 : index
      %542 = memref.load %arg2[%c90] : memref<98xf32, #tpu.memory_space<smem>>
      %543 = vector.broadcast %542 : f32 to vector<22x16xf32>
      %544 = arith.mulf %204, %543 : vector<22x16xf32>
      %545 = arith.addf %541, %544 : vector<22x16xf32>
      %546 = vector.extract_strided_slice %545 {offsets = [5, 0], sizes = [16, 16], strides = [1, 1]} : vector<22x16xf32> to vector<16x16xf32>
      %547 = arith.addf %490, %546 : vector<16x16xf32>
      %c42 = arith.constant 42 : index
      %548 = memref.load %arg2[%c42] : memref<98xf32, #tpu.memory_space<smem>>
      %549 = vector.broadcast %548 : f32 to vector<22x16xf32>
      %550 = arith.mulf %191, %549 : vector<22x16xf32>
      %c91 = arith.constant 91 : index
      %551 = memref.load %arg2[%c91] : memref<98xf32, #tpu.memory_space<smem>>
      %552 = vector.broadcast %551 : f32 to vector<22x16xf32>
      %553 = arith.mulf %198, %552 : vector<22x16xf32>
      %554 = arith.addf %550, %553 : vector<22x16xf32>
      %c43 = arith.constant 43 : index
      %555 = memref.load %arg2[%c43] : memref<98xf32, #tpu.memory_space<smem>>
      %556 = vector.broadcast %555 : f32 to vector<22x16xf32>
      %557 = arith.mulf %192, %556 : vector<22x16xf32>
      %558 = arith.addf %554, %557 : vector<22x16xf32>
      %c92 = arith.constant 92 : index
      %559 = memref.load %arg2[%c92] : memref<98xf32, #tpu.memory_space<smem>>
      %560 = vector.broadcast %559 : f32 to vector<22x16xf32>
      %561 = arith.mulf %199, %560 : vector<22x16xf32>
      %562 = arith.addf %558, %561 : vector<22x16xf32>
      %c44 = arith.constant 44 : index
      %563 = memref.load %arg2[%c44] : memref<98xf32, #tpu.memory_space<smem>>
      %564 = vector.broadcast %563 : f32 to vector<22x16xf32>
      %565 = arith.mulf %193, %564 : vector<22x16xf32>
      %566 = arith.addf %562, %565 : vector<22x16xf32>
      %c93 = arith.constant 93 : index
      %567 = memref.load %arg2[%c93] : memref<98xf32, #tpu.memory_space<smem>>
      %568 = vector.broadcast %567 : f32 to vector<22x16xf32>
      %569 = arith.mulf %200, %568 : vector<22x16xf32>
      %570 = arith.addf %566, %569 : vector<22x16xf32>
      %c45 = arith.constant 45 : index
      %571 = memref.load %arg2[%c45] : memref<98xf32, #tpu.memory_space<smem>>
      %572 = vector.broadcast %571 : f32 to vector<22x16xf32>
      %573 = arith.mulf %194, %572 : vector<22x16xf32>
      %574 = arith.addf %570, %573 : vector<22x16xf32>
      %c94 = arith.constant 94 : index
      %575 = memref.load %arg2[%c94] : memref<98xf32, #tpu.memory_space<smem>>
      %576 = vector.broadcast %575 : f32 to vector<22x16xf32>
      %577 = arith.mulf %201, %576 : vector<22x16xf32>
      %578 = arith.addf %574, %577 : vector<22x16xf32>
      %c46 = arith.constant 46 : index
      %579 = memref.load %arg2[%c46] : memref<98xf32, #tpu.memory_space<smem>>
      %580 = vector.broadcast %579 : f32 to vector<22x16xf32>
      %581 = arith.mulf %195, %580 : vector<22x16xf32>
      %582 = arith.addf %578, %581 : vector<22x16xf32>
      %c95 = arith.constant 95 : index
      %583 = memref.load %arg2[%c95] : memref<98xf32, #tpu.memory_space<smem>>
      %584 = vector.broadcast %583 : f32 to vector<22x16xf32>
      %585 = arith.mulf %202, %584 : vector<22x16xf32>
      %586 = arith.addf %582, %585 : vector<22x16xf32>
      %c47 = arith.constant 47 : index
      %587 = memref.load %arg2[%c47] : memref<98xf32, #tpu.memory_space<smem>>
      %588 = vector.broadcast %587 : f32 to vector<22x16xf32>
      %589 = arith.mulf %196, %588 : vector<22x16xf32>
      %590 = arith.addf %586, %589 : vector<22x16xf32>
      %c96_196 = arith.constant 96 : index
      %591 = memref.load %arg2[%c96_196] : memref<98xf32, #tpu.memory_space<smem>>
      %592 = vector.broadcast %591 : f32 to vector<22x16xf32>
      %593 = arith.mulf %203, %592 : vector<22x16xf32>
      %594 = arith.addf %590, %593 : vector<22x16xf32>
      %c48_197 = arith.constant 48 : index
      %595 = memref.load %arg2[%c48_197] : memref<98xf32, #tpu.memory_space<smem>>
      %596 = vector.broadcast %595 : f32 to vector<22x16xf32>
      %597 = arith.mulf %197, %596 : vector<22x16xf32>
      %598 = arith.addf %594, %597 : vector<22x16xf32>
      %c97 = arith.constant 97 : index
      %599 = memref.load %arg2[%c97] : memref<98xf32, #tpu.memory_space<smem>>
      %600 = vector.broadcast %599 : f32 to vector<22x16xf32>
      %601 = arith.mulf %204, %600 : vector<22x16xf32>
      %602 = arith.addf %598, %601 : vector<22x16xf32>
      %603 = vector.extract_strided_slice %602 {offsets = [6, 0], sizes = [16, 16], strides = [1, 1]} : vector<22x16xf32> to vector<16x16xf32>
      %604 = arith.addf %547, %603 : vector<16x16xf32>
      %605 = arith.negf %604 : vector<16x16xf32>
      %606 = math.exp %605 : vector<16x16xf32>
      %cst_198 = arith.constant 1.000000e+00 : f32
      %607 = vector.broadcast %cst_198 : f32 to vector<16x16xf32>
      %608 = arith.addf %607, %606 : vector<16x16xf32>
      %609 = arith.divf %607, %608 : vector<16x16xf32>
      %610 = vector.extract_strided_slice %609 {offsets = [0, 0], sizes = [1, 16], strides = [1, 1]} : vector<16x16xf32> to vector<1x16xf32>
      %c0_199 = arith.constant 0 : index
      %c0_200 = arith.constant 0 : index
      %c0_201 = arith.constant 0 : index
      %611 = vector.load %arg4[%c0_199, %c0_200, %c0_201] : memref<2x1x256xf32, #tpu.memory_space<vmem>>, vector<1x1x16xf32>
      %612 = vector.shape_cast %611 : vector<1x1x16xf32> to vector<1x16xf32>
      %613 = vector.shape_cast %610 : vector<1x16xf32> to vector<1x1x16xf32>
      tpu.vector_store %arg4[%c0_199, %c0_200, %c0_201], %613 {strides = array<i32>} : memref<2x1x256xf32, #tpu.memory_space<vmem>>, vector<1x1x16xf32>,
      %614 = vector.extract_strided_slice %609 {offsets = [1, 0], sizes = [1, 16], strides = [1, 1]} : vector<16x16xf32> to vector<1x16xf32>
      %c0_202 = arith.constant 0 : index
      %c0_203 = arith.constant 0 : index
      %c16_204 = arith.constant 16 : index
      %615 = vector.load %arg4[%c0_202, %c0_203, %c16_204] : memref<2x1x256xf32, #tpu.memory_space<vmem>>, vector<1x1x16xf32>
      %616 = vector.shape_cast %615 : vector<1x1x16xf32> to vector<1x16xf32>
      %617 = vector.shape_cast %614 : vector<1x16xf32> to vector<1x1x16xf32>
      tpu.vector_store %arg4[%c0_202, %c0_203, %c16_204], %617 {strides = array<i32>} : memref<2x1x256xf32, #tpu.memory_space<vmem>>, vector<1x1x16xf32>,
      %618 = vector.extract_strided_slice %609 {offsets = [2, 0], sizes = [1, 16], strides = [1, 1]} : vector<16x16xf32> to vector<1x16xf32>
      %c0_205 = arith.constant 0 : index
      %c0_206 = arith.constant 0 : index
      %c32_207 = arith.constant 32 : index
      %619 = vector.load %arg4[%c0_205, %c0_206, %c32_207] : memref<2x1x256xf32, #tpu.memory_space<vmem>>, vector<1x1x16xf32>
      %620 = vector.shape_cast %619 : vector<1x1x16xf32> to vector<1x16xf32>
      %621 = vector.shape_cast %618 : vector<1x16xf32> to vector<1x1x16xf32>
      tpu.vector_store %arg4[%c0_205, %c0_206, %c32_207], %621 {strides = array<i32>} : memref<2x1x256xf32, #tpu.memory_space<vmem>>, vector<1x1x16xf32>,
      %622 = vector.extract_strided_slice %609 {offsets = [3, 0], sizes = [1, 16], strides = [1, 1]} : vector<16x16xf32> to vector<1x16xf32>
      %c0_208 = arith.constant 0 : index
      %c0_209 = arith.constant 0 : index
      %c48_210 = arith.constant 48 : index
      %623 = vector.load %arg4[%c0_208, %c0_209, %c48_210] : memref<2x1x256xf32, #tpu.memory_space<vmem>>, vector<1x1x16xf32>
      %624 = vector.shape_cast %623 : vector<1x1x16xf32> to vector<1x16xf32>
      %625 = vector.shape_cast %622 : vector<1x16xf32> to vector<1x1x16xf32>
      tpu.vector_store %arg4[%c0_208, %c0_209, %c48_210], %625 {strides = array<i32>} : memref<2x1x256xf32, #tpu.memory_space<vmem>>, vector<1x1x16xf32>,
      %626 = vector.extract_strided_slice %609 {offsets = [4, 0], sizes = [1, 16], strides = [1, 1]} : vector<16x16xf32> to vector<1x16xf32>
      %c0_211 = arith.constant 0 : index
      %c0_212 = arith.constant 0 : index
      %c64_213 = arith.constant 64 : index
      %627 = vector.load %arg4[%c0_211, %c0_212, %c64_213] : memref<2x1x256xf32, #tpu.memory_space<vmem>>, vector<1x1x16xf32>
      %628 = vector.shape_cast %627 : vector<1x1x16xf32> to vector<1x16xf32>
      %629 = vector.shape_cast %626 : vector<1x16xf32> to vector<1x1x16xf32>
      tpu.vector_store %arg4[%c0_211, %c0_212, %c64_213], %629 {strides = array<i32>} : memref<2x1x256xf32, #tpu.memory_space<vmem>>, vector<1x1x16xf32>,
      %630 = vector.extract_strided_slice %609 {offsets = [5, 0], sizes = [1, 16], strides = [1, 1]} : vector<16x16xf32> to vector<1x16xf32>
      %c0_214 = arith.constant 0 : index
      %c0_215 = arith.constant 0 : index
      %c80_216 = arith.constant 80 : index
      %631 = vector.load %arg4[%c0_214, %c0_215, %c80_216] : memref<2x1x256xf32, #tpu.memory_space<vmem>>, vector<1x1x16xf32>
      %632 = vector.shape_cast %631 : vector<1x1x16xf32> to vector<1x16xf32>
      %633 = vector.shape_cast %630 : vector<1x16xf32> to vector<1x1x16xf32>
      tpu.vector_store %arg4[%c0_214, %c0_215, %c80_216], %633 {strides = array<i32>} : memref<2x1x256xf32, #tpu.memory_space<vmem>>, vector<1x1x16xf32>,
      %634 = vector.extract_strided_slice %609 {offsets = [6, 0], sizes = [1, 16], strides = [1, 1]} : vector<16x16xf32> to vector<1x16xf32>
      %c0_217 = arith.constant 0 : index
      %c0_218 = arith.constant 0 : index
      %c96_219 = arith.constant 96 : index
      %635 = vector.load %arg4[%c0_217, %c0_218, %c96_219] : memref<2x1x256xf32, #tpu.memory_space<vmem>>, vector<1x1x16xf32>
      %636 = vector.shape_cast %635 : vector<1x1x16xf32> to vector<1x16xf32>
      %637 = vector.shape_cast %634 : vector<1x16xf32> to vector<1x1x16xf32>
      tpu.vector_store %arg4[%c0_217, %c0_218, %c96_219], %637 {strides = array<i32>} : memref<2x1x256xf32, #tpu.memory_space<vmem>>, vector<1x1x16xf32>,
      %638 = vector.extract_strided_slice %609 {offsets = [7, 0], sizes = [1, 16], strides = [1, 1]} : vector<16x16xf32> to vector<1x16xf32>
      %c0_220 = arith.constant 0 : index
      %c0_221 = arith.constant 0 : index
      %c112_222 = arith.constant 112 : index
      %639 = vector.load %arg4[%c0_220, %c0_221, %c112_222] : memref<2x1x256xf32, #tpu.memory_space<vmem>>, vector<1x1x16xf32>
      %640 = vector.shape_cast %639 : vector<1x1x16xf32> to vector<1x16xf32>
      %641 = vector.shape_cast %638 : vector<1x16xf32> to vector<1x1x16xf32>
      tpu.vector_store %arg4[%c0_220, %c0_221, %c112_222], %641 {strides = array<i32>} : memref<2x1x256xf32, #tpu.memory_space<vmem>>, vector<1x1x16xf32>,
      %642 = vector.extract_strided_slice %609 {offsets = [8, 0], sizes = [1, 16], strides = [1, 1]} : vector<16x16xf32> to vector<1x16xf32>
      %c0_223 = arith.constant 0 : index
      %c0_224 = arith.constant 0 : index
      %c128_225 = arith.constant 128 : index
      %643 = vector.load %arg4[%c0_223, %c0_224, %c128_225] : memref<2x1x256xf32, #tpu.memory_space<vmem>>, vector<1x1x16xf32>
      %644 = vector.shape_cast %643 : vector<1x1x16xf32> to vector<1x16xf32>
      %645 = vector.shape_cast %642 : vector<1x16xf32> to vector<1x1x16xf32>
      tpu.vector_store %arg4[%c0_223, %c0_224, %c128_225], %645 {strides = array<i32>} : memref<2x1x256xf32, #tpu.memory_space<vmem>>, vector<1x1x16xf32>,
      %646 = vector.extract_strided_slice %609 {offsets = [9, 0], sizes = [1, 16], strides = [1, 1]} : vector<16x16xf32> to vector<1x16xf32>
      %c0_226 = arith.constant 0 : index
      %c0_227 = arith.constant 0 : index
      %c144_228 = arith.constant 144 : index
      %647 = vector.load %arg4[%c0_226, %c0_227, %c144_228] : memref<2x1x256xf32, #tpu.memory_space<vmem>>, vector<1x1x16xf32>
      %648 = vector.shape_cast %647 : vector<1x1x16xf32> to vector<1x16xf32>
      %649 = vector.shape_cast %646 : vector<1x16xf32> to vector<1x1x16xf32>
      tpu.vector_store %arg4[%c0_226, %c0_227, %c144_228], %649 {strides = array<i32>} : memref<2x1x256xf32, #tpu.memory_space<vmem>>, vector<1x1x16xf32>,
      %650 = vector.extract_strided_slice %609 {offsets = [10, 0], sizes = [1, 16], strides = [1, 1]} : vector<16x16xf32> to vector<1x16xf32>
      %c0_229 = arith.constant 0 : index
      %c0_230 = arith.constant 0 : index
      %c160_231 = arith.constant 160 : index
      %651 = vector.load %arg4[%c0_229, %c0_230, %c160_231] : memref<2x1x256xf32, #tpu.memory_space<vmem>>, vector<1x1x16xf32>
      %652 = vector.shape_cast %651 : vector<1x1x16xf32> to vector<1x16xf32>
      %653 = vector.shape_cast %650 : vector<1x16xf32> to vector<1x1x16xf32>
      tpu.vector_store %arg4[%c0_229, %c0_230, %c160_231], %653 {strides = array<i32>} : memref<2x1x256xf32, #tpu.memory_space<vmem>>, vector<1x1x16xf32>,
      %654 = vector.extract_strided_slice %609 {offsets = [11, 0], sizes = [1, 16], strides = [1, 1]} : vector<16x16xf32> to vector<1x16xf32>
      %c0_232 = arith.constant 0 : index
      %c0_233 = arith.constant 0 : index
      %c176_234 = arith.constant 176 : index
      %655 = vector.load %arg4[%c0_232, %c0_233, %c176_234] : memref<2x1x256xf32, #tpu.memory_space<vmem>>, vector<1x1x16xf32>
      %656 = vector.shape_cast %655 : vector<1x1x16xf32> to vector<1x16xf32>
      %657 = vector.shape_cast %654 : vector<1x16xf32> to vector<1x1x16xf32>
      tpu.vector_store %arg4[%c0_232, %c0_233, %c176_234], %657 {strides = array<i32>} : memref<2x1x256xf32, #tpu.memory_space<vmem>>, vector<1x1x16xf32>,
      %658 = vector.extract_strided_slice %609 {offsets = [12, 0], sizes = [1, 16], strides = [1, 1]} : vector<16x16xf32> to vector<1x16xf32>
      %c0_235 = arith.constant 0 : index
      %c0_236 = arith.constant 0 : index
      %c192_237 = arith.constant 192 : index
      %659 = vector.load %arg4[%c0_235, %c0_236, %c192_237] : memref<2x1x256xf32, #tpu.memory_space<vmem>>, vector<1x1x16xf32>
      %660 = vector.shape_cast %659 : vector<1x1x16xf32> to vector<1x16xf32>
      %661 = vector.shape_cast %658 : vector<1x16xf32> to vector<1x1x16xf32>
      tpu.vector_store %arg4[%c0_235, %c0_236, %c192_237], %661 {strides = array<i32>} : memref<2x1x256xf32, #tpu.memory_space<vmem>>, vector<1x1x16xf32>,
      %662 = vector.extract_strided_slice %609 {offsets = [13, 0], sizes = [1, 16], strides = [1, 1]} : vector<16x16xf32> to vector<1x16xf32>
      %c0_238 = arith.constant 0 : index
      %c0_239 = arith.constant 0 : index
      %c208_240 = arith.constant 208 : index
      %663 = vector.load %arg4[%c0_238, %c0_239, %c208_240] : memref<2x1x256xf32, #tpu.memory_space<vmem>>, vector<1x1x16xf32>
      %664 = vector.shape_cast %663 : vector<1x1x16xf32> to vector<1x16xf32>
      %665 = vector.shape_cast %662 : vector<1x16xf32> to vector<1x1x16xf32>
      tpu.vector_store %arg4[%c0_238, %c0_239, %c208_240], %665 {strides = array<i32>} : memref<2x1x256xf32, #tpu.memory_space<vmem>>, vector<1x1x16xf32>,
      %666 = vector.extract_strided_slice %609 {offsets = [14, 0], sizes = [1, 16], strides = [1, 1]} : vector<16x16xf32> to vector<1x16xf32>
      %c0_241 = arith.constant 0 : index
      %c0_242 = arith.constant 0 : index
      %c224_243 = arith.constant 224 : index
      %667 = vector.load %arg4[%c0_241, %c0_242, %c224_243] : memref<2x1x256xf32, #tpu.memory_space<vmem>>, vector<1x1x16xf32>
      %668 = vector.shape_cast %667 : vector<1x1x16xf32> to vector<1x16xf32>
      %669 = vector.shape_cast %666 : vector<1x16xf32> to vector<1x1x16xf32>
      tpu.vector_store %arg4[%c0_241, %c0_242, %c224_243], %669 {strides = array<i32>} : memref<2x1x256xf32, #tpu.memory_space<vmem>>, vector<1x1x16xf32>,
      %670 = vector.extract_strided_slice %609 {offsets = [15, 0], sizes = [1, 16], strides = [1, 1]} : vector<16x16xf32> to vector<1x16xf32>
      %c0_244 = arith.constant 0 : index
      %c0_245 = arith.constant 0 : index
      %c240_246 = arith.constant 240 : index
      %671 = vector.load %arg4[%c0_244, %c0_245, %c240_246] : memref<2x1x256xf32, #tpu.memory_space<vmem>>, vector<1x1x16xf32>
      %672 = vector.shape_cast %671 : vector<1x1x16xf32> to vector<1x16xf32>
      %673 = vector.shape_cast %670 : vector<1x16xf32> to vector<1x1x16xf32>
      tpu.vector_store %arg4[%c0_244, %c0_245, %c240_246], %673 {strides = array<i32>} : memref<2x1x256xf32, #tpu.memory_space<vmem>>, vector<1x1x16xf32>,
      %c1_247 = arith.constant 1 : index
      %c0_248 = arith.constant 0 : index
      %c0_249 = arith.constant 0 : index
      %674 = vector.load %arg7[%c1_247, %c0_248, %c0_249] : memref<2x22x22xf32, #tpu.memory_space<vmem>>, vector<1x22x22xf32>
      %675 = vector.shape_cast %674 : vector<1x22x22xf32> to vector<22x22xf32>
      %c1_250 = arith.constant 1 : index
      %c0_251 = arith.constant 0 : index
      %c0_252 = arith.constant 0 : index
      %676 = vector.load %arg8[%c1_250, %c0_251, %c0_252] : memref<2x22x22xf32, #tpu.memory_space<vmem>>, vector<1x22x22xf32>
      %677 = vector.shape_cast %676 : vector<1x22x22xf32> to vector<22x22xf32>
      %678 = vector.extract_strided_slice %675 {offsets = [0, 0], sizes = [22, 16], strides = [1, 1]} : vector<22x22xf32> to vector<22x16xf32>
      %679 = vector.extract_strided_slice %675 {offsets = [0, 1], sizes = [22, 16], strides = [1, 1]} : vector<22x22xf32> to vector<22x16xf32>
      %680 = vector.extract_strided_slice %675 {offsets = [0, 2], sizes = [22, 16], strides = [1, 1]} : vector<22x22xf32> to vector<22x16xf32>
      %681 = vector.extract_strided_slice %675 {offsets = [0, 3], sizes = [22, 16], strides = [1, 1]} : vector<22x22xf32> to vector<22x16xf32>
      %682 = vector.extract_strided_slice %675 {offsets = [0, 4], sizes = [22, 16], strides = [1, 1]} : vector<22x22xf32> to vector<22x16xf32>
      %683 = vector.extract_strided_slice %675 {offsets = [0, 5], sizes = [22, 16], strides = [1, 1]} : vector<22x22xf32> to vector<22x16xf32>
      %684 = vector.extract_strided_slice %675 {offsets = [0, 6], sizes = [22, 16], strides = [1, 1]} : vector<22x22xf32> to vector<22x16xf32>
      %685 = vector.extract_strided_slice %677 {offsets = [0, 0], sizes = [22, 16], strides = [1, 1]} : vector<22x22xf32> to vector<22x16xf32>
      %686 = vector.extract_strided_slice %677 {offsets = [0, 1], sizes = [22, 16], strides = [1, 1]} : vector<22x22xf32> to vector<22x16xf32>
      %687 = vector.extract_strided_slice %677 {offsets = [0, 2], sizes = [22, 16], strides = [1, 1]} : vector<22x22xf32> to vector<22x16xf32>
      %688 = vector.extract_strided_slice %677 {offsets = [0, 3], sizes = [22, 16], strides = [1, 1]} : vector<22x22xf32> to vector<22x16xf32>
      %689 = vector.extract_strided_slice %677 {offsets = [0, 4], sizes = [22, 16], strides = [1, 1]} : vector<22x22xf32> to vector<22x16xf32>
      %690 = vector.extract_strided_slice %677 {offsets = [0, 5], sizes = [22, 16], strides = [1, 1]} : vector<22x22xf32> to vector<22x16xf32>
      %691 = vector.extract_strided_slice %677 {offsets = [0, 6], sizes = [22, 16], strides = [1, 1]} : vector<22x22xf32> to vector<22x16xf32>
      %cst_253 = arith.constant 0.000000e+00 : f32
      %692 = vector.broadcast %cst_253 : f32 to vector<16x16xf32>
      %c0_254 = arith.constant 0 : index
      %693 = memref.load %arg2[%c0_254] : memref<98xf32, #tpu.memory_space<smem>>
      %694 = vector.broadcast %693 : f32 to vector<22x16xf32>
      %695 = arith.mulf %678, %694 : vector<22x16xf32>
      %c49_255 = arith.constant 49 : index
      %696 = memref.load %arg2[%c49_255] : memref<98xf32, #tpu.memory_space<smem>>
      %697 = vector.broadcast %696 : f32 to vector<22x16xf32>
      %698 = arith.mulf %685, %697 : vector<22x16xf32>
      %699 = arith.addf %695, %698 : vector<22x16xf32>
      %c1_256 = arith.constant 1 : index
      %700 = memref.load %arg2[%c1_256] : memref<98xf32, #tpu.memory_space<smem>>
      %701 = vector.broadcast %700 : f32 to vector<22x16xf32>
      %702 = arith.mulf %679, %701 : vector<22x16xf32>
      %703 = arith.addf %699, %702 : vector<22x16xf32>
      %c50_257 = arith.constant 50 : index
      %704 = memref.load %arg2[%c50_257] : memref<98xf32, #tpu.memory_space<smem>>
      %705 = vector.broadcast %704 : f32 to vector<22x16xf32>
      %706 = arith.mulf %686, %705 : vector<22x16xf32>
      %707 = arith.addf %703, %706 : vector<22x16xf32>
      %c2_258 = arith.constant 2 : index
      %708 = memref.load %arg2[%c2_258] : memref<98xf32, #tpu.memory_space<smem>>
      %709 = vector.broadcast %708 : f32 to vector<22x16xf32>
      %710 = arith.mulf %680, %709 : vector<22x16xf32>
      %711 = arith.addf %707, %710 : vector<22x16xf32>
      %c51_259 = arith.constant 51 : index
      %712 = memref.load %arg2[%c51_259] : memref<98xf32, #tpu.memory_space<smem>>
      %713 = vector.broadcast %712 : f32 to vector<22x16xf32>
      %714 = arith.mulf %687, %713 : vector<22x16xf32>
      %715 = arith.addf %711, %714 : vector<22x16xf32>
      %c3_260 = arith.constant 3 : index
      %716 = memref.load %arg2[%c3_260] : memref<98xf32, #tpu.memory_space<smem>>
      %717 = vector.broadcast %716 : f32 to vector<22x16xf32>
      %718 = arith.mulf %681, %717 : vector<22x16xf32>
      %719 = arith.addf %715, %718 : vector<22x16xf32>
      %c52_261 = arith.constant 52 : index
      %720 = memref.load %arg2[%c52_261] : memref<98xf32, #tpu.memory_space<smem>>
      %721 = vector.broadcast %720 : f32 to vector<22x16xf32>
      %722 = arith.mulf %688, %721 : vector<22x16xf32>
      %723 = arith.addf %719, %722 : vector<22x16xf32>
      %c4_262 = arith.constant 4 : index
      %724 = memref.load %arg2[%c4_262] : memref<98xf32, #tpu.memory_space<smem>>
      %725 = vector.broadcast %724 : f32 to vector<22x16xf32>
      %726 = arith.mulf %682, %725 : vector<22x16xf32>
      %727 = arith.addf %723, %726 : vector<22x16xf32>
      %c53_263 = arith.constant 53 : index
      %728 = memref.load %arg2[%c53_263] : memref<98xf32, #tpu.memory_space<smem>>
      %729 = vector.broadcast %728 : f32 to vector<22x16xf32>
      %730 = arith.mulf %689, %729 : vector<22x16xf32>
      %731 = arith.addf %727, %730 : vector<22x16xf32>
      %c5_264 = arith.constant 5 : index
      %732 = memref.load %arg2[%c5_264] : memref<98xf32, #tpu.memory_space<smem>>
      %733 = vector.broadcast %732 : f32 to vector<22x16xf32>
      %734 = arith.mulf %683, %733 : vector<22x16xf32>
      %735 = arith.addf %731, %734 : vector<22x16xf32>
      %c54_265 = arith.constant 54 : index
      %736 = memref.load %arg2[%c54_265] : memref<98xf32, #tpu.memory_space<smem>>
      %737 = vector.broadcast %736 : f32 to vector<22x16xf32>
      %738 = arith.mulf %690, %737 : vector<22x16xf32>
      %739 = arith.addf %735, %738 : vector<22x16xf32>
      %c6_266 = arith.constant 6 : index
      %740 = memref.load %arg2[%c6_266] : memref<98xf32, #tpu.memory_space<smem>>
      %741 = vector.broadcast %740 : f32 to vector<22x16xf32>
      %742 = arith.mulf %684, %741 : vector<22x16xf32>
      %743 = arith.addf %739, %742 : vector<22x16xf32>
      %c55_267 = arith.constant 55 : index
      %744 = memref.load %arg2[%c55_267] : memref<98xf32, #tpu.memory_space<smem>>
      %745 = vector.broadcast %744 : f32 to vector<22x16xf32>
      %746 = arith.mulf %691, %745 : vector<22x16xf32>
      %747 = arith.addf %743, %746 : vector<22x16xf32>
      %748 = vector.extract_strided_slice %747 {offsets = [0, 0], sizes = [16, 16], strides = [1, 1]} : vector<22x16xf32> to vector<16x16xf32>
      %749 = arith.addf %692, %748 : vector<16x16xf32>
      %c7_268 = arith.constant 7 : index
      %750 = memref.load %arg2[%c7_268] : memref<98xf32, #tpu.memory_space<smem>>
      %751 = vector.broadcast %750 : f32 to vector<22x16xf32>
      %752 = arith.mulf %678, %751 : vector<22x16xf32>
      %c56_269 = arith.constant 56 : index
      %753 = memref.load %arg2[%c56_269] : memref<98xf32, #tpu.memory_space<smem>>
      %754 = vector.broadcast %753 : f32 to vector<22x16xf32>
      %755 = arith.mulf %685, %754 : vector<22x16xf32>
      %756 = arith.addf %752, %755 : vector<22x16xf32>
      %c8_270 = arith.constant 8 : index
      %757 = memref.load %arg2[%c8_270] : memref<98xf32, #tpu.memory_space<smem>>
      %758 = vector.broadcast %757 : f32 to vector<22x16xf32>
      %759 = arith.mulf %679, %758 : vector<22x16xf32>
      %760 = arith.addf %756, %759 : vector<22x16xf32>
      %c57_271 = arith.constant 57 : index
      %761 = memref.load %arg2[%c57_271] : memref<98xf32, #tpu.memory_space<smem>>
      %762 = vector.broadcast %761 : f32 to vector<22x16xf32>
      %763 = arith.mulf %686, %762 : vector<22x16xf32>
      %764 = arith.addf %760, %763 : vector<22x16xf32>
      %c9_272 = arith.constant 9 : index
      %765 = memref.load %arg2[%c9_272] : memref<98xf32, #tpu.memory_space<smem>>
      %766 = vector.broadcast %765 : f32 to vector<22x16xf32>
      %767 = arith.mulf %680, %766 : vector<22x16xf32>
      %768 = arith.addf %764, %767 : vector<22x16xf32>
      %c58_273 = arith.constant 58 : index
      %769 = memref.load %arg2[%c58_273] : memref<98xf32, #tpu.memory_space<smem>>
      %770 = vector.broadcast %769 : f32 to vector<22x16xf32>
      %771 = arith.mulf %687, %770 : vector<22x16xf32>
      %772 = arith.addf %768, %771 : vector<22x16xf32>
      %c10_274 = arith.constant 10 : index
      %773 = memref.load %arg2[%c10_274] : memref<98xf32, #tpu.memory_space<smem>>
      %774 = vector.broadcast %773 : f32 to vector<22x16xf32>
      %775 = arith.mulf %681, %774 : vector<22x16xf32>
      %776 = arith.addf %772, %775 : vector<22x16xf32>
      %c59_275 = arith.constant 59 : index
      %777 = memref.load %arg2[%c59_275] : memref<98xf32, #tpu.memory_space<smem>>
      %778 = vector.broadcast %777 : f32 to vector<22x16xf32>
      %779 = arith.mulf %688, %778 : vector<22x16xf32>
      %780 = arith.addf %776, %779 : vector<22x16xf32>
      %c11_276 = arith.constant 11 : index
      %781 = memref.load %arg2[%c11_276] : memref<98xf32, #tpu.memory_space<smem>>
      %782 = vector.broadcast %781 : f32 to vector<22x16xf32>
      %783 = arith.mulf %682, %782 : vector<22x16xf32>
      %784 = arith.addf %780, %783 : vector<22x16xf32>
      %c60_277 = arith.constant 60 : index
      %785 = memref.load %arg2[%c60_277] : memref<98xf32, #tpu.memory_space<smem>>
      %786 = vector.broadcast %785 : f32 to vector<22x16xf32>
      %787 = arith.mulf %689, %786 : vector<22x16xf32>
      %788 = arith.addf %784, %787 : vector<22x16xf32>
      %c12_278 = arith.constant 12 : index
      %789 = memref.load %arg2[%c12_278] : memref<98xf32, #tpu.memory_space<smem>>
      %790 = vector.broadcast %789 : f32 to vector<22x16xf32>
      %791 = arith.mulf %683, %790 : vector<22x16xf32>
      %792 = arith.addf %788, %791 : vector<22x16xf32>
      %c61_279 = arith.constant 61 : index
      %793 = memref.load %arg2[%c61_279] : memref<98xf32, #tpu.memory_space<smem>>
      %794 = vector.broadcast %793 : f32 to vector<22x16xf32>
      %795 = arith.mulf %690, %794 : vector<22x16xf32>
      %796 = arith.addf %792, %795 : vector<22x16xf32>
      %c13_280 = arith.constant 13 : index
      %797 = memref.load %arg2[%c13_280] : memref<98xf32, #tpu.memory_space<smem>>
      %798 = vector.broadcast %797 : f32 to vector<22x16xf32>
      %799 = arith.mulf %684, %798 : vector<22x16xf32>
      %800 = arith.addf %796, %799 : vector<22x16xf32>
      %c62_281 = arith.constant 62 : index
      %801 = memref.load %arg2[%c62_281] : memref<98xf32, #tpu.memory_space<smem>>
      %802 = vector.broadcast %801 : f32 to vector<22x16xf32>
      %803 = arith.mulf %691, %802 : vector<22x16xf32>
      %804 = arith.addf %800, %803 : vector<22x16xf32>
      %805 = vector.extract_strided_slice %804 {offsets = [1, 0], sizes = [16, 16], strides = [1, 1]} : vector<22x16xf32> to vector<16x16xf32>
      %806 = arith.addf %749, %805 : vector<16x16xf32>
      %c14_282 = arith.constant 14 : index
      %807 = memref.load %arg2[%c14_282] : memref<98xf32, #tpu.memory_space<smem>>
      %808 = vector.broadcast %807 : f32 to vector<22x16xf32>
      %809 = arith.mulf %678, %808 : vector<22x16xf32>
      %c63_283 = arith.constant 63 : index
      %810 = memref.load %arg2[%c63_283] : memref<98xf32, #tpu.memory_space<smem>>
      %811 = vector.broadcast %810 : f32 to vector<22x16xf32>
      %812 = arith.mulf %685, %811 : vector<22x16xf32>
      %813 = arith.addf %809, %812 : vector<22x16xf32>
      %c15_284 = arith.constant 15 : index
      %814 = memref.load %arg2[%c15_284] : memref<98xf32, #tpu.memory_space<smem>>
      %815 = vector.broadcast %814 : f32 to vector<22x16xf32>
      %816 = arith.mulf %679, %815 : vector<22x16xf32>
      %817 = arith.addf %813, %816 : vector<22x16xf32>
      %c64_285 = arith.constant 64 : index
      %818 = memref.load %arg2[%c64_285] : memref<98xf32, #tpu.memory_space<smem>>
      %819 = vector.broadcast %818 : f32 to vector<22x16xf32>
      %820 = arith.mulf %686, %819 : vector<22x16xf32>
      %821 = arith.addf %817, %820 : vector<22x16xf32>
      %c16_286 = arith.constant 16 : index
      %822 = memref.load %arg2[%c16_286] : memref<98xf32, #tpu.memory_space<smem>>
      %823 = vector.broadcast %822 : f32 to vector<22x16xf32>
      %824 = arith.mulf %680, %823 : vector<22x16xf32>
      %825 = arith.addf %821, %824 : vector<22x16xf32>
      %c65_287 = arith.constant 65 : index
      %826 = memref.load %arg2[%c65_287] : memref<98xf32, #tpu.memory_space<smem>>
      %827 = vector.broadcast %826 : f32 to vector<22x16xf32>
      %828 = arith.mulf %687, %827 : vector<22x16xf32>
      %829 = arith.addf %825, %828 : vector<22x16xf32>
      %c17_288 = arith.constant 17 : index
      %830 = memref.load %arg2[%c17_288] : memref<98xf32, #tpu.memory_space<smem>>
      %831 = vector.broadcast %830 : f32 to vector<22x16xf32>
      %832 = arith.mulf %681, %831 : vector<22x16xf32>
      %833 = arith.addf %829, %832 : vector<22x16xf32>
      %c66_289 = arith.constant 66 : index
      %834 = memref.load %arg2[%c66_289] : memref<98xf32, #tpu.memory_space<smem>>
      %835 = vector.broadcast %834 : f32 to vector<22x16xf32>
      %836 = arith.mulf %688, %835 : vector<22x16xf32>
      %837 = arith.addf %833, %836 : vector<22x16xf32>
      %c18_290 = arith.constant 18 : index
      %838 = memref.load %arg2[%c18_290] : memref<98xf32, #tpu.memory_space<smem>>
      %839 = vector.broadcast %838 : f32 to vector<22x16xf32>
      %840 = arith.mulf %682, %839 : vector<22x16xf32>
      %841 = arith.addf %837, %840 : vector<22x16xf32>
      %c67_291 = arith.constant 67 : index
      %842 = memref.load %arg2[%c67_291] : memref<98xf32, #tpu.memory_space<smem>>
      %843 = vector.broadcast %842 : f32 to vector<22x16xf32>
      %844 = arith.mulf %689, %843 : vector<22x16xf32>
      %845 = arith.addf %841, %844 : vector<22x16xf32>
      %c19_292 = arith.constant 19 : index
      %846 = memref.load %arg2[%c19_292] : memref<98xf32, #tpu.memory_space<smem>>
      %847 = vector.broadcast %846 : f32 to vector<22x16xf32>
      %848 = arith.mulf %683, %847 : vector<22x16xf32>
      %849 = arith.addf %845, %848 : vector<22x16xf32>
      %c68_293 = arith.constant 68 : index
      %850 = memref.load %arg2[%c68_293] : memref<98xf32, #tpu.memory_space<smem>>
      %851 = vector.broadcast %850 : f32 to vector<22x16xf32>
      %852 = arith.mulf %690, %851 : vector<22x16xf32>
      %853 = arith.addf %849, %852 : vector<22x16xf32>
      %c20_294 = arith.constant 20 : index
      %854 = memref.load %arg2[%c20_294] : memref<98xf32, #tpu.memory_space<smem>>
      %855 = vector.broadcast %854 : f32 to vector<22x16xf32>
      %856 = arith.mulf %684, %855 : vector<22x16xf32>
      %857 = arith.addf %853, %856 : vector<22x16xf32>
      %c69_295 = arith.constant 69 : index
      %858 = memref.load %arg2[%c69_295] : memref<98xf32, #tpu.memory_space<smem>>
      %859 = vector.broadcast %858 : f32 to vector<22x16xf32>
      %860 = arith.mulf %691, %859 : vector<22x16xf32>
      %861 = arith.addf %857, %860 : vector<22x16xf32>
      %862 = vector.extract_strided_slice %861 {offsets = [2, 0], sizes = [16, 16], strides = [1, 1]} : vector<22x16xf32> to vector<16x16xf32>
      %863 = arith.addf %806, %862 : vector<16x16xf32>
      %c21_296 = arith.constant 21 : index
      %864 = memref.load %arg2[%c21_296] : memref<98xf32, #tpu.memory_space<smem>>
      %865 = vector.broadcast %864 : f32 to vector<22x16xf32>
      %866 = arith.mulf %678, %865 : vector<22x16xf32>
      %c70_297 = arith.constant 70 : index
      %867 = memref.load %arg2[%c70_297] : memref<98xf32, #tpu.memory_space<smem>>
      %868 = vector.broadcast %867 : f32 to vector<22x16xf32>
      %869 = arith.mulf %685, %868 : vector<22x16xf32>
      %870 = arith.addf %866, %869 : vector<22x16xf32>
      %c22_298 = arith.constant 22 : index
      %871 = memref.load %arg2[%c22_298] : memref<98xf32, #tpu.memory_space<smem>>
      %872 = vector.broadcast %871 : f32 to vector<22x16xf32>
      %873 = arith.mulf %679, %872 : vector<22x16xf32>
      %874 = arith.addf %870, %873 : vector<22x16xf32>
      %c71_299 = arith.constant 71 : index
      %875 = memref.load %arg2[%c71_299] : memref<98xf32, #tpu.memory_space<smem>>
      %876 = vector.broadcast %875 : f32 to vector<22x16xf32>
      %877 = arith.mulf %686, %876 : vector<22x16xf32>
      %878 = arith.addf %874, %877 : vector<22x16xf32>
      %c23_300 = arith.constant 23 : index
      %879 = memref.load %arg2[%c23_300] : memref<98xf32, #tpu.memory_space<smem>>
      %880 = vector.broadcast %879 : f32 to vector<22x16xf32>
      %881 = arith.mulf %680, %880 : vector<22x16xf32>
      %882 = arith.addf %878, %881 : vector<22x16xf32>
      %c72_301 = arith.constant 72 : index
      %883 = memref.load %arg2[%c72_301] : memref<98xf32, #tpu.memory_space<smem>>
      %884 = vector.broadcast %883 : f32 to vector<22x16xf32>
      %885 = arith.mulf %687, %884 : vector<22x16xf32>
      %886 = arith.addf %882, %885 : vector<22x16xf32>
      %c24_302 = arith.constant 24 : index
      %887 = memref.load %arg2[%c24_302] : memref<98xf32, #tpu.memory_space<smem>>
      %888 = vector.broadcast %887 : f32 to vector<22x16xf32>
      %889 = arith.mulf %681, %888 : vector<22x16xf32>
      %890 = arith.addf %886, %889 : vector<22x16xf32>
      %c73_303 = arith.constant 73 : index
      %891 = memref.load %arg2[%c73_303] : memref<98xf32, #tpu.memory_space<smem>>
      %892 = vector.broadcast %891 : f32 to vector<22x16xf32>
      %893 = arith.mulf %688, %892 : vector<22x16xf32>
      %894 = arith.addf %890, %893 : vector<22x16xf32>
      %c25_304 = arith.constant 25 : index
      %895 = memref.load %arg2[%c25_304] : memref<98xf32, #tpu.memory_space<smem>>
      %896 = vector.broadcast %895 : f32 to vector<22x16xf32>
      %897 = arith.mulf %682, %896 : vector<22x16xf32>
      %898 = arith.addf %894, %897 : vector<22x16xf32>
      %c74_305 = arith.constant 74 : index
      %899 = memref.load %arg2[%c74_305] : memref<98xf32, #tpu.memory_space<smem>>
      %900 = vector.broadcast %899 : f32 to vector<22x16xf32>
      %901 = arith.mulf %689, %900 : vector<22x16xf32>
      %902 = arith.addf %898, %901 : vector<22x16xf32>
      %c26_306 = arith.constant 26 : index
      %903 = memref.load %arg2[%c26_306] : memref<98xf32, #tpu.memory_space<smem>>
      %904 = vector.broadcast %903 : f32 to vector<22x16xf32>
      %905 = arith.mulf %683, %904 : vector<22x16xf32>
      %906 = arith.addf %902, %905 : vector<22x16xf32>
      %c75_307 = arith.constant 75 : index
      %907 = memref.load %arg2[%c75_307] : memref<98xf32, #tpu.memory_space<smem>>
      %908 = vector.broadcast %907 : f32 to vector<22x16xf32>
      %909 = arith.mulf %690, %908 : vector<22x16xf32>
      %910 = arith.addf %906, %909 : vector<22x16xf32>
      %c27_308 = arith.constant 27 : index
      %911 = memref.load %arg2[%c27_308] : memref<98xf32, #tpu.memory_space<smem>>
      %912 = vector.broadcast %911 : f32 to vector<22x16xf32>
      %913 = arith.mulf %684, %912 : vector<22x16xf32>
      %914 = arith.addf %910, %913 : vector<22x16xf32>
      %c76_309 = arith.constant 76 : index
      %915 = memref.load %arg2[%c76_309] : memref<98xf32, #tpu.memory_space<smem>>
      %916 = vector.broadcast %915 : f32 to vector<22x16xf32>
      %917 = arith.mulf %691, %916 : vector<22x16xf32>
      %918 = arith.addf %914, %917 : vector<22x16xf32>
      %919 = vector.extract_strided_slice %918 {offsets = [3, 0], sizes = [16, 16], strides = [1, 1]} : vector<22x16xf32> to vector<16x16xf32>
      %920 = arith.addf %863, %919 : vector<16x16xf32>
      %c28_310 = arith.constant 28 : index
      %921 = memref.load %arg2[%c28_310] : memref<98xf32, #tpu.memory_space<smem>>
      %922 = vector.broadcast %921 : f32 to vector<22x16xf32>
      %923 = arith.mulf %678, %922 : vector<22x16xf32>
      %c77_311 = arith.constant 77 : index
      %924 = memref.load %arg2[%c77_311] : memref<98xf32, #tpu.memory_space<smem>>
      %925 = vector.broadcast %924 : f32 to vector<22x16xf32>
      %926 = arith.mulf %685, %925 : vector<22x16xf32>
      %927 = arith.addf %923, %926 : vector<22x16xf32>
      %c29_312 = arith.constant 29 : index
      %928 = memref.load %arg2[%c29_312] : memref<98xf32, #tpu.memory_space<smem>>
      %929 = vector.broadcast %928 : f32 to vector<22x16xf32>
      %930 = arith.mulf %679, %929 : vector<22x16xf32>
      %931 = arith.addf %927, %930 : vector<22x16xf32>
      %c78_313 = arith.constant 78 : index
      %932 = memref.load %arg2[%c78_313] : memref<98xf32, #tpu.memory_space<smem>>
      %933 = vector.broadcast %932 : f32 to vector<22x16xf32>
      %934 = arith.mulf %686, %933 : vector<22x16xf32>
      %935 = arith.addf %931, %934 : vector<22x16xf32>
      %c30_314 = arith.constant 30 : index
      %936 = memref.load %arg2[%c30_314] : memref<98xf32, #tpu.memory_space<smem>>
      %937 = vector.broadcast %936 : f32 to vector<22x16xf32>
      %938 = arith.mulf %680, %937 : vector<22x16xf32>
      %939 = arith.addf %935, %938 : vector<22x16xf32>
      %c79_315 = arith.constant 79 : index
      %940 = memref.load %arg2[%c79_315] : memref<98xf32, #tpu.memory_space<smem>>
      %941 = vector.broadcast %940 : f32 to vector<22x16xf32>
      %942 = arith.mulf %687, %941 : vector<22x16xf32>
      %943 = arith.addf %939, %942 : vector<22x16xf32>
      %c31_316 = arith.constant 31 : index
      %944 = memref.load %arg2[%c31_316] : memref<98xf32, #tpu.memory_space<smem>>
      %945 = vector.broadcast %944 : f32 to vector<22x16xf32>
      %946 = arith.mulf %681, %945 : vector<22x16xf32>
      %947 = arith.addf %943, %946 : vector<22x16xf32>
      %c80_317 = arith.constant 80 : index
      %948 = memref.load %arg2[%c80_317] : memref<98xf32, #tpu.memory_space<smem>>
      %949 = vector.broadcast %948 : f32 to vector<22x16xf32>
      %950 = arith.mulf %688, %949 : vector<22x16xf32>
      %951 = arith.addf %947, %950 : vector<22x16xf32>
      %c32_318 = arith.constant 32 : index
      %952 = memref.load %arg2[%c32_318] : memref<98xf32, #tpu.memory_space<smem>>
      %953 = vector.broadcast %952 : f32 to vector<22x16xf32>
      %954 = arith.mulf %682, %953 : vector<22x16xf32>
      %955 = arith.addf %951, %954 : vector<22x16xf32>
      %c81_319 = arith.constant 81 : index
      %956 = memref.load %arg2[%c81_319] : memref<98xf32, #tpu.memory_space<smem>>
      %957 = vector.broadcast %956 : f32 to vector<22x16xf32>
      %958 = arith.mulf %689, %957 : vector<22x16xf32>
      %959 = arith.addf %955, %958 : vector<22x16xf32>
      %c33_320 = arith.constant 33 : index
      %960 = memref.load %arg2[%c33_320] : memref<98xf32, #tpu.memory_space<smem>>
      %961 = vector.broadcast %960 : f32 to vector<22x16xf32>
      %962 = arith.mulf %683, %961 : vector<22x16xf32>
      %963 = arith.addf %959, %962 : vector<22x16xf32>
      %c82_321 = arith.constant 82 : index
      %964 = memref.load %arg2[%c82_321] : memref<98xf32, #tpu.memory_space<smem>>
      %965 = vector.broadcast %964 : f32 to vector<22x16xf32>
      %966 = arith.mulf %690, %965 : vector<22x16xf32>
      %967 = arith.addf %963, %966 : vector<22x16xf32>
      %c34_322 = arith.constant 34 : index
      %968 = memref.load %arg2[%c34_322] : memref<98xf32, #tpu.memory_space<smem>>
      %969 = vector.broadcast %968 : f32 to vector<22x16xf32>
      %970 = arith.mulf %684, %969 : vector<22x16xf32>
      %971 = arith.addf %967, %970 : vector<22x16xf32>
      %c83_323 = arith.constant 83 : index
      %972 = memref.load %arg2[%c83_323] : memref<98xf32, #tpu.memory_space<smem>>
      %973 = vector.broadcast %972 : f32 to vector<22x16xf32>
      %974 = arith.mulf %691, %973 : vector<22x16xf32>
      %975 = arith.addf %971, %974 : vector<22x16xf32>
      %976 = vector.extract_strided_slice %975 {offsets = [4, 0], sizes = [16, 16], strides = [1, 1]} : vector<22x16xf32> to vector<16x16xf32>
      %977 = arith.addf %920, %976 : vector<16x16xf32>
      %c35_324 = arith.constant 35 : index
      %978 = memref.load %arg2[%c35_324] : memref<98xf32, #tpu.memory_space<smem>>
      %979 = vector.broadcast %978 : f32 to vector<22x16xf32>
      %980 = arith.mulf %678, %979 : vector<22x16xf32>
      %c84_325 = arith.constant 84 : index
      %981 = memref.load %arg2[%c84_325] : memref<98xf32, #tpu.memory_space<smem>>
      %982 = vector.broadcast %981 : f32 to vector<22x16xf32>
      %983 = arith.mulf %685, %982 : vector<22x16xf32>
      %984 = arith.addf %980, %983 : vector<22x16xf32>
      %c36_326 = arith.constant 36 : index
      %985 = memref.load %arg2[%c36_326] : memref<98xf32, #tpu.memory_space<smem>>
      %986 = vector.broadcast %985 : f32 to vector<22x16xf32>
      %987 = arith.mulf %679, %986 : vector<22x16xf32>
      %988 = arith.addf %984, %987 : vector<22x16xf32>
      %c85_327 = arith.constant 85 : index
      %989 = memref.load %arg2[%c85_327] : memref<98xf32, #tpu.memory_space<smem>>
      %990 = vector.broadcast %989 : f32 to vector<22x16xf32>
      %991 = arith.mulf %686, %990 : vector<22x16xf32>
      %992 = arith.addf %988, %991 : vector<22x16xf32>
      %c37_328 = arith.constant 37 : index
      %993 = memref.load %arg2[%c37_328] : memref<98xf32, #tpu.memory_space<smem>>
      %994 = vector.broadcast %993 : f32 to vector<22x16xf32>
      %995 = arith.mulf %680, %994 : vector<22x16xf32>
      %996 = arith.addf %992, %995 : vector<22x16xf32>
      %c86_329 = arith.constant 86 : index
      %997 = memref.load %arg2[%c86_329] : memref<98xf32, #tpu.memory_space<smem>>
      %998 = vector.broadcast %997 : f32 to vector<22x16xf32>
      %999 = arith.mulf %687, %998 : vector<22x16xf32>
      %1000 = arith.addf %996, %999 : vector<22x16xf32>
      %c38_330 = arith.constant 38 : index
      %1001 = memref.load %arg2[%c38_330] : memref<98xf32, #tpu.memory_space<smem>>
      %1002 = vector.broadcast %1001 : f32 to vector<22x16xf32>
      %1003 = arith.mulf %681, %1002 : vector<22x16xf32>
      %1004 = arith.addf %1000, %1003 : vector<22x16xf32>
      %c87_331 = arith.constant 87 : index
      %1005 = memref.load %arg2[%c87_331] : memref<98xf32, #tpu.memory_space<smem>>
      %1006 = vector.broadcast %1005 : f32 to vector<22x16xf32>
      %1007 = arith.mulf %688, %1006 : vector<22x16xf32>
      %1008 = arith.addf %1004, %1007 : vector<22x16xf32>
      %c39_332 = arith.constant 39 : index
      %1009 = memref.load %arg2[%c39_332] : memref<98xf32, #tpu.memory_space<smem>>
      %1010 = vector.broadcast %1009 : f32 to vector<22x16xf32>
      %1011 = arith.mulf %682, %1010 : vector<22x16xf32>
      %1012 = arith.addf %1008, %1011 : vector<22x16xf32>
      %c88_333 = arith.constant 88 : index
      %1013 = memref.load %arg2[%c88_333] : memref<98xf32, #tpu.memory_space<smem>>
      %1014 = vector.broadcast %1013 : f32 to vector<22x16xf32>
      %1015 = arith.mulf %689, %1014 : vector<22x16xf32>
      %1016 = arith.addf %1012, %1015 : vector<22x16xf32>
      %c40_334 = arith.constant 40 : index
      %1017 = memref.load %arg2[%c40_334] : memref<98xf32, #tpu.memory_space<smem>>
      %1018 = vector.broadcast %1017 : f32 to vector<22x16xf32>
      %1019 = arith.mulf %683, %1018 : vector<22x16xf32>
      %1020 = arith.addf %1016, %1019 : vector<22x16xf32>
      %c89_335 = arith.constant 89 : index
      %1021 = memref.load %arg2[%c89_335] : memref<98xf32, #tpu.memory_space<smem>>
      %1022 = vector.broadcast %1021 : f32 to vector<22x16xf32>
      %1023 = arith.mulf %690, %1022 : vector<22x16xf32>
      %1024 = arith.addf %1020, %1023 : vector<22x16xf32>
      %c41_336 = arith.constant 41 : index
      %1025 = memref.load %arg2[%c41_336] : memref<98xf32, #tpu.memory_space<smem>>
      %1026 = vector.broadcast %1025 : f32 to vector<22x16xf32>
      %1027 = arith.mulf %684, %1026 : vector<22x16xf32>
      %1028 = arith.addf %1024, %1027 : vector<22x16xf32>
      %c90_337 = arith.constant 90 : index
      %1029 = memref.load %arg2[%c90_337] : memref<98xf32, #tpu.memory_space<smem>>
      %1030 = vector.broadcast %1029 : f32 to vector<22x16xf32>
      %1031 = arith.mulf %691, %1030 : vector<22x16xf32>
      %1032 = arith.addf %1028, %1031 : vector<22x16xf32>
      %1033 = vector.extract_strided_slice %1032 {offsets = [5, 0], sizes = [16, 16], strides = [1, 1]} : vector<22x16xf32> to vector<16x16xf32>
      %1034 = arith.addf %977, %1033 : vector<16x16xf32>
      %c42_338 = arith.constant 42 : index
      %1035 = memref.load %arg2[%c42_338] : memref<98xf32, #tpu.memory_space<smem>>
      %1036 = vector.broadcast %1035 : f32 to vector<22x16xf32>
      %1037 = arith.mulf %678, %1036 : vector<22x16xf32>
      %c91_339 = arith.constant 91 : index
      %1038 = memref.load %arg2[%c91_339] : memref<98xf32, #tpu.memory_space<smem>>
      %1039 = vector.broadcast %1038 : f32 to vector<22x16xf32>
      %1040 = arith.mulf %685, %1039 : vector<22x16xf32>
      %1041 = arith.addf %1037, %1040 : vector<22x16xf32>
      %c43_340 = arith.constant 43 : index
      %1042 = memref.load %arg2[%c43_340] : memref<98xf32, #tpu.memory_space<smem>>
      %1043 = vector.broadcast %1042 : f32 to vector<22x16xf32>
      %1044 = arith.mulf %679, %1043 : vector<22x16xf32>
      %1045 = arith.addf %1041, %1044 : vector<22x16xf32>
      %c92_341 = arith.constant 92 : index
      %1046 = memref.load %arg2[%c92_341] : memref<98xf32, #tpu.memory_space<smem>>
      %1047 = vector.broadcast %1046 : f32 to vector<22x16xf32>
      %1048 = arith.mulf %686, %1047 : vector<22x16xf32>
      %1049 = arith.addf %1045, %1048 : vector<22x16xf32>
      %c44_342 = arith.constant 44 : index
      %1050 = memref.load %arg2[%c44_342] : memref<98xf32, #tpu.memory_space<smem>>
      %1051 = vector.broadcast %1050 : f32 to vector<22x16xf32>
      %1052 = arith.mulf %680, %1051 : vector<22x16xf32>
      %1053 = arith.addf %1049, %1052 : vector<22x16xf32>
      %c93_343 = arith.constant 93 : index
      %1054 = memref.load %arg2[%c93_343] : memref<98xf32, #tpu.memory_space<smem>>
      %1055 = vector.broadcast %1054 : f32 to vector<22x16xf32>
      %1056 = arith.mulf %687, %1055 : vector<22x16xf32>
      %1057 = arith.addf %1053, %1056 : vector<22x16xf32>
      %c45_344 = arith.constant 45 : index
      %1058 = memref.load %arg2[%c45_344] : memref<98xf32, #tpu.memory_space<smem>>
      %1059 = vector.broadcast %1058 : f32 to vector<22x16xf32>
      %1060 = arith.mulf %681, %1059 : vector<22x16xf32>
      %1061 = arith.addf %1057, %1060 : vector<22x16xf32>
      %c94_345 = arith.constant 94 : index
      %1062 = memref.load %arg2[%c94_345] : memref<98xf32, #tpu.memory_space<smem>>
      %1063 = vector.broadcast %1062 : f32 to vector<22x16xf32>
      %1064 = arith.mulf %688, %1063 : vector<22x16xf32>
      %1065 = arith.addf %1061, %1064 : vector<22x16xf32>
      %c46_346 = arith.constant 46 : index
      %1066 = memref.load %arg2[%c46_346] : memref<98xf32, #tpu.memory_space<smem>>
      %1067 = vector.broadcast %1066 : f32 to vector<22x16xf32>
      %1068 = arith.mulf %682, %1067 : vector<22x16xf32>
      %1069 = arith.addf %1065, %1068 : vector<22x16xf32>
      %c95_347 = arith.constant 95 : index
      %1070 = memref.load %arg2[%c95_347] : memref<98xf32, #tpu.memory_space<smem>>
      %1071 = vector.broadcast %1070 : f32 to vector<22x16xf32>
      %1072 = arith.mulf %689, %1071 : vector<22x16xf32>
      %1073 = arith.addf %1069, %1072 : vector<22x16xf32>
      %c47_348 = arith.constant 47 : index
      %1074 = memref.load %arg2[%c47_348] : memref<98xf32, #tpu.memory_space<smem>>
      %1075 = vector.broadcast %1074 : f32 to vector<22x16xf32>
      %1076 = arith.mulf %683, %1075 : vector<22x16xf32>
      %1077 = arith.addf %1073, %1076 : vector<22x16xf32>
      %c96_349 = arith.constant 96 : index
      %1078 = memref.load %arg2[%c96_349] : memref<98xf32, #tpu.memory_space<smem>>
      %1079 = vector.broadcast %1078 : f32 to vector<22x16xf32>
      %1080 = arith.mulf %690, %1079 : vector<22x16xf32>
      %1081 = arith.addf %1077, %1080 : vector<22x16xf32>
      %c48_350 = arith.constant 48 : index
      %1082 = memref.load %arg2[%c48_350] : memref<98xf32, #tpu.memory_space<smem>>
      %1083 = vector.broadcast %1082 : f32 to vector<22x16xf32>
      %1084 = arith.mulf %684, %1083 : vector<22x16xf32>
      %1085 = arith.addf %1081, %1084 : vector<22x16xf32>
      %c97_351 = arith.constant 97 : index
      %1086 = memref.load %arg2[%c97_351] : memref<98xf32, #tpu.memory_space<smem>>
      %1087 = vector.broadcast %1086 : f32 to vector<22x16xf32>
      %1088 = arith.mulf %691, %1087 : vector<22x16xf32>
      %1089 = arith.addf %1085, %1088 : vector<22x16xf32>
      %1090 = vector.extract_strided_slice %1089 {offsets = [6, 0], sizes = [16, 16], strides = [1, 1]} : vector<22x16xf32> to vector<16x16xf32>
      %1091 = arith.addf %1034, %1090 : vector<16x16xf32>
      %1092 = arith.negf %1091 : vector<16x16xf32>
      %1093 = math.exp %1092 : vector<16x16xf32>
      %cst_352 = arith.constant 1.000000e+00 : f32
      %1094 = vector.broadcast %cst_352 : f32 to vector<16x16xf32>
      %1095 = arith.addf %1094, %1093 : vector<16x16xf32>
      %1096 = arith.divf %1094, %1095 : vector<16x16xf32>
      %1097 = vector.extract_strided_slice %1096 {offsets = [0, 0], sizes = [1, 16], strides = [1, 1]} : vector<16x16xf32> to vector<1x16xf32>
      %c1_353 = arith.constant 1 : index
      %c0_354 = arith.constant 0 : index
      %c0_355 = arith.constant 0 : index
      %1098 = vector.load %arg4[%c1_353, %c0_354, %c0_355] : memref<2x1x256xf32, #tpu.memory_space<vmem>>, vector<1x1x16xf32>
      %1099 = vector.shape_cast %1098 : vector<1x1x16xf32> to vector<1x16xf32>
      %1100 = vector.shape_cast %1097 : vector<1x16xf32> to vector<1x1x16xf32>
      tpu.vector_store %arg4[%c1_353, %c0_354, %c0_355], %1100 {strides = array<i32>} : memref<2x1x256xf32, #tpu.memory_space<vmem>>, vector<1x1x16xf32>,
      %1101 = vector.extract_strided_slice %1096 {offsets = [1, 0], sizes = [1, 16], strides = [1, 1]} : vector<16x16xf32> to vector<1x16xf32>
      %c1_356 = arith.constant 1 : index
      %c0_357 = arith.constant 0 : index
      %c16_358 = arith.constant 16 : index
      %1102 = vector.load %arg4[%c1_356, %c0_357, %c16_358] : memref<2x1x256xf32, #tpu.memory_space<vmem>>, vector<1x1x16xf32>
      %1103 = vector.shape_cast %1102 : vector<1x1x16xf32> to vector<1x16xf32>
      %1104 = vector.shape_cast %1101 : vector<1x16xf32> to vector<1x1x16xf32>
      tpu.vector_store %arg4[%c1_356, %c0_357, %c16_358], %1104 {strides = array<i32>} : memref<2x1x256xf32, #tpu.memory_space<vmem>>, vector<1x1x16xf32>,
      %1105 = vector.extract_strided_slice %1096 {offsets = [2, 0], sizes = [1, 16], strides = [1, 1]} : vector<16x16xf32> to vector<1x16xf32>
      %c1_359 = arith.constant 1 : index
      %c0_360 = arith.constant 0 : index
      %c32_361 = arith.constant 32 : index
      %1106 = vector.load %arg4[%c1_359, %c0_360, %c32_361] : memref<2x1x256xf32, #tpu.memory_space<vmem>>, vector<1x1x16xf32>
      %1107 = vector.shape_cast %1106 : vector<1x1x16xf32> to vector<1x16xf32>
      %1108 = vector.shape_cast %1105 : vector<1x16xf32> to vector<1x1x16xf32>
      tpu.vector_store %arg4[%c1_359, %c0_360, %c32_361], %1108 {strides = array<i32>} : memref<2x1x256xf32, #tpu.memory_space<vmem>>, vector<1x1x16xf32>,
      %1109 = vector.extract_strided_slice %1096 {offsets = [3, 0], sizes = [1, 16], strides = [1, 1]} : vector<16x16xf32> to vector<1x16xf32>
      %c1_362 = arith.constant 1 : index
      %c0_363 = arith.constant 0 : index
      %c48_364 = arith.constant 48 : index
      %1110 = vector.load %arg4[%c1_362, %c0_363, %c48_364] : memref<2x1x256xf32, #tpu.memory_space<vmem>>, vector<1x1x16xf32>
      %1111 = vector.shape_cast %1110 : vector<1x1x16xf32> to vector<1x16xf32>
      %1112 = vector.shape_cast %1109 : vector<1x16xf32> to vector<1x1x16xf32>
      tpu.vector_store %arg4[%c1_362, %c0_363, %c48_364], %1112 {strides = array<i32>} : memref<2x1x256xf32, #tpu.memory_space<vmem>>, vector<1x1x16xf32>,
      %1113 = vector.extract_strided_slice %1096 {offsets = [4, 0], sizes = [1, 16], strides = [1, 1]} : vector<16x16xf32> to vector<1x16xf32>
      %c1_365 = arith.constant 1 : index
      %c0_366 = arith.constant 0 : index
      %c64_367 = arith.constant 64 : index
      %1114 = vector.load %arg4[%c1_365, %c0_366, %c64_367] : memref<2x1x256xf32, #tpu.memory_space<vmem>>, vector<1x1x16xf32>
      %1115 = vector.shape_cast %1114 : vector<1x1x16xf32> to vector<1x16xf32>
      %1116 = vector.shape_cast %1113 : vector<1x16xf32> to vector<1x1x16xf32>
      tpu.vector_store %arg4[%c1_365, %c0_366, %c64_367], %1116 {strides = array<i32>} : memref<2x1x256xf32, #tpu.memory_space<vmem>>, vector<1x1x16xf32>,
      %1117 = vector.extract_strided_slice %1096 {offsets = [5, 0], sizes = [1, 16], strides = [1, 1]} : vector<16x16xf32> to vector<1x16xf32>
      %c1_368 = arith.constant 1 : index
      %c0_369 = arith.constant 0 : index
      %c80_370 = arith.constant 80 : index
      %1118 = vector.load %arg4[%c1_368, %c0_369, %c80_370] : memref<2x1x256xf32, #tpu.memory_space<vmem>>, vector<1x1x16xf32>
      %1119 = vector.shape_cast %1118 : vector<1x1x16xf32> to vector<1x16xf32>
      %1120 = vector.shape_cast %1117 : vector<1x16xf32> to vector<1x1x16xf32>
      tpu.vector_store %arg4[%c1_368, %c0_369, %c80_370], %1120 {strides = array<i32>} : memref<2x1x256xf32, #tpu.memory_space<vmem>>, vector<1x1x16xf32>,
      %1121 = vector.extract_strided_slice %1096 {offsets = [6, 0], sizes = [1, 16], strides = [1, 1]} : vector<16x16xf32> to vector<1x16xf32>
      %c1_371 = arith.constant 1 : index
      %c0_372 = arith.constant 0 : index
      %c96_373 = arith.constant 96 : index
      %1122 = vector.load %arg4[%c1_371, %c0_372, %c96_373] : memref<2x1x256xf32, #tpu.memory_space<vmem>>, vector<1x1x16xf32>
      %1123 = vector.shape_cast %1122 : vector<1x1x16xf32> to vector<1x16xf32>
      %1124 = vector.shape_cast %1121 : vector<1x16xf32> to vector<1x1x16xf32>
      tpu.vector_store %arg4[%c1_371, %c0_372, %c96_373], %1124 {strides = array<i32>} : memref<2x1x256xf32, #tpu.memory_space<vmem>>, vector<1x1x16xf32>,
      %1125 = vector.extract_strided_slice %1096 {offsets = [7, 0], sizes = [1, 16], strides = [1, 1]} : vector<16x16xf32> to vector<1x16xf32>
      %c1_374 = arith.constant 1 : index
      %c0_375 = arith.constant 0 : index
      %c112_376 = arith.constant 112 : index
      %1126 = vector.load %arg4[%c1_374, %c0_375, %c112_376] : memref<2x1x256xf32, #tpu.memory_space<vmem>>, vector<1x1x16xf32>
      %1127 = vector.shape_cast %1126 : vector<1x1x16xf32> to vector<1x16xf32>
      %1128 = vector.shape_cast %1125 : vector<1x16xf32> to vector<1x1x16xf32>
      tpu.vector_store %arg4[%c1_374, %c0_375, %c112_376], %1128 {strides = array<i32>} : memref<2x1x256xf32, #tpu.memory_space<vmem>>, vector<1x1x16xf32>,
      %1129 = vector.extract_strided_slice %1096 {offsets = [8, 0], sizes = [1, 16], strides = [1, 1]} : vector<16x16xf32> to vector<1x16xf32>
      %c1_377 = arith.constant 1 : index
      %c0_378 = arith.constant 0 : index
      %c128_379 = arith.constant 128 : index
      %1130 = vector.load %arg4[%c1_377, %c0_378, %c128_379] : memref<2x1x256xf32, #tpu.memory_space<vmem>>, vector<1x1x16xf32>
      %1131 = vector.shape_cast %1130 : vector<1x1x16xf32> to vector<1x16xf32>
      %1132 = vector.shape_cast %1129 : vector<1x16xf32> to vector<1x1x16xf32>
      tpu.vector_store %arg4[%c1_377, %c0_378, %c128_379], %1132 {strides = array<i32>} : memref<2x1x256xf32, #tpu.memory_space<vmem>>, vector<1x1x16xf32>,
      %1133 = vector.extract_strided_slice %1096 {offsets = [9, 0], sizes = [1, 16], strides = [1, 1]} : vector<16x16xf32> to vector<1x16xf32>
      %c1_380 = arith.constant 1 : index
      %c0_381 = arith.constant 0 : index
      %c144_382 = arith.constant 144 : index
      %1134 = vector.load %arg4[%c1_380, %c0_381, %c144_382] : memref<2x1x256xf32, #tpu.memory_space<vmem>>, vector<1x1x16xf32>
      %1135 = vector.shape_cast %1134 : vector<1x1x16xf32> to vector<1x16xf32>
      %1136 = vector.shape_cast %1133 : vector<1x16xf32> to vector<1x1x16xf32>
      tpu.vector_store %arg4[%c1_380, %c0_381, %c144_382], %1136 {strides = array<i32>} : memref<2x1x256xf32, #tpu.memory_space<vmem>>, vector<1x1x16xf32>,
      %1137 = vector.extract_strided_slice %1096 {offsets = [10, 0], sizes = [1, 16], strides = [1, 1]} : vector<16x16xf32> to vector<1x16xf32>
      %c1_383 = arith.constant 1 : index
      %c0_384 = arith.constant 0 : index
      %c160_385 = arith.constant 160 : index
      %1138 = vector.load %arg4[%c1_383, %c0_384, %c160_385] : memref<2x1x256xf32, #tpu.memory_space<vmem>>, vector<1x1x16xf32>
      %1139 = vector.shape_cast %1138 : vector<1x1x16xf32> to vector<1x16xf32>
      %1140 = vector.shape_cast %1137 : vector<1x16xf32> to vector<1x1x16xf32>
      tpu.vector_store %arg4[%c1_383, %c0_384, %c160_385], %1140 {strides = array<i32>} : memref<2x1x256xf32, #tpu.memory_space<vmem>>, vector<1x1x16xf32>,
      %1141 = vector.extract_strided_slice %1096 {offsets = [11, 0], sizes = [1, 16], strides = [1, 1]} : vector<16x16xf32> to vector<1x16xf32>
      %c1_386 = arith.constant 1 : index
      %c0_387 = arith.constant 0 : index
      %c176_388 = arith.constant 176 : index
      %1142 = vector.load %arg4[%c1_386, %c0_387, %c176_388] : memref<2x1x256xf32, #tpu.memory_space<vmem>>, vector<1x1x16xf32>
      %1143 = vector.shape_cast %1142 : vector<1x1x16xf32> to vector<1x16xf32>
      %1144 = vector.shape_cast %1141 : vector<1x16xf32> to vector<1x1x16xf32>
      tpu.vector_store %arg4[%c1_386, %c0_387, %c176_388], %1144 {strides = array<i32>} : memref<2x1x256xf32, #tpu.memory_space<vmem>>, vector<1x1x16xf32>,
      %1145 = vector.extract_strided_slice %1096 {offsets = [12, 0], sizes = [1, 16], strides = [1, 1]} : vector<16x16xf32> to vector<1x16xf32>
      %c1_389 = arith.constant 1 : index
      %c0_390 = arith.constant 0 : index
      %c192_391 = arith.constant 192 : index
      %1146 = vector.load %arg4[%c1_389, %c0_390, %c192_391] : memref<2x1x256xf32, #tpu.memory_space<vmem>>, vector<1x1x16xf32>
      %1147 = vector.shape_cast %1146 : vector<1x1x16xf32> to vector<1x16xf32>
      %1148 = vector.shape_cast %1145 : vector<1x16xf32> to vector<1x1x16xf32>
      tpu.vector_store %arg4[%c1_389, %c0_390, %c192_391], %1148 {strides = array<i32>} : memref<2x1x256xf32, #tpu.memory_space<vmem>>, vector<1x1x16xf32>,
      %1149 = vector.extract_strided_slice %1096 {offsets = [13, 0], sizes = [1, 16], strides = [1, 1]} : vector<16x16xf32> to vector<1x16xf32>
      %c1_392 = arith.constant 1 : index
      %c0_393 = arith.constant 0 : index
      %c208_394 = arith.constant 208 : index
      %1150 = vector.load %arg4[%c1_392, %c0_393, %c208_394] : memref<2x1x256xf32, #tpu.memory_space<vmem>>, vector<1x1x16xf32>
      %1151 = vector.shape_cast %1150 : vector<1x1x16xf32> to vector<1x16xf32>
      %1152 = vector.shape_cast %1149 : vector<1x16xf32> to vector<1x1x16xf32>
      tpu.vector_store %arg4[%c1_392, %c0_393, %c208_394], %1152 {strides = array<i32>} : memref<2x1x256xf32, #tpu.memory_space<vmem>>, vector<1x1x16xf32>,
      %1153 = vector.extract_strided_slice %1096 {offsets = [14, 0], sizes = [1, 16], strides = [1, 1]} : vector<16x16xf32> to vector<1x16xf32>
      %c1_395 = arith.constant 1 : index
      %c0_396 = arith.constant 0 : index
      %c224_397 = arith.constant 224 : index
      %1154 = vector.load %arg4[%c1_395, %c0_396, %c224_397] : memref<2x1x256xf32, #tpu.memory_space<vmem>>, vector<1x1x16xf32>
      %1155 = vector.shape_cast %1154 : vector<1x1x16xf32> to vector<1x16xf32>
      %1156 = vector.shape_cast %1153 : vector<1x16xf32> to vector<1x1x16xf32>
      tpu.vector_store %arg4[%c1_395, %c0_396, %c224_397], %1156 {strides = array<i32>} : memref<2x1x256xf32, #tpu.memory_space<vmem>>, vector<1x1x16xf32>,
      %1157 = vector.extract_strided_slice %1096 {offsets = [15, 0], sizes = [1, 16], strides = [1, 1]} : vector<16x16xf32> to vector<1x16xf32>
      %c1_398 = arith.constant 1 : index
      %c0_399 = arith.constant 0 : index
      %c240_400 = arith.constant 240 : index
      %1158 = vector.load %arg4[%c1_398, %c0_399, %c240_400] : memref<2x1x256xf32, #tpu.memory_space<vmem>>, vector<1x1x16xf32>
      %1159 = vector.shape_cast %1158 : vector<1x1x16xf32> to vector<1x16xf32>
      %1160 = vector.shape_cast %1157 : vector<1x16xf32> to vector<1x1x16xf32>
      tpu.vector_store %arg4[%c1_398, %c0_399, %c240_400], %1160 {strides = array<i32>} : memref<2x1x256xf32, #tpu.memory_space<vmem>>, vector<1x1x16xf32>,
    } else {
    }
    return
  }
  func.func @transform_0(%arg0: i32, %arg1: i32) -> i32 {
    %c0_i32 = arith.constant 0 : i32
    %c0_i32_0 = arith.constant 0 : i32
    return %c0_i32 : i32
  }
  func.func @transform_1(%arg0: i32, %arg1: i32) -> (i32, i32, i32) {
    %c0_i32 = arith.constant 0 : i32
    %c0_i32_0 = arith.constant 0 : i32
    return %arg0, %arg1, %c0_i32 : i32, i32, i32
  }
  func.func @transform_2(%arg0: i32, %arg1: i32) -> (i32, i32, i32) {
    %c0_i32 = arith.constant 0 : i32
    %c0_i32_0 = arith.constant 0 : i32
    %c0_i32_1 = arith.constant 0 : i32
    return %arg0, %c0_i32, %c0_i32_0 : i32, i32, i32
  }
}

</mosaic_0001>

<llo_original>
// kernel: tpu_custom_call.1
$region0: #{tpu_custom_call.1}
  #allocation0 [shape = 'u32[]', space=smem, size = 0x4, offset = 0x4, fixed_abs, tag = 'smem constant byte address 0x4 - core index']
  #allocation1 [shape = 'u32[144,128]{1,0:T(1,128)}', space=vmem, size = 0x12000, scoped, tag = 'internal scratch']
  #allocation2 [shape = 'f32[2,256]{1,0:T(2,128)}', space=vmem, size = 0x800, scoped, tag = 'scratch operand']
  #allocation3 [shape = 'f32[2,256]{1,0:T(2,128)}', space=vmem, size = 0x800, scoped, tag = 'scratch operand']
  #allocation4 [shape = 'f32[2,22,22]{2,1,0:T(8,128)}', space=vmem, size = 0x6000, scoped, tag = 'scratch operand']
  #allocation5 [shape = 'f32[2,22,22]{2,1,0:T(8,128)}', space=vmem, size = 0x6000, scoped, tag = 'scratch operand']
  %s0 = inlined_call_operand.hbm [shape: f32[98], index: 0, kind: input, shape index: {}]
  %s1 = inlined_call_operand.hbm [shape: f32[2,4,256], index: 1, kind: input, shape index: {}]
  %s2 = inlined_call_operand.hbm [shape: f32[2,1,256], index: 2, kind: output, shape index: {}]
  %s3 = sld [smem:[#allocation0]]
  $region38: #{tpu_custom_call.1} parent=0
    _
  %s5 = ssub.s32 1, %s3
  %s6 = scalar_select 0, %s5, %s3
  $region1: #{tpu_custom_call.1} parent=0
    #allocation6 [shape = 'u8[512]{0}', space=smem, size = 0x200, scoped, tag = 'input window, operand 0, single buffered']
    #allocation7 [shape = 's32[1]{0}', space=sflag, size = 0x4, scoped, tag = 'scoped memory for tpu_custom_call.1']
    #allocation8 [shape = 's32[1]{0}', space=sflag, size = 0x4, scoped, tag = 'scoped memory for tpu_custom_call.1']
    #allocation9 [shape = 's32[1]{0}', space=sflag, size = 0x4, scoped, tag = 'scoped memory for tpu_custom_call.1']
    #allocation10 [shape = 'u8[8192]{0}', space=vmem, size = 0x2000, scoped, tag = 'input window, operand 1, single buffered']
    #allocation11 [shape = 'u8[2048]{0}', space=vmem, size = 0x800, scoped, tag = 'output window, operand 0, single buffered']
    %7 = vsyncpa [#allocation9], 0
    %8 = vsyncpa [#allocation7], 0
    %9 = vsyncpa [#allocation8], 0
    // Predicated region
    $region2: #{tpu_custom_call.1} parent=1 // pred_check
      _
    $region3: #{tpu_custom_call.1} parent=1 // pred_check_branch
      %11 = sbr.rel (0) target = $region5
    $region4: #{tpu_custom_call.1} parent=1 // pred_region
      %s13 = ssub.s32 16, 16
      %14 = vsyncadd [#allocation9], %s13
      %17 = dma.hbm_to_smem %s0, 16, [#allocation6], [#allocation9]
    $region5: #{tpu_custom_call.1} parent=1 // pred_fallthru
      _
    // Predicated region
    $region6: #{tpu_custom_call.1} parent=1 // pred_check
      _
    $region7: #{tpu_custom_call.1} parent=1 // pred_check_branch
      %19 = sbr.rel (0) target = $region9
    $region8: #{tpu_custom_call.1} parent=1 // pred_region
      %s21 = ssub.s32 256, 256
      %22 = vsyncadd [#allocation7], %s21
      %s23 = sshll.u32 [#allocation10], 4
      %s24 = int_to_ptr.vmem [resolvable:$true] %s23
      %29 = dma.hbm_to_vmem [thread:$0]  %s1, 256, %s24, [#allocation7], 128, 128, 8
    $region9: #{tpu_custom_call.1} parent=1 // pred_fallthru
      _
    // Predicated region
    $region10: #{tpu_custom_call.1} parent=1 // pred_check
      _
    $region11: #{tpu_custom_call.1} parent=1 // pred_check_branch
      %31 = sbr.rel (0) target = $region13
    $region12: #{tpu_custom_call.1} parent=1 // pred_region
      %32 = dma.done [#allocation9], 16
    $region13: #{tpu_custom_call.1} parent=1 // pred_fallthru
      _
    // Predicated region
    $region14: #{tpu_custom_call.1} parent=1 // pred_check
      _
    $region15: #{tpu_custom_call.1} parent=1 // pred_check_branch
      %34 = sbr.rel (0) target = $region17
    $region16: #{tpu_custom_call.1} parent=1 // pred_region
      %35 = dma.done [#allocation7], 256
    $region17: #{tpu_custom_call.1} parent=1 // pred_fallthru
      _
    %36 = sfence
    %v37 = vld [vmem:[#allocation10] ss:$4 sm:$0x3]
    %s38 = scalar_lea.vmem [#allocation10], 8
    %v39 = vld [vmem:[%s38] ss:$4 sm:$0x3]
    %s40 = scalar_lea.vmem [#allocation10], 1
    %v41 = vld [vmem:[%s40] ss:$4 sm:$0x3]
    %s42 = scalar_lea.vmem [#allocation10], 9
    %v43 = vld [vmem:[%s42] ss:$4 sm:$0x3]
    %v44 = vadd.f32 %v37, %v41
    %v45 = vadd.f32 %v39, %v43
    %v46 = vmax.f32 %v37, %v41
    %v47 = vmax.f32 %v39, %v43
    %s48 = scalar_lea.vmem [#allocation10], 2
    %v49 = vld [vmem:[%s48] ss:$4 sm:$0x3]
    %s50 = scalar_lea.vmem [#allocation10], 10
    %v51 = vld [vmem:[%s50] ss:$4 sm:$0x3]
    %v52 = vadd.f32 %v44, %v49
    %v53 = vadd.f32 %v45, %v51
    %v54 = vmax.f32 %v46, %v49
    %v55 = vmax.f32 %v47, %v51
    %s56 = scalar_lea.vmem [#allocation10], 3
    %v57 = vld [vmem:[%s56] ss:$4 sm:$0x3]
    %s58 = scalar_lea.vmem [#allocation10], 11
    %v59 = vld [vmem:[%s58] ss:$4 sm:$0x3]
    %v60 = vadd.f32 %v52, %v57
    %v61 = vadd.f32 %v53, %v59
    %v62 = vmax.f32 %v54, %v57
    %v63 = vmax.f32 %v55, %v59
    %p64 = scmp.eq.s32.totalorder 0, 0
    // Predicated region
    $region18: #{tpu_custom_call.1} parent=1 // pred_check
      %p65 = pneg %p64
    $region19: #{tpu_custom_call.1} parent=1 // pred_check_branch
      %67 = sbr.rel (%p65) target = $region21
    $region20: #{tpu_custom_call.1} parent=1 // pred_region
      %v70 = vcombine.low %v60, %v61
      %v72 = vunpack.c.l.s4 1935823168
      %v73 = vunpack.c.0.s8 %v72
      %v74 = vlaneseq
      %v75 = vshrl.u32 %v74, 7
      %v76 = vsub.s32 %v73, %v75
      %v77 = vrot.slane %v70, %v76
      %79 = vst [vmem:[#allocation2] sm:$0xf] %v77
      %v82 = vcombine.low %v62, %v63
      %v84 = vunpack.c.l.s4 1935823168
      %v85 = vunpack.c.0.s8 %v84
      %v86 = vlaneseq
      %v87 = vshrl.u32 %v86, 7
      %v88 = vsub.s32 %v85, %v87
      %v89 = vrot.slane %v82, %v88
      %91 = vst [vmem:[#allocation3] sm:$0xf] %v89
    $region21: #{tpu_custom_call.1} parent=1 // pred_fallthru
      _
    %p92 = scmp.gt.s32.totalorder 0, 0
    // Predicated region
    $region22: #{tpu_custom_call.1} parent=1 // pred_check
      %p93 = pneg %p92
    $region23: #{tpu_custom_call.1} parent=1 // pred_check_branch
      %95 = sbr.rel (%p93) target = $region25
    $region24: #{tpu_custom_call.1} parent=1 // pred_region
      %v96 = vld [vmem:[#allocation2] sm:$0xf]
      %v99 = vcombine.low %v60, %v61
      %v101 = vunpack.c.l.s4 1935823168
      %v102 = vunpack.c.0.s8 %v101
      %v103 = vlaneseq
      %v104 = vshrl.u32 %v103, 7
      %v105 = vsub.s32 %v102, %v104
      %v106 = vrot.slane %v99, %v105
      %v108 = vadd.f32 %v96, %v106
      %109 = vst [vmem:[#allocation2] sm:$0xf] %v108
      %v110 = vld [vmem:[#allocation3] sm:$0xf]
      %v113 = vcombine.low %v62, %v63
      %v115 = vunpack.c.l.s4 1935823168
      %v116 = vunpack.c.0.s8 %v115
      %v117 = vlaneseq
      %v118 = vshrl.u32 %v117, 7
      %v119 = vsub.s32 %v116, %v118
      %v120 = vrot.slane %v113, %v119
      %v122 = vmax.f32 %v110, %v120
      %123 = vst [vmem:[#allocation3] sm:$0xf] %v122
    $region25: #{tpu_custom_call.1} parent=1 // pred_fallthru
      _
    // Predicated region
    $region26: #{tpu_custom_call.1} parent=1 // pred_check
      %p124 = pneg %p64
    $region27: #{tpu_custom_call.1} parent=1 // pred_check_branch
      %126 = sbr.rel (%p124) target = $region29
    $region28: #{tpu_custom_call.1} parent=1 // pred_region
      %vm127 = vcmask 179200
      %128 = vst.msk [vmem:[#allocation4] sm:$0xff] %vm127, 0.0
      %129 = vst.msk [vmem:[#allocation4 + $0x8] sm:$0xff] %vm127, 0.0
      %vm130 = vcmask 177152
      %131 = vst.msk [vmem:[#allocation4 + $0x10] sm:$0x3f] %vm130, 0.0
      %132 = vst.msk [vmem:[#allocation4 + $0x18] sm:$0xff] %vm127, 0.0
      %133 = vst.msk [vmem:[#allocation4 + $0x20] sm:$0xff] %vm127, 0.0
      %134 = vst.msk [vmem:[#allocation4 + $0x28] sm:$0x3f] %vm130, 0.0
      %135 = vst.msk [vmem:[#allocation5] sm:$0xff] %vm127, 0.0
      %136 = vst.msk [vmem:[#allocation5 + $0x8] sm:$0xff] %vm127, 0.0
      %137 = vst.msk [vmem:[#allocation5 + $0x10] sm:$0x3f] %vm130, 0.0
      %138 = vst.msk [vmem:[#allocation5 + $0x18] sm:$0xff] %vm127, 0.0
      %139 = vst.msk [vmem:[#allocation5 + $0x20] sm:$0xff] %vm127, 0.0
      %140 = vst.msk [vmem:[#allocation5 + $0x28] sm:$0x3f] %vm130, 0.0
      %v141 = vld [vmem:[#allocation2] sm:$0x3]
      %v142 = vmul.f32 %v141, 0.25
      %v145 = vunpack.c.l.s4 1966171168
      %v146 = vunpack.c.0.s8 %v145
      %v147 = vlaneseq
      %v148 = vshrl.u32 %v147, 7
      %v149 = vsub.s32 %v146, %v148
      %v150 = vrot.slane %v142, %v149
      %v151 = vcombine.high %v150, %v150
      %v152 = vlaneseq
      %v153 = vshrl.u32 %v152, 7
      %v154 = vsub.s32 0, %v153
      %v155 = vrot.slane %v150, %v154
      %v156 = vlaneseq
      %v157 = vshrl.u32 %v156, 7
      %v158 = vsub.s32 0, %v157
      %v159 = vrot.slane %v151, %v158
      %160 = vrot.lane.b32.xlu0 %v155, 3
      %v161 = vpop.permute.xlu0 %160
      %162 = vrot.lane.b32.xlu0 %v159, 3
      %v163 = vpop.permute.xlu0 %162
      %vm166 = vcmask 147480
      %167 = vst.msk [vmem:[#allocation4 + $0x3] sm:$0x1] %vm166, %v161
      %168 = vst.msk [vmem:[#allocation4 + $0x1b] sm:$0x1] %vm166, %v163
      %v169 = vld [vmem:[#allocation3] sm:$0x3]
      %v172 = vunpack.c.l.s4 1966171168
      %v173 = vunpack.c.0.s8 %v172
      %v174 = vlaneseq
      %v175 = vshrl.u32 %v174, 7
      %v176 = vsub.s32 %v173, %v175
      %v177 = vrot.slane %v169, %v176
      %v178 = vcombine.high %v177, %v177
      %v179 = vlaneseq
      %v180 = vshrl.u32 %v179, 7
      %v181 = vsub.s32 0, %v180
      %v182 = vrot.slane %v177, %v181
      %v183 = vlaneseq
      %v184 = vshrl.u32 %v183, 7
      %v185 = vsub.s32 0, %v184
      %v186 = vrot.slane %v178, %v185
      %187 = vrot.lane.b32.xlu0 %v182, 3
      %v188 = vpop.permute.xlu0 %187
      %189 = vrot.lane.b32.xlu0 %v186, 3
      %v190 = vpop.permute.xlu0 %189
      %193 = vst.msk [vmem:[#allocation5 + $0x3] sm:$0x1] %vm166, %v188
      %194 = vst.msk [vmem:[#allocation5 + $0x1b] sm:$0x1] %vm166, %v190
      %v195 = vld [vmem:[#allocation2] sm:$0x3]
      %v196 = vmul.f32 %v195, 0.25
      %v199 = vunpack.c.l.s4 1966171168
      %v200 = vunpack.c.0.s8 %v199
      %v201 = vlaneseq
      %v202 = vshrl.u32 %v201, 7
      %v203 = vsub.s32 %v200, %v202
      %v204 = vrot.slane %v196, %v203
      %v205 = vcombine.high %v204, %v204
      %v206 = vlaneseq
      %v207 = vshrl.u32 %v206, 7
      %v208 = vsub.s32 0, %v207
      %v209 = vrot.slane %v204, %v208
      %v210 = vlaneseq
      %v211 = vshrl.u32 %v210, 7
      %v212 = vsub.s32 0, %v211
      %v213 = vrot.slane %v205, %v212
      %214 = vrot.lane.b32.xlu0 %v209, 115
      %v215 = vpop.permute.xlu0 %214
      %216 = vrot.lane.b32.xlu0 %v213, 115
      %v217 = vpop.permute.xlu0 %216
      %220 = vst.msk [vmem:[#allocation4 + $0x4] sm:$0x1] %vm166, %v215
      %221 = vst.msk [vmem:[#allocation4 + $0x1c] sm:$0x1] %vm166, %v217
      %v222 = vld [vmem:[#allocation3] sm:$0x3]
      %v225 = vunpack.c.l.s4 1966171168
      %v226 = vunpack.c.0.s8 %v225
      %v227 = vlaneseq
      %v228 = vshrl.u32 %v227, 7
      %v229 = vsub.s32 %v226, %v228
      %v230 = vrot.slane %v222, %v229
      %v231 = vcombine.high %v230, %v230
      %v232 = vlaneseq
      %v233 = vshrl.u32 %v232, 7
      %v234 = vsub.s32 0, %v233
      %v235 = vrot.slane %v230, %v234
      %v236 = vlaneseq
      %v237 = vshrl.u32 %v236, 7
      %v238 = vsub.s32 0, %v237
      %v239 = vrot.slane %v231, %v238
      %240 = vrot.lane.b32.xlu0 %v235, 115
      %v241 = vpop.permute.xlu0 %240
      %242 = vrot.lane.b32.xlu0 %v239, 115
      %v243 = vpop.permute.xlu0 %242
      %246 = vst.msk [vmem:[#allocation5 + $0x4] sm:$0x1] %vm166, %v241
      %247 = vst.msk [vmem:[#allocation5 + $0x1c] sm:$0x1] %vm166, %v243
      %v248 = vld [vmem:[#allocation2] sm:$0x3]
      %v249 = vmul.f32 %v248, 0.25
      %v252 = vunpack.c.l.s4 1966171168
      %v253 = vunpack.c.0.s8 %v252
      %v254 = vlaneseq
      %v255 = vshrl.u32 %v254, 7
      %v256 = vsub.s32 %v253, %v255
      %v257 = vrot.slane %v249, %v256
      %v258 = vcombine.high %v257, %v257
      %v259 = vlaneseq
      %v260 = vshrl.u32 %v259, 7
      %v261 = vsub.s32 0, %v260
      %v262 = vrot.slane %v257, %v261
      %v263 = vlaneseq
      %v264 = vshrl.u32 %v263, 7
      %v265 = vsub.s32 0, %v264
      %v266 = vrot.slane %v258, %v265
      %267 = vrot.lane.b32.xlu0 %v262, 99
      %v268 = vpop.permute.xlu0 %267
      %269 = vrot.lane.b32.xlu0 %v266, 99
      %v270 = vpop.permute.xlu0 %269
      %273 = vst.msk [vmem:[#allocation4 + $0x5] sm:$0x1] %vm166, %v268
      %274 = vst.msk [vmem:[#allocation4 + $0x1d] sm:$0x1] %vm166, %v270
      %v275 = vld [vmem:[#allocation3] sm:$0x3]
      %v278 = vunpack.c.l.s4 1966171168
      %v279 = vunpack.c.0.s8 %v278
      %v280 = vlaneseq
      %v281 = vshrl.u32 %v280, 7
      %v282 = vsub.s32 %v279, %v281
      %v283 = vrot.slane %v275, %v282
      %v284 = vcombine.high %v283, %v283
      %v285 = vlaneseq
      %v286 = vshrl.u32 %v285, 7
      %v287 = vsub.s32 0, %v286
      %v288 = vrot.slane %v283, %v287
      %v289 = vlaneseq
      %v290 = vshrl.u32 %v289, 7
      %v291 = vsub.s32 0, %v290
      %v292 = vrot.slane %v284, %v291
      %293 = vrot.lane.b32.xlu0 %v288, 99
      %v294 = vpop.permute.xlu0 %293
      %295 = vrot.lane.b32.xlu0 %v292, 99
      %v296 = vpop.permute.xlu0 %295
      %299 = vst.msk [vmem:[#allocation5 + $0x5] sm:$0x1] %vm166, %v294
      %300 = vst.msk [vmem:[#allocation5 + $0x1d] sm:$0x1] %vm166, %v296
      %v301 = vld [vmem:[#allocation2] sm:$0x3]
      %v302 = vmul.f32 %v301, 0.25
      %v305 = vunpack.c.l.s4 1966171168
      %v306 = vunpack.c.0.s8 %v305
      %v307 = vlaneseq
      %v308 = vshrl.u32 %v307, 7
      %v309 = vsub.s32 %v306, %v308
      %v310 = vrot.slane %v302, %v309
      %v311 = vcombine.high %v310, %v310
      %v312 = vlaneseq
      %v313 = vshrl.u32 %v312, 7
      %v314 = vsub.s32 0, %v313
      %v315 = vrot.slane %v310, %v314
      %v316 = vlaneseq
      %v317 = vshrl.u32 %v316, 7
      %v318 = vsub.s32 0, %v317
      %v319 = vrot.slane %v311, %v318
      %320 = vrot.lane.b32.xlu0 %v315, 83
      %v321 = vpop.permute.xlu0 %320
      %322 = vrot.lane.b32.xlu0 %v319, 83
      %v323 = vpop.permute.xlu0 %322
      %326 = vst.msk [vmem:[#allocation4 + $0x6] sm:$0x1] %vm166, %v321
      %327 = vst.msk [vmem:[#allocation4 + $0x1e] sm:$0x1] %vm166, %v323
      %v328 = vld [vmem:[#allocation3] sm:$0x3]
      %v331 = vunpack.c.l.s4 1966171168
      %v332 = vunpack.c.0.s8 %v331
      %v333 = vlaneseq
      %v334 = vshrl.u32 %v333, 7
      %v335 = vsub.s32 %v332, %v334
      %v336 = vrot.slane %v328, %v335
      %v337 = vcombine.high %v336, %v336
      %v338 = vlaneseq
      %v339 = vshrl.u32 %v338, 7
      %v340 = vsub.s32 0, %v339
      %v341 = vrot.slane %v336, %v340
      %v342 = vlaneseq
      %v343 = vshrl.u32 %v342, 7
      %v344 = vsub.s32 0, %v343
      %v345 = vrot.slane %v337, %v344
      %346 = vrot.lane.b32.xlu0 %v341, 83
      %v347 = vpop.permute.xlu0 %346
      %348 = vrot.lane.b32.xlu0 %v345, 83
      %v349 = vpop.permute.xlu0 %348
      %352 = vst.msk [vmem:[#allocation5 + $0x6] sm:$0x1] %vm166, %v347
      %353 = vst.msk [vmem:[#allocation5 + $0x1e] sm:$0x1] %vm166, %v349
      %v354 = vld [vmem:[#allocation2] sm:$0x3]
      %v355 = vmul.f32 %v354, 0.25
      %v358 = vunpack.c.l.s4 1966171168
      %v359 = vunpack.c.0.s8 %v358
      %v360 = vlaneseq
      %v361 = vshrl.u32 %v360, 7
      %v362 = vsub.s32 %v359, %v361
      %v363 = vrot.slane %v355, %v362
      %v364 = vcombine.high %v363, %v363
      %v365 = vlaneseq
      %v366 = vshrl.u32 %v365, 7
      %v367 = vsub.s32 0, %v366
      %v368 = vrot.slane %v363, %v367
      %v369 = vlaneseq
      %v370 = vshrl.u32 %v369, 7
      %v371 = vsub.s32 0, %v370
      %v372 = vrot.slane %v364, %v371
      %373 = vrot.lane.b32.xlu0 %v368, 67
      %v374 = vpop.permute.xlu0 %373
      %375 = vrot.lane.b32.xlu0 %v372, 67
      %v376 = vpop.permute.xlu0 %375
      %379 = vst.msk [vmem:[#allocation4 + $0x7] sm:$0x1] %vm166, %v374
      %380 = vst.msk [vmem:[#allocation4 + $0x1f] sm:$0x1] %vm166, %v376
      %v381 = vld [vmem:[#allocation3] sm:$0x3]
      %v384 = vunpack.c.l.s4 1966171168
      %v385 = vunpack.c.0.s8 %v384
      %v386 = vlaneseq
      %v387 = vshrl.u32 %v386, 7
      %v388 = vsub.s32 %v385, %v387
      %v389 = vrot.slane %v381, %v388
      %v390 = vcombine.high %v389, %v389
      %v391 = vlaneseq
      %v392 = vshrl.u32 %v391, 7
      %v393 = vsub.s32 0, %v392
      %v394 = vrot.slane %v389, %v393
      %v395 = vlaneseq
      %v396 = vshrl.u32 %v395, 7
      %v397 = vsub.s32 0, %v396
      %v398 = vrot.slane %v390, %v397
      %399 = vrot.lane.b32.xlu0 %v394, 67
      %v400 = vpop.permute.xlu0 %399
      %401 = vrot.lane.b32.xlu0 %v398, 67
      %v402 = vpop.permute.xlu0 %401
      %405 = vst.msk [vmem:[#allocation5 + $0x7] sm:$0x1] %vm166, %v400
      %406 = vst.msk [vmem:[#allocation5 + $0x1f] sm:$0x1] %vm166, %v402
      %v407 = vld [vmem:[#allocation2] sm:$0x3]
      %v408 = vmul.f32 %v407, 0.25
      %v411 = vunpack.c.l.s4 1966171168
      %v412 = vunpack.c.0.s8 %v411
      %v413 = vlaneseq
      %v414 = vshrl.u32 %v413, 7
      %v415 = vsub.s32 %v412, %v414
      %v416 = vrot.slane %v408, %v415
      %v417 = vcombine.high %v416, %v416
      %v418 = vlaneseq
      %v419 = vshrl.u32 %v418, 7
      %v420 = vsub.s32 0, %v419
      %v421 = vrot.slane %v416, %v420
      %v422 = vlaneseq
      %v423 = vshrl.u32 %v422, 7
      %v424 = vsub.s32 0, %v423
      %v425 = vrot.slane %v417, %v424
      %426 = vrot.lane.b32.xlu0 %v421, 51
      %v427 = vpop.permute.xlu0 %426
      %428 = vrot.lane.b32.xlu0 %v425, 51
      %v429 = vpop.permute.xlu0 %428
      %432 = vst.msk [vmem:[#allocation4 + $0x8] sm:$0x1] %vm166, %v427
      %433 = vst.msk [vmem:[#allocation4 + $0x20] sm:$0x1] %vm166, %v429
      %v434 = vld [vmem:[#allocation3] sm:$0x3]
      %v437 = vunpack.c.l.s4 1966171168
      %v438 = vunpack.c.0.s8 %v437
      %v439 = vlaneseq
      %v440 = vshrl.u32 %v439, 7
      %v441 = vsub.s32 %v438, %v440
      %v442 = vrot.slane %v434, %v441
      %v443 = vcombine.high %v442, %v442
      %v444 = vlaneseq
      %v445 = vshrl.u32 %v444, 7
      %v446 = vsub.s32 0, %v445
      %v447 = vrot.slane %v442, %v446
      %v448 = vlaneseq
      %v449 = vshrl.u32 %v448, 7
      %v450 = vsub.s32 0, %v449
      %v451 = vrot.slane %v443, %v450
      %452 = vrot.lane.b32.xlu0 %v447, 51
      %v453 = vpop.permute.xlu0 %452
      %454 = vrot.lane.b32.xlu0 %v451, 51
      %v455 = vpop.permute.xlu0 %454
      %458 = vst.msk [vmem:[#allocation5 + $0x8] sm:$0x1] %vm166, %v453
      %459 = vst.msk [vmem:[#allocation5 + $0x20] sm:$0x1] %vm166, %v455
      %v460 = vld [vmem:[#allocation2] sm:$0x3]
      %v461 = vmul.f32 %v460, 0.25
      %v464 = vunpack.c.l.s4 1966171168
      %v465 = vunpack.c.0.s8 %v464
      %v466 = vlaneseq
      %v467 = vshrl.u32 %v466, 7
      %v468 = vsub.s32 %v465, %v467
      %v469 = vrot.slane %v461, %v468
      %v470 = vcombine.high %v469, %v469
      %v471 = vlaneseq
      %v472 = vshrl.u32 %v471, 7
      %v473 = vsub.s32 0, %v472
      %v474 = vrot.slane %v469, %v473
      %v475 = vlaneseq
      %v476 = vshrl.u32 %v475, 7
      %v477 = vsub.s32 0, %v476
      %v478 = vrot.slane %v470, %v477
      %479 = vrot.lane.b32.xlu0 %v474, 35
      %v480 = vpop.permute.xlu0 %479
      %481 = vrot.lane.b32.xlu0 %v478, 35
      %v482 = vpop.permute.xlu0 %481
      %485 = vst.msk [vmem:[#allocation4 + $0x9] sm:$0x1] %vm166, %v480
      %486 = vst.msk [vmem:[#allocation4 + $0x21] sm:$0x1] %vm166, %v482
      %v487 = vld [vmem:[#allocation3] sm:$0x3]
      %v490 = vunpack.c.l.s4 1966171168
      %v491 = vunpack.c.0.s8 %v490
      %v492 = vlaneseq
      %v493 = vshrl.u32 %v492, 7
      %v494 = vsub.s32 %v491, %v493
      %v495 = vrot.slane %v487, %v494
      %v496 = vcombine.high %v495, %v495
      %v497 = vlaneseq
      %v498 = vshrl.u32 %v497, 7
      %v499 = vsub.s32 0, %v498
      %v500 = vrot.slane %v495, %v499
      %v501 = vlaneseq
      %v502 = vshrl.u32 %v501, 7
      %v503 = vsub.s32 0, %v502
      %v504 = vrot.slane %v496, %v503
      %505 = vrot.lane.b32.xlu0 %v500, 35
      %v506 = vpop.permute.xlu0 %505
      %507 = vrot.lane.b32.xlu0 %v504, 35
      %v508 = vpop.permute.xlu0 %507
      %511 = vst.msk [vmem:[#allocation5 + $0x9] sm:$0x1] %vm166, %v506
      %512 = vst.msk [vmem:[#allocation5 + $0x21] sm:$0x1] %vm166, %v508
      %v513 = vld [vmem:[#allocation2] sm:$0x3]
      %v514 = vmul.f32 %v513, 0.25
      %v517 = vunpack.c.l.s4 1966171168
      %v518 = vunpack.c.0.s8 %v517
      %v519 = vlaneseq
      %v520 = vshrl.u32 %v519, 7
      %v521 = vsub.s32 %v518, %v520
      %v522 = vrot.slane %v514, %v521
      %v523 = vcombine.high %v522, %v522
      %v524 = vlaneseq
      %v525 = vshrl.u32 %v524, 7
      %v526 = vsub.s32 0, %v525
      %v527 = vrot.slane %v522, %v526
      %v528 = vlaneseq
      %v529 = vshrl.u32 %v528, 7
      %v530 = vsub.s32 0, %v529
      %v531 = vrot.slane %v523, %v530
      %532 = vrot.lane.b32.xlu0 %v527, 19
      %v533 = vpop.permute.xlu0 %532
      %534 = vrot.lane.b32.xlu0 %v531, 19
      %v535 = vpop.permute.xlu0 %534
      %538 = vst.msk [vmem:[#allocation4 + $0xa] sm:$0x1] %vm166, %v533
      %539 = vst.msk [vmem:[#allocation4 + $0x22] sm:$0x1] %vm166, %v535
      %v540 = vld [vmem:[#allocation3] sm:$0x3]
      %v543 = vunpack.c.l.s4 1966171168
      %v544 = vunpack.c.0.s8 %v543
      %v545 = vlaneseq
      %v546 = vshrl.u32 %v545, 7
      %v547 = vsub.s32 %v544, %v546
      %v548 = vrot.slane %v540, %v547
      %v549 = vcombine.high %v548, %v548
      %v550 = vlaneseq
      %v551 = vshrl.u32 %v550, 7
      %v552 = vsub.s32 0, %v551
      %v553 = vrot.slane %v548, %v552
      %v554 = vlaneseq
      %v555 = vshrl.u32 %v554, 7
      %v556 = vsub.s32 0, %v555
      %v557 = vrot.slane %v549, %v556
      %558 = vrot.lane.b32.xlu0 %v553, 19
      %v559 = vpop.permute.xlu0 %558
      %560 = vrot.lane.b32.xlu0 %v557, 19
      %v561 = vpop.permute.xlu0 %560
      %564 = vst.msk [vmem:[#allocation5 + $0xa] sm:$0x1] %vm166, %v559
      %565 = vst.msk [vmem:[#allocation5 + $0x22] sm:$0x1] %vm166, %v561
      %v566 = vld [vmem:[#allocation2 + $0x2] sm:$0x3]
      %v567 = vmul.f32 %v566, 0.25
      %v570 = vunpack.c.l.s4 1966171168
      %v571 = vunpack.c.0.s8 %v570
      %v572 = vlaneseq
      %v573 = vshrl.u32 %v572, 7
      %v574 = vsub.s32 %v571, %v573
      %v575 = vrot.slane %v567, %v574
      %v576 = vcombine.high %v575, %v575
      %v577 = vlaneseq
      %v578 = vshrl.u32 %v577, 7
      %v579 = vsub.s32 0, %v578
      %v580 = vrot.slane %v575, %v579
      %v581 = vlaneseq
      %v582 = vshrl.u32 %v581, 7
      %v583 = vsub.s32 0, %v582
      %v584 = vrot.slane %v576, %v583
      %585 = vrot.lane.b32.xlu0 %v580, 3
      %v586 = vpop.permute.xlu0 %585
      %587 = vrot.lane.b32.xlu0 %v584, 3
      %v588 = vpop.permute.xlu0 %587
      %591 = vst.msk [vmem:[#allocation4 + $0xb] sm:$0x1] %vm166, %v586
      %592 = vst.msk [vmem:[#allocation4 + $0x23] sm:$0x1] %vm166, %v588
      %v593 = vld [vmem:[#allocation3 + $0x2] sm:$0x3]
      %v596 = vunpack.c.l.s4 1966171168
      %v597 = vunpack.c.0.s8 %v596
      %v598 = vlaneseq
      %v599 = vshrl.u32 %v598, 7
      %v600 = vsub.s32 %v597, %v599
      %v601 = vrot.slane %v593, %v600
      %v602 = vcombine.high %v601, %v601
      %v603 = vlaneseq
      %v604 = vshrl.u32 %v603, 7
      %v605 = vsub.s32 0, %v604
      %v606 = vrot.slane %v601, %v605
      %v607 = vlaneseq
      %v608 = vshrl.u32 %v607, 7
      %v609 = vsub.s32 0, %v608
      %v610 = vrot.slane %v602, %v609
      %611 = vrot.lane.b32.xlu0 %v606, 3
      %v612 = vpop.permute.xlu0 %611
      %613 = vrot.lane.b32.xlu0 %v610, 3
      %v614 = vpop.permute.xlu0 %613
      %617 = vst.msk [vmem:[#allocation5 + $0xb] sm:$0x1] %vm166, %v612
      %618 = vst.msk [vmem:[#allocation5 + $0x23] sm:$0x1] %vm166, %v614
      %v619 = vld [vmem:[#allocation2 + $0x2] sm:$0x3]
      %v620 = vmul.f32 %v619, 0.25
      %v623 = vunpack.c.l.s4 1966171168
      %v624 = vunpack.c.0.s8 %v623
      %v625 = vlaneseq
      %v626 = vshrl.u32 %v625, 7
      %v627 = vsub.s32 %v624, %v626
      %v628 = vrot.slane %v620, %v627
      %v629 = vcombine.high %v628, %v628
      %v630 = vlaneseq
      %v631 = vshrl.u32 %v630, 7
      %v632 = vsub.s32 0, %v631
      %v633 = vrot.slane %v628, %v632
      %v634 = vlaneseq
      %v635 = vshrl.u32 %v634, 7
      %v636 = vsub.s32 0, %v635
      %v637 = vrot.slane %v629, %v636
      %638 = vrot.lane.b32.xlu0 %v633, 115
      %v639 = vpop.permute.xlu0 %638
      %640 = vrot.lane.b32.xlu0 %v637, 115
      %v641 = vpop.permute.xlu0 %640
      %644 = vst.msk [vmem:[#allocation4 + $0xc] sm:$0x1] %vm166, %v639
      %645 = vst.msk [vmem:[#allocation4 + $0x24] sm:$0x1] %vm166, %v641
      %v646 = vld [vmem:[#allocation3 + $0x2] sm:$0x3]
      %v649 = vunpack.c.l.s4 1966171168
      %v650 = vunpack.c.0.s8 %v649
      %v651 = vlaneseq
      %v652 = vshrl.u32 %v651, 7
      %v653 = vsub.s32 %v650, %v652
      %v654 = vrot.slane %v646, %v653
      %v655 = vcombine.high %v654, %v654
      %v656 = vlaneseq
      %v657 = vshrl.u32 %v656, 7
      %v658 = vsub.s32 0, %v657
      %v659 = vrot.slane %v654, %v658
      %v660 = vlaneseq
      %v661 = vshrl.u32 %v660, 7
      %v662 = vsub.s32 0, %v661
      %v663 = vrot.slane %v655, %v662
      %664 = vrot.lane.b32.xlu0 %v659, 115
      %v665 = vpop.permute.xlu0 %664
      %666 = vrot.lane.b32.xlu0 %v663, 115
      %v667 = vpop.permute.xlu0 %666
      %670 = vst.msk [vmem:[#allocation5 + $0xc] sm:$0x1] %vm166, %v665
      %671 = vst.msk [vmem:[#allocation5 + $0x24] sm:$0x1] %vm166, %v667
      %v672 = vld [vmem:[#allocation2 + $0x2] sm:$0x3]
      %v673 = vmul.f32 %v672, 0.25
      %v676 = vunpack.c.l.s4 1966171168
      %v677 = vunpack.c.0.s8 %v676
      %v678 = vlaneseq
      %v679 = vshrl.u32 %v678, 7
      %v680 = vsub.s32 %v677, %v679
      %v681 = vrot.slane %v673, %v680
      %v682 = vcombine.high %v681, %v681
      %v683 = vlaneseq
      %v684 = vshrl.u32 %v683, 7
      %v685 = vsub.s32 0, %v684
      %v686 = vrot.slane %v681, %v685
      %v687 = vlaneseq
      %v688 = vshrl.u32 %v687, 7
      %v689 = vsub.s32 0, %v688
      %v690 = vrot.slane %v682, %v689
      %691 = vrot.lane.b32.xlu0 %v686, 99
      %v692 = vpop.permute.xlu0 %691
      %693 = vrot.lane.b32.xlu0 %v690, 99
      %v694 = vpop.permute.xlu0 %693
      %697 = vst.msk [vmem:[#allocation4 + $0xd] sm:$0x1] %vm166, %v692
      %698 = vst.msk [vmem:[#allocation4 + $0x25] sm:$0x1] %vm166, %v694
      %v699 = vld [vmem:[#allocation3 + $0x2] sm:$0x3]
      %v702 = vunpack.c.l.s4 1966171168
      %v703 = vunpack.c.0.s8 %v702
      %v704 = vlaneseq
      %v705 = vshrl.u32 %v704, 7
      %v706 = vsub.s32 %v703, %v705
      %v707 = vrot.slane %v699, %v706
      %v708 = vcombine.high %v707, %v707
      %v709 = vlaneseq
      %v710 = vshrl.u32 %v709, 7
      %v711 = vsub.s32 0, %v710
      %v712 = vrot.slane %v707, %v711
      %v713 = vlaneseq
      %v714 = vshrl.u32 %v713, 7
      %v715 = vsub.s32 0, %v714
      %v716 = vrot.slane %v708, %v715
      %717 = vrot.lane.b32.xlu0 %v712, 99
      %v718 = vpop.permute.xlu0 %717
      %719 = vrot.lane.b32.xlu0 %v716, 99
      %v720 = vpop.permute.xlu0 %719
      %723 = vst.msk [vmem:[#allocation5 + $0xd] sm:$0x1] %vm166, %v718
      %724 = vst.msk [vmem:[#allocation5 + $0x25] sm:$0x1] %vm166, %v720
      %v725 = vld [vmem:[#allocation2 + $0x2] sm:$0x3]
      %v726 = vmul.f32 %v725, 0.25
      %v729 = vunpack.c.l.s4 1966171168
      %v730 = vunpack.c.0.s8 %v729
      %v731 = vlaneseq
      %v732 = vshrl.u32 %v731, 7
      %v733 = vsub.s32 %v730, %v732
      %v734 = vrot.slane %v726, %v733
      %v735 = vcombine.high %v734, %v734
      %v736 = vlaneseq
      %v737 = vshrl.u32 %v736, 7
      %v738 = vsub.s32 0, %v737
      %v739 = vrot.slane %v734, %v738
      %v740 = vlaneseq
      %v741 = vshrl.u32 %v740, 7
      %v742 = vsub.s32 0, %v741
      %v743 = vrot.slane %v735, %v742
      %744 = vrot.lane.b32.xlu0 %v739, 83
      %v745 = vpop.permute.xlu0 %744
      %746 = vrot.lane.b32.xlu0 %v743, 83
      %v747 = vpop.permute.xlu0 %746
      %750 = vst.msk [vmem:[#allocation4 + $0xe] sm:$0x1] %vm166, %v745
      %751 = vst.msk [vmem:[#allocation4 + $0x26] sm:$0x1] %vm166, %v747
      %v752 = vld [vmem:[#allocation3 + $0x2] sm:$0x3]
      %v755 = vunpack.c.l.s4 1966171168
      %v756 = vunpack.c.0.s8 %v755
      %v757 = vlaneseq
      %v758 = vshrl.u32 %v757, 7
      %v759 = vsub.s32 %v756, %v758
      %v760 = vrot.slane %v752, %v759
      %v761 = vcombine.high %v760, %v760
      %v762 = vlaneseq
      %v763 = vshrl.u32 %v762, 7
      %v764 = vsub.s32 0, %v763
      %v765 = vrot.slane %v760, %v764
      %v766 = vlaneseq
      %v767 = vshrl.u32 %v766, 7
      %v768 = vsub.s32 0, %v767
      %v769 = vrot.slane %v761, %v768
      %770 = vrot.lane.b32.xlu0 %v765, 83
      %v771 = vpop.permute.xlu0 %770
      %772 = vrot.lane.b32.xlu0 %v769, 83
      %v773 = vpop.permute.xlu0 %772
      %776 = vst.msk [vmem:[#allocation5 + $0xe] sm:$0x1] %vm166, %v771
      %777 = vst.msk [vmem:[#allocation5 + $0x26] sm:$0x1] %vm166, %v773
      %v778 = vld [vmem:[#allocation2 + $0x2] sm:$0x3]
      %v779 = vmul.f32 %v778, 0.25
      %v782 = vunpack.c.l.s4 1966171168
      %v783 = vunpack.c.0.s8 %v782
      %v784 = vlaneseq
      %v785 = vshrl.u32 %v784, 7
      %v786 = vsub.s32 %v783, %v785
      %v787 = vrot.slane %v779, %v786
      %v788 = vcombine.high %v787, %v787
      %v789 = vlaneseq
      %v790 = vshrl.u32 %v789, 7
      %v791 = vsub.s32 0, %v790
      %v792 = vrot.slane %v787, %v791
      %v793 = vlaneseq
      %v794 = vshrl.u32 %v793, 7
      %v795 = vsub.s32 0, %v794
      %v796 = vrot.slane %v788, %v795
      %797 = vrot.lane.b32.xlu0 %v792, 67
      %v798 = vpop.permute.xlu0 %797
      %799 = vrot.lane.b32.xlu0 %v796, 67
      %v800 = vpop.permute.xlu0 %799
      %803 = vst.msk [vmem:[#allocation4 + $0xf] sm:$0x1] %vm166, %v798
      %804 = vst.msk [vmem:[#allocation4 + $0x27] sm:$0x1] %vm166, %v800
      %v805 = vld [vmem:[#allocation3 + $0x2] sm:$0x3]
      %v808 = vunpack.c.l.s4 1966171168
      %v809 = vunpack.c.0.s8 %v808
      %v810 = vlaneseq
      %v811 = vshrl.u32 %v810, 7
      %v812 = vsub.s32 %v809, %v811
      %v813 = vrot.slane %v805, %v812
      %v814 = vcombine.high %v813, %v813
      %v815 = vlaneseq
      %v816 = vshrl.u32 %v815, 7
      %v817 = vsub.s32 0, %v816
      %v818 = vrot.slane %v813, %v817
      %v819 = vlaneseq
      %v820 = vshrl.u32 %v819, 7
      %v821 = vsub.s32 0, %v820
      %v822 = vrot.slane %v814, %v821
      %823 = vrot.lane.b32.xlu0 %v818, 67
      %v824 = vpop.permute.xlu0 %823
      %825 = vrot.lane.b32.xlu0 %v822, 67
      %v826 = vpop.permute.xlu0 %825
      %829 = vst.msk [vmem:[#allocation5 + $0xf] sm:$0x1] %vm166, %v824
      %830 = vst.msk [vmem:[#allocation5 + $0x27] sm:$0x1] %vm166, %v826
      %v831 = vld [vmem:[#allocation2 + $0x2] sm:$0x3]
      %v832 = vmul.f32 %v831, 0.25
      %v835 = vunpack.c.l.s4 1966171168
      %v836 = vunpack.c.0.s8 %v835
      %v837 = vlaneseq
      %v838 = vshrl.u32 %v837, 7
      %v839 = vsub.s32 %v836, %v838
      %v840 = vrot.slane %v832, %v839
      %v841 = vcombine.high %v840, %v840
      %v842 = vlaneseq
      %v843 = vshrl.u32 %v842, 7
      %v844 = vsub.s32 0, %v843
      %v845 = vrot.slane %v840, %v844
      %v846 = vlaneseq
      %v847 = vshrl.u32 %v846, 7
      %v848 = vsub.s32 0, %v847
      %v849 = vrot.slane %v841, %v848
      %850 = vrot.lane.b32.xlu0 %v845, 51
      %v851 = vpop.permute.xlu0 %850
      %852 = vrot.lane.b32.xlu0 %v849, 51
      %v853 = vpop.permute.xlu0 %852
      %856 = vst.msk [vmem:[#allocation4 + $0x10] sm:$0x1] %vm166, %v851
      %857 = vst.msk [vmem:[#allocation4 + $0x28] sm:$0x1] %vm166, %v853
      %v858 = vld [vmem:[#allocation3 + $0x2] sm:$0x3]
      %v861 = vunpack.c.l.s4 1966171168
      %v862 = vunpack.c.0.s8 %v861
      %v863 = vlaneseq
      %v864 = vshrl.u32 %v863, 7
      %v865 = vsub.s32 %v862, %v864
      %v866 = vrot.slane %v858, %v865
      %v867 = vcombine.high %v866, %v866
      %v868 = vlaneseq
      %v869 = vshrl.u32 %v868, 7
      %v870 = vsub.s32 0, %v869
      %v871 = vrot.slane %v866, %v870
      %v872 = vlaneseq
      %v873 = vshrl.u32 %v872, 7
      %v874 = vsub.s32 0, %v873
      %v875 = vrot.slane %v867, %v874
      %876 = vrot.lane.b32.xlu0 %v871, 51
      %v877 = vpop.permute.xlu0 %876
      %878 = vrot.lane.b32.xlu0 %v875, 51
      %v879 = vpop.permute.xlu0 %878
      %882 = vst.msk [vmem:[#allocation5 + $0x10] sm:$0x1] %vm166, %v877
      %883 = vst.msk [vmem:[#allocation5 + $0x28] sm:$0x1] %vm166, %v879
      %v884 = vld [vmem:[#allocation2 + $0x2] sm:$0x3]
      %v885 = vmul.f32 %v884, 0.25
      %v888 = vunpack.c.l.s4 1966171168
      %v889 = vunpack.c.0.s8 %v888
      %v890 = vlaneseq
      %v891 = vshrl.u32 %v890, 7
      %v892 = vsub.s32 %v889, %v891
      %v893 = vrot.slane %v885, %v892
      %v894 = vcombine.high %v893, %v893
      %v895 = vlaneseq
      %v896 = vshrl.u32 %v895, 7
      %v897 = vsub.s32 0, %v896
      %v898 = vrot.slane %v893, %v897
      %v899 = vlaneseq
      %v900 = vshrl.u32 %v899, 7
      %v901 = vsub.s32 0, %v900
      %v902 = vrot.slane %v894, %v901
      %903 = vrot.lane.b32.xlu0 %v898, 35
      %v904 = vpop.permute.xlu0 %903
      %905 = vrot.lane.b32.xlu0 %v902, 35
      %v906 = vpop.permute.xlu0 %905
      %909 = vst.msk [vmem:[#allocation4 + $0x11] sm:$0x1] %vm166, %v904
      %910 = vst.msk [vmem:[#allocation4 + $0x29] sm:$0x1] %vm166, %v906
      %v911 = vld [vmem:[#allocation3 + $0x2] sm:$0x3]
      %v914 = vunpack.c.l.s4 1966171168
      %v915 = vunpack.c.0.s8 %v914
      %v916 = vlaneseq
      %v917 = vshrl.u32 %v916, 7
      %v918 = vsub.s32 %v915, %v917
      %v919 = vrot.slane %v911, %v918
      %v920 = vcombine.high %v919, %v919
      %v921 = vlaneseq
      %v922 = vshrl.u32 %v921, 7
      %v923 = vsub.s32 0, %v922
      %v924 = vrot.slane %v919, %v923
      %v925 = vlaneseq
      %v926 = vshrl.u32 %v925, 7
      %v927 = vsub.s32 0, %v926
      %v928 = vrot.slane %v920, %v927
      %929 = vrot.lane.b32.xlu0 %v924, 35
      %v930 = vpop.permute.xlu0 %929
      %931 = vrot.lane.b32.xlu0 %v928, 35
      %v932 = vpop.permute.xlu0 %931
      %935 = vst.msk [vmem:[#allocation5 + $0x11] sm:$0x1] %vm166, %v930
      %936 = vst.msk [vmem:[#allocation5 + $0x29] sm:$0x1] %vm166, %v932
      %v937 = vld [vmem:[#allocation2 + $0x2] sm:$0x3]
      %v938 = vmul.f32 %v937, 0.25
      %v941 = vunpack.c.l.s4 1966171168
      %v942 = vunpack.c.0.s8 %v941
      %v943 = vlaneseq
      %v944 = vshrl.u32 %v943, 7
      %v945 = vsub.s32 %v942, %v944
      %v946 = vrot.slane %v938, %v945
      %v947 = vcombine.high %v946, %v946
      %v948 = vlaneseq
      %v949 = vshrl.u32 %v948, 7
      %v950 = vsub.s32 0, %v949
      %v951 = vrot.slane %v946, %v950
      %v952 = vlaneseq
      %v953 = vshrl.u32 %v952, 7
      %v954 = vsub.s32 0, %v953
      %v955 = vrot.slane %v947, %v954
      %956 = vrot.lane.b32.xlu0 %v951, 19
      %v957 = vpop.permute.xlu0 %956
      %958 = vrot.lane.b32.xlu0 %v955, 19
      %v959 = vpop.permute.xlu0 %958
      %962 = vst.msk [vmem:[#allocation4 + $0x12] sm:$0x1] %vm166, %v957
      %963 = vst.msk [vmem:[#allocation4 + $0x2a] sm:$0x1] %vm166, %v959
      %v964 = vld [vmem:[#allocation3 + $0x2] sm:$0x3]
      %v967 = vunpack.c.l.s4 1966171168
      %v968 = vunpack.c.0.s8 %v967
      %v969 = vlaneseq
      %v970 = vshrl.u32 %v969, 7
      %v971 = vsub.s32 %v968, %v970
      %v972 = vrot.slane %v964, %v971
      %v973 = vcombine.high %v972, %v972
      %v974 = vlaneseq
      %v975 = vshrl.u32 %v974, 7
      %v976 = vsub.s32 0, %v975
      %v977 = vrot.slane %v972, %v976
      %v978 = vlaneseq
      %v979 = vshrl.u32 %v978, 7
      %v980 = vsub.s32 0, %v979
      %v981 = vrot.slane %v973, %v980
      %982 = vrot.lane.b32.xlu0 %v977, 19
      %v983 = vpop.permute.xlu0 %982
      %984 = vrot.lane.b32.xlu0 %v981, 19
      %v985 = vpop.permute.xlu0 %984
      %988 = vst.msk [vmem:[#allocation5 + $0x12] sm:$0x1] %vm166, %v983
      %989 = vst.msk [vmem:[#allocation5 + $0x2a] sm:$0x1] %vm166, %v985
      %v990 = vld [vmem:[#allocation4] sm:$0xff]
      %v991 = vld [vmem:[#allocation4 + $0x8] sm:$0xff]
      %v992 = vld [vmem:[#allocation4 + $0x10] sm:$0x3f]
      %v993 = vld [vmem:[#allocation5] sm:$0xff]
      %v994 = vld [vmem:[#allocation5 + $0x8] sm:$0xff]
      %v995 = vld [vmem:[#allocation5 + $0x10] sm:$0x3f]
      %s996 = sld [smem:[#allocation6]]
      %v997 = vstv %s996
      %v998 = vmul.f32 %v990, %v997
      %v999 = vmul.f32 %v991, %v997
      %s1000 = sld [smem:[#allocation6 + $0x31]]
      %v1001 = vstv %s1000
      %v1002 = vmul.f32 %v993, %v1001
      %v1003 = vmul.f32 %v994, %v1001
      %v1004 = vadd.f32 %v998, %v1002
      %v1005 = vadd.f32 %v999, %v1003
      %s1006 = sld [smem:[#allocation6 + $0x1]]
      %v1007 = vstv %s1006
      %v1008 = vmul.f32 %v990, %v1007
      %v1009 = vmul.f32 %v991, %v1007
      %1012 = vrot.lane.b32.xlu0 %v1008, 127
      %v1013 = vpop.permute.xlu0 %1012
      %1014 = vrot.lane.b32.xlu0 %v1009, 127
      %v1015 = vpop.permute.xlu0 %1014
      %v1018 = vadd.f32 %v1004, %v1013
      %v1019 = vadd.f32 %v1005, %v1015
      %s1020 = sld [smem:[#allocation6 + $0x32]]
      %v1021 = vstv %s1020
      %v1022 = vmul.f32 %v993, %v1021
      %v1023 = vmul.f32 %v994, %v1021
      %1026 = vrot.lane.b32.xlu0 %v1022, 127
      %v1027 = vpop.permute.xlu0 %1026
      %1028 = vrot.lane.b32.xlu0 %v1023, 127
      %v1029 = vpop.permute.xlu0 %1028
      %v1032 = vadd.f32 %v1018, %v1027
      %v1033 = vadd.f32 %v1019, %v1029
      %s1034 = sld [smem:[#allocation6 + $0x2]]
      %v1035 = vstv %s1034
      %v1036 = vmul.f32 %v990, %v1035
      %v1037 = vmul.f32 %v991, %v1035
      %1040 = vrot.lane.b32.xlu0 %v1036, 126
      %v1041 = vpop.permute.xlu0 %1040
      %1042 = vrot.lane.b32.xlu0 %v1037, 126
      %v1043 = vpop.permute.xlu0 %1042
      %v1046 = vadd.f32 %v1032, %v1041
      %v1047 = vadd.f32 %v1033, %v1043
      %s1048 = sld [smem:[#allocation6 + $0x33]]
      %v1049 = vstv %s1048
      %v1050 = vmul.f32 %v993, %v1049
      %v1051 = vmul.f32 %v994, %v1049
      %1054 = vrot.lane.b32.xlu0 %v1050, 126
      %v1055 = vpop.permute.xlu0 %1054
      %1056 = vrot.lane.b32.xlu0 %v1051, 126
      %v1057 = vpop.permute.xlu0 %1056
      %v1060 = vadd.f32 %v1046, %v1055
      %v1061 = vadd.f32 %v1047, %v1057
      %s1062 = sld [smem:[#allocation6 + $0x3]]
      %v1063 = vstv %s1062
      %v1064 = vmul.f32 %v990, %v1063
      %v1065 = vmul.f32 %v991, %v1063
      %1068 = vrot.lane.b32.xlu0 %v1064, 125
      %v1069 = vpop.permute.xlu0 %1068
      %1070 = vrot.lane.b32.xlu0 %v1065, 125
      %v1071 = vpop.permute.xlu0 %1070
      %v1074 = vadd.f32 %v1060, %v1069
      %v1075 = vadd.f32 %v1061, %v1071
      %s1076 = sld [smem:[#allocation6 + $0x34]]
      %v1077 = vstv %s1076
      %v1078 = vmul.f32 %v993, %v1077
      %v1079 = vmul.f32 %v994, %v1077
      %1082 = vrot.lane.b32.xlu0 %v1078, 125
      %v1083 = vpop.permute.xlu0 %1082
      %1084 = vrot.lane.b32.xlu0 %v1079, 125
      %v1085 = vpop.permute.xlu0 %1084
      %v1088 = vadd.f32 %v1074, %v1083
      %v1089 = vadd.f32 %v1075, %v1085
      %s1090 = sld [smem:[#allocation6 + $0x4]]
      %v1091 = vstv %s1090
      %v1092 = vmul.f32 %v990, %v1091
      %v1093 = vmul.f32 %v991, %v1091
      %1096 = vrot.lane.b32.xlu0 %v1092, 124
      %v1097 = vpop.permute.xlu0 %1096
      %1098 = vrot.lane.b32.xlu0 %v1093, 124
      %v1099 = vpop.permute.xlu0 %1098
      %v1102 = vadd.f32 %v1088, %v1097
      %v1103 = vadd.f32 %v1089, %v1099
      %s1104 = sld [smem:[#allocation6 + $0x35]]
      %v1105 = vstv %s1104
      %v1106 = vmul.f32 %v993, %v1105
      %v1107 = vmul.f32 %v994, %v1105
      %1110 = vrot.lane.b32.xlu0 %v1106, 124
      %v1111 = vpop.permute.xlu0 %1110
      %1112 = vrot.lane.b32.xlu0 %v1107, 124
      %v1113 = vpop.permute.xlu0 %1112
      %v1116 = vadd.f32 %v1102, %v1111
      %v1117 = vadd.f32 %v1103, %v1113
      %s1118 = sld [smem:[#allocation6 + $0x5]]
      %v1119 = vstv %s1118
      %v1120 = vmul.f32 %v990, %v1119
      %v1121 = vmul.f32 %v991, %v1119
      %1124 = vrot.lane.b32.xlu0 %v1120, 123
      %v1125 = vpop.permute.xlu0 %1124
      %1126 = vrot.lane.b32.xlu0 %v1121, 123
      %v1127 = vpop.permute.xlu0 %1126
      %v1130 = vadd.f32 %v1116, %v1125
      %v1131 = vadd.f32 %v1117, %v1127
      %s1132 = sld [smem:[#allocation6 + $0x36]]
      %v1133 = vstv %s1132
      %v1134 = vmul.f32 %v993, %v1133
      %v1135 = vmul.f32 %v994, %v1133
      %1138 = vrot.lane.b32.xlu0 %v1134, 123
      %v1139 = vpop.permute.xlu0 %1138
      %1140 = vrot.lane.b32.xlu0 %v1135, 123
      %v1141 = vpop.permute.xlu0 %1140
      %v1144 = vadd.f32 %v1130, %v1139
      %v1145 = vadd.f32 %v1131, %v1141
      %s1146 = sld [smem:[#allocation6 + $0x6]]
      %v1147 = vstv %s1146
      %v1148 = vmul.f32 %v990, %v1147
      %v1149 = vmul.f32 %v991, %v1147
      %1152 = vrot.lane.b32.xlu0 %v1148, 122
      %v1153 = vpop.permute.xlu0 %1152
      %1154 = vrot.lane.b32.xlu0 %v1149, 122
      %v1155 = vpop.permute.xlu0 %1154
      %v1158 = vadd.f32 %v1144, %v1153
      %v1159 = vadd.f32 %v1145, %v1155
      %s1160 = sld [smem:[#allocation6 + $0x37]]
      %v1161 = vstv %s1160
      %v1162 = vmul.f32 %v993, %v1161
      %v1163 = vmul.f32 %v994, %v1161
      %1166 = vrot.lane.b32.xlu0 %v1162, 122
      %v1167 = vpop.permute.xlu0 %1166
      %1168 = vrot.lane.b32.xlu0 %v1163, 122
      %v1169 = vpop.permute.xlu0 %1168
      %v1172 = vadd.f32 %v1158, %v1167
      %v1173 = vadd.f32 %v1159, %v1169
      %v1174 = vadd.f32 %v1172, 0.0
      %v1175 = vadd.f32 %v1173, 0.0
      %s1176 = sld [smem:[#allocation6 + $0x7]]
      %v1177 = vstv %s1176
      %v1178 = vmul.f32 %v990, %v1177
      %v1179 = vmul.f32 %v991, %v1177
      %v1180 = vmul.f32 %v992, %v1177
      %s1181 = sld [smem:[#allocation6 + $0x38]]
      %v1182 = vstv %s1181
      %v1183 = vmul.f32 %v993, %v1182
      %v1184 = vmul.f32 %v994, %v1182
      %v1185 = vmul.f32 %v995, %v1182
      %v1186 = vadd.f32 %v1178, %v1183
      %v1187 = vadd.f32 %v1179, %v1184
      %v1188 = vadd.f32 %v1180, %v1185
      %s1189 = sld [smem:[#allocation6 + $0x8]]
      %v1190 = vstv %s1189
      %v1191 = vmul.f32 %v990, %v1190
      %v1192 = vmul.f32 %v991, %v1190
      %v1193 = vmul.f32 %v992, %v1190
      %1197 = vrot.lane.b32.xlu0 %v1191, 127
      %v1198 = vpop.permute.xlu0 %1197
      %1199 = vrot.lane.b32.xlu0 %v1192, 127
      %v1200 = vpop.permute.xlu0 %1199
      %1201 = vrot.lane.b32.xlu0 %v1193, 127
      %v1202 = vpop.permute.xlu0 %1201
      %v1206 = vadd.f32 %v1186, %v1198
      %v1207 = vadd.f32 %v1187, %v1200
      %v1208 = vadd.f32 %v1188, %v1202
      %s1209 = sld [smem:[#allocation6 + $0x39]]
      %v1210 = vstv %s1209
      %v1211 = vmul.f32 %v993, %v1210
      %v1212 = vmul.f32 %v994, %v1210
      %v1213 = vmul.f32 %v995, %v1210
      %1217 = vrot.lane.b32.xlu0 %v1211, 127
      %v1218 = vpop.permute.xlu0 %1217
      %1219 = vrot.lane.b32.xlu0 %v1212, 127
      %v1220 = vpop.permute.xlu0 %1219
      %1221 = vrot.lane.b32.xlu0 %v1213, 127
      %v1222 = vpop.permute.xlu0 %1221
      %v1226 = vadd.f32 %v1206, %v1218
      %v1227 = vadd.f32 %v1207, %v1220
      %v1228 = vadd.f32 %v1208, %v1222
      %s1229 = sld [smem:[#allocation6 + $0x9]]
      %v1230 = vstv %s1229
      %v1231 = vmul.f32 %v990, %v1230
      %v1232 = vmul.f32 %v991, %v1230
      %v1233 = vmul.f32 %v992, %v1230
      %1237 = vrot.lane.b32.xlu0 %v1231, 126
      %v1238 = vpop.permute.xlu0 %1237
      %1239 = vrot.lane.b32.xlu0 %v1232, 126
      %v1240 = vpop.permute.xlu0 %1239
      %1241 = vrot.lane.b32.xlu0 %v1233, 126
      %v1242 = vpop.permute.xlu0 %1241
      %v1246 = vadd.f32 %v1226, %v1238
      %v1247 = vadd.f32 %v1227, %v1240
      %v1248 = vadd.f32 %v1228, %v1242
      %s1249 = sld [smem:[#allocation6 + $0x3a]]
      %v1250 = vstv %s1249
      %v1251 = vmul.f32 %v993, %v1250
      %v1252 = vmul.f32 %v994, %v1250
      %v1253 = vmul.f32 %v995, %v1250
      %1257 = vrot.lane.b32.xlu0 %v1251, 126
      %v1258 = vpop.permute.xlu0 %1257
      %1259 = vrot.lane.b32.xlu0 %v1252, 126
      %v1260 = vpop.permute.xlu0 %1259
      %1261 = vrot.lane.b32.xlu0 %v1253, 126
      %v1262 = vpop.permute.xlu0 %1261
      %v1266 = vadd.f32 %v1246, %v1258
      %v1267 = vadd.f32 %v1247, %v1260
      %v1268 = vadd.f32 %v1248, %v1262
      %s1269 = sld [smem:[#allocation6 + $0xa]]
      %v1270 = vstv %s1269
      %v1271 = vmul.f32 %v990, %v1270
      %v1272 = vmul.f32 %v991, %v1270
      %v1273 = vmul.f32 %v992, %v1270
      %1277 = vrot.lane.b32.xlu0 %v1271, 125
      %v1278 = vpop.permute.xlu0 %1277
      %1279 = vrot.lane.b32.xlu0 %v1272, 125
      %v1280 = vpop.permute.xlu0 %1279
      %1281 = vrot.lane.b32.xlu0 %v1273, 125
      %v1282 = vpop.permute.xlu0 %1281
      %v1286 = vadd.f32 %v1266, %v1278
      %v1287 = vadd.f32 %v1267, %v1280
      %v1288 = vadd.f32 %v1268, %v1282
      %s1289 = sld [smem:[#allocation6 + $0x3b]]
      %v1290 = vstv %s1289
      %v1291 = vmul.f32 %v993, %v1290
      %v1292 = vmul.f32 %v994, %v1290
      %v1293 = vmul.f32 %v995, %v1290
      %1297 = vrot.lane.b32.xlu0 %v1291, 125
      %v1298 = vpop.permute.xlu0 %1297
      %1299 = vrot.lane.b32.xlu0 %v1292, 125
      %v1300 = vpop.permute.xlu0 %1299
      %1301 = vrot.lane.b32.xlu0 %v1293, 125
      %v1302 = vpop.permute.xlu0 %1301
      %v1306 = vadd.f32 %v1286, %v1298
      %v1307 = vadd.f32 %v1287, %v1300
      %v1308 = vadd.f32 %v1288, %v1302
      %s1309 = sld [smem:[#allocation6 + $0xb]]
      %v1310 = vstv %s1309
      %v1311 = vmul.f32 %v990, %v1310
      %v1312 = vmul.f32 %v991, %v1310
      %v1313 = vmul.f32 %v992, %v1310
      %1317 = vrot.lane.b32.xlu0 %v1311, 124
      %v1318 = vpop.permute.xlu0 %1317
      %1319 = vrot.lane.b32.xlu0 %v1312, 124
      %v1320 = vpop.permute.xlu0 %1319
      %1321 = vrot.lane.b32.xlu0 %v1313, 124
      %v1322 = vpop.permute.xlu0 %1321
      %v1326 = vadd.f32 %v1306, %v1318
      %v1327 = vadd.f32 %v1307, %v1320
      %v1328 = vadd.f32 %v1308, %v1322
      %s1329 = sld [smem:[#allocation6 + $0x3c]]
      %v1330 = vstv %s1329
      %v1331 = vmul.f32 %v993, %v1330
      %v1332 = vmul.f32 %v994, %v1330
      %v1333 = vmul.f32 %v995, %v1330
      %1337 = vrot.lane.b32.xlu0 %v1331, 124
      %v1338 = vpop.permute.xlu0 %1337
      %1339 = vrot.lane.b32.xlu0 %v1332, 124
      %v1340 = vpop.permute.xlu0 %1339
      %1341 = vrot.lane.b32.xlu0 %v1333, 124
      %v1342 = vpop.permute.xlu0 %1341
      %v1346 = vadd.f32 %v1326, %v1338
      %v1347 = vadd.f32 %v1327, %v1340
      %v1348 = vadd.f32 %v1328, %v1342
      %s1349 = sld [smem:[#allocation6 + $0xc]]
      %v1350 = vstv %s1349
      %v1351 = vmul.f32 %v990, %v1350
      %v1352 = vmul.f32 %v991, %v1350
      %v1353 = vmul.f32 %v992, %v1350
      %1357 = vrot.lane.b32.xlu0 %v1351, 123
      %v1358 = vpop.permute.xlu0 %1357
      %1359 = vrot.lane.b32.xlu0 %v1352, 123
      %v1360 = vpop.permute.xlu0 %1359
      %1361 = vrot.lane.b32.xlu0 %v1353, 123
      %v1362 = vpop.permute.xlu0 %1361
      %v1366 = vadd.f32 %v1346, %v1358
      %v1367 = vadd.f32 %v1347, %v1360
      %v1368 = vadd.f32 %v1348, %v1362
      %s1369 = sld [smem:[#allocation6 + $0x3d]]
      %v1370 = vstv %s1369
      %v1371 = vmul.f32 %v993, %v1370
      %v1372 = vmul.f32 %v994, %v1370
      %v1373 = vmul.f32 %v995, %v1370
      %1377 = vrot.lane.b32.xlu0 %v1371, 123
      %v1378 = vpop.permute.xlu0 %1377
      %1379 = vrot.lane.b32.xlu0 %v1372, 123
      %v1380 = vpop.permute.xlu0 %1379
      %1381 = vrot.lane.b32.xlu0 %v1373, 123
      %v1382 = vpop.permute.xlu0 %1381
      %v1386 = vadd.f32 %v1366, %v1378
      %v1387 = vadd.f32 %v1367, %v1380
      %v1388 = vadd.f32 %v1368, %v1382
      %s1389 = sld [smem:[#allocation6 + $0xd]]
      %v1390 = vstv %s1389
      %v1391 = vmul.f32 %v990, %v1390
      %v1392 = vmul.f32 %v991, %v1390
      %v1393 = vmul.f32 %v992, %v1390
      %1397 = vrot.lane.b32.xlu0 %v1391, 122
      %v1398 = vpop.permute.xlu0 %1397
      %1399 = vrot.lane.b32.xlu0 %v1392, 122
      %v1400 = vpop.permute.xlu0 %1399
      %1401 = vrot.lane.b32.xlu0 %v1393, 122
      %v1402 = vpop.permute.xlu0 %1401
      %v1406 = vadd.f32 %v1386, %v1398
      %v1407 = vadd.f32 %v1387, %v1400
      %v1408 = vadd.f32 %v1388, %v1402
      %s1409 = sld [smem:[#allocation6 + $0x3e]]
      %v1410 = vstv %s1409
      %v1411 = vmul.f32 %v993, %v1410
      %v1412 = vmul.f32 %v994, %v1410
      %v1413 = vmul.f32 %v995, %v1410
      %1417 = vrot.lane.b32.xlu0 %v1411, 122
      %v1418 = vpop.permute.xlu0 %1417
      %1419 = vrot.lane.b32.xlu0 %v1412, 122
      %v1420 = vpop.permute.xlu0 %1419
      %1421 = vrot.lane.b32.xlu0 %v1413, 122
      %v1422 = vpop.permute.xlu0 %1421
      %v1426 = vadd.f32 %v1406, %v1418
      %v1427 = vadd.f32 %v1407, %v1420
      %v1428 = vadd.f32 %v1408, %v1422
      %vm1432 = vcmask 1046528
      %v1433 = vrot.slane %v1426, 1
      %v1434 = vrot.slane %v1427, 1
      %v1435 = vsel %vm1432, %v1433, %v1434
      %v1436 = vrot.slane %v1428, 1
      %v1437 = vsel %vm1432, %v1434, %v1436
      %v1440 = vadd.f32 %v1174, %v1435
      %v1441 = vadd.f32 %v1175, %v1437
      %s1442 = sld [smem:[#allocation6 + $0xe]]
      %v1443 = vstv %s1442
      %v1444 = vmul.f32 %v990, %v1443
      %v1445 = vmul.f32 %v991, %v1443
      %v1446 = vmul.f32 %v992, %v1443
      %s1447 = sld [smem:[#allocation6 + $0x3f]]
      %v1448 = vstv %s1447
      %v1449 = vmul.f32 %v993, %v1448
      %v1450 = vmul.f32 %v994, %v1448
      %v1451 = vmul.f32 %v995, %v1448
      %v1452 = vadd.f32 %v1444, %v1449
      %v1453 = vadd.f32 %v1445, %v1450
      %v1454 = vadd.f32 %v1446, %v1451
      %s1455 = sld [smem:[#allocation6 + $0xf]]
      %v1456 = vstv %s1455
      %v1457 = vmul.f32 %v990, %v1456
      %v1458 = vmul.f32 %v991, %v1456
      %v1459 = vmul.f32 %v992, %v1456
      %1463 = vrot.lane.b32.xlu0 %v1457, 127
      %v1464 = vpop.permute.xlu0 %1463
      %1465 = vrot.lane.b32.xlu0 %v1458, 127
      %v1466 = vpop.permute.xlu0 %1465
      %1467 = vrot.lane.b32.xlu0 %v1459, 127
      %v1468 = vpop.permute.xlu0 %1467
      %v1472 = vadd.f32 %v1452, %v1464
      %v1473 = vadd.f32 %v1453, %v1466
      %v1474 = vadd.f32 %v1454, %v1468
      %s1475 = sld [smem:[#allocation6 + $0x40]]
      %v1476 = vstv %s1475
      %v1477 = vmul.f32 %v993, %v1476
      %v1478 = vmul.f32 %v994, %v1476
      %v1479 = vmul.f32 %v995, %v1476
      %1483 = vrot.lane.b32.xlu0 %v1477, 127
      %v1484 = vpop.permute.xlu0 %1483
      %1485 = vrot.lane.b32.xlu0 %v1478, 127
      %v1486 = vpop.permute.xlu0 %1485
      %1487 = vrot.lane.b32.xlu0 %v1479, 127
      %v1488 = vpop.permute.xlu0 %1487
      %v1492 = vadd.f32 %v1472, %v1484
      %v1493 = vadd.f32 %v1473, %v1486
      %v1494 = vadd.f32 %v1474, %v1488
      %s1495 = sld [smem:[#allocation6 + $0x10]]
      %v1496 = vstv %s1495
      %v1497 = vmul.f32 %v990, %v1496
      %v1498 = vmul.f32 %v991, %v1496
      %v1499 = vmul.f32 %v992, %v1496
      %1503 = vrot.lane.b32.xlu0 %v1497, 126
      %v1504 = vpop.permute.xlu0 %1503
      %1505 = vrot.lane.b32.xlu0 %v1498, 126
      %v1506 = vpop.permute.xlu0 %1505
      %1507 = vrot.lane.b32.xlu0 %v1499, 126
      %v1508 = vpop.permute.xlu0 %1507
      %v1512 = vadd.f32 %v1492, %v1504
      %v1513 = vadd.f32 %v1493, %v1506
      %v1514 = vadd.f32 %v1494, %v1508
      %s1515 = sld [smem:[#allocation6 + $0x41]]
      %v1516 = vstv %s1515
      %v1517 = vmul.f32 %v993, %v1516
      %v1518 = vmul.f32 %v994, %v1516
      %v1519 = vmul.f32 %v995, %v1516
      %1523 = vrot.lane.b32.xlu0 %v1517, 126
      %v1524 = vpop.permute.xlu0 %1523
      %1525 = vrot.lane.b32.xlu0 %v1518, 126
      %v1526 = vpop.permute.xlu0 %1525
      %1527 = vrot.lane.b32.xlu0 %v1519, 126
      %v1528 = vpop.permute.xlu0 %1527
      %v1532 = vadd.f32 %v1512, %v1524
      %v1533 = vadd.f32 %v1513, %v1526
      %v1534 = vadd.f32 %v1514, %v1528
      %s1535 = sld [smem:[#allocation6 + $0x11]]
      %v1536 = vstv %s1535
      %v1537 = vmul.f32 %v990, %v1536
      %v1538 = vmul.f32 %v991, %v1536
      %v1539 = vmul.f32 %v992, %v1536
      %1543 = vrot.lane.b32.xlu0 %v1537, 125
      %v1544 = vpop.permute.xlu0 %1543
      %1545 = vrot.lane.b32.xlu0 %v1538, 125
      %v1546 = vpop.permute.xlu0 %1545
      %1547 = vrot.lane.b32.xlu0 %v1539, 125
      %v1548 = vpop.permute.xlu0 %1547
      %v1552 = vadd.f32 %v1532, %v1544
      %v1553 = vadd.f32 %v1533, %v1546
      %v1554 = vadd.f32 %v1534, %v1548
      %s1555 = sld [smem:[#allocation6 + $0x42]]
      %v1556 = vstv %s1555
      %v1557 = vmul.f32 %v993, %v1556
      %v1558 = vmul.f32 %v994, %v1556
      %v1559 = vmul.f32 %v995, %v1556
      %1563 = vrot.lane.b32.xlu0 %v1557, 125
      %v1564 = vpop.permute.xlu0 %1563
      %1565 = vrot.lane.b32.xlu0 %v1558, 125
      %v1566 = vpop.permute.xlu0 %1565
      %1567 = vrot.lane.b32.xlu0 %v1559, 125
      %v1568 = vpop.permute.xlu0 %1567
      %v1572 = vadd.f32 %v1552, %v1564
      %v1573 = vadd.f32 %v1553, %v1566
      %v1574 = vadd.f32 %v1554, %v1568
      %s1575 = sld [smem:[#allocation6 + $0x12]]
      %v1576 = vstv %s1575
      %v1577 = vmul.f32 %v990, %v1576
      %v1578 = vmul.f32 %v991, %v1576
      %v1579 = vmul.f32 %v992, %v1576
      %1583 = vrot.lane.b32.xlu0 %v1577, 124
      %v1584 = vpop.permute.xlu0 %1583
      %1585 = vrot.lane.b32.xlu0 %v1578, 124
      %v1586 = vpop.permute.xlu0 %1585
      %1587 = vrot.lane.b32.xlu0 %v1579, 124
      %v1588 = vpop.permute.xlu0 %1587
      %v1592 = vadd.f32 %v1572, %v1584
      %v1593 = vadd.f32 %v1573, %v1586
      %v1594 = vadd.f32 %v1574, %v1588
      %s1595 = sld [smem:[#allocation6 + $0x43]]
      %v1596 = vstv %s1595
      %v1597 = vmul.f32 %v993, %v1596
      %v1598 = vmul.f32 %v994, %v1596
      %v1599 = vmul.f32 %v995, %v1596
      %1603 = vrot.lane.b32.xlu0 %v1597, 124
      %v1604 = vpop.permute.xlu0 %1603
      %1605 = vrot.lane.b32.xlu0 %v1598, 124
      %v1606 = vpop.permute.xlu0 %1605
      %1607 = vrot.lane.b32.xlu0 %v1599, 124
      %v1608 = vpop.permute.xlu0 %1607
      %v1612 = vadd.f32 %v1592, %v1604
      %v1613 = vadd.f32 %v1593, %v1606
      %v1614 = vadd.f32 %v1594, %v1608
      %s1615 = sld [smem:[#allocation6 + $0x13]]
      %v1616 = vstv %s1615
      %v1617 = vmul.f32 %v990, %v1616
      %v1618 = vmul.f32 %v991, %v1616
      %v1619 = vmul.f32 %v992, %v1616
      %1623 = vrot.lane.b32.xlu0 %v1617, 123
      %v1624 = vpop.permute.xlu0 %1623
      %1625 = vrot.lane.b32.xlu0 %v1618, 123
      %v1626 = vpop.permute.xlu0 %1625
      %1627 = vrot.lane.b32.xlu0 %v1619, 123
      %v1628 = vpop.permute.xlu0 %1627
      %v1632 = vadd.f32 %v1612, %v1624
      %v1633 = vadd.f32 %v1613, %v1626
      %v1634 = vadd.f32 %v1614, %v1628
      %s1635 = sld [smem:[#allocation6 + $0x44]]
      %v1636 = vstv %s1635
      %v1637 = vmul.f32 %v993, %v1636
      %v1638 = vmul.f32 %v994, %v1636
      %v1639 = vmul.f32 %v995, %v1636
      %1643 = vrot.lane.b32.xlu0 %v1637, 123
      %v1644 = vpop.permute.xlu0 %1643
      %1645 = vrot.lane.b32.xlu0 %v1638, 123
      %v1646 = vpop.permute.xlu0 %1645
      %1647 = vrot.lane.b32.xlu0 %v1639, 123
      %v1648 = vpop.permute.xlu0 %1647
      %v1652 = vadd.f32 %v1632, %v1644
      %v1653 = vadd.f32 %v1633, %v1646
      %v1654 = vadd.f32 %v1634, %v1648
      %s1655 = sld [smem:[#allocation6 + $0x14]]
      %v1656 = vstv %s1655
      %v1657 = vmul.f32 %v990, %v1656
      %v1658 = vmul.f32 %v991, %v1656
      %v1659 = vmul.f32 %v992, %v1656
      %1663 = vrot.lane.b32.xlu0 %v1657, 122
      %v1664 = vpop.permute.xlu0 %1663
      %1665 = vrot.lane.b32.xlu0 %v1658, 122
      %v1666 = vpop.permute.xlu0 %1665
      %1667 = vrot.lane.b32.xlu0 %v1659, 122
      %v1668 = vpop.permute.xlu0 %1667
      %v1672 = vadd.f32 %v1652, %v1664
      %v1673 = vadd.f32 %v1653, %v1666
      %v1674 = vadd.f32 %v1654, %v1668
      %s1675 = sld [smem:[#allocation6 + $0x45]]
      %v1676 = vstv %s1675
      %v1677 = vmul.f32 %v993, %v1676
      %v1678 = vmul.f32 %v994, %v1676
      %v1679 = vmul.f32 %v995, %v1676
      %1683 = vrot.lane.b32.xlu0 %v1677, 122
      %v1684 = vpop.permute.xlu0 %1683
      %1685 = vrot.lane.b32.xlu0 %v1678, 122
      %v1686 = vpop.permute.xlu0 %1685
      %1687 = vrot.lane.b32.xlu0 %v1679, 122
      %v1688 = vpop.permute.xlu0 %1687
      %v1692 = vadd.f32 %v1672, %v1684
      %v1693 = vadd.f32 %v1673, %v1686
      %v1694 = vadd.f32 %v1674, %v1688
      %vm1698 = vcmask 1045504
      %v1699 = vrot.slane %v1692, 2
      %v1700 = vrot.slane %v1693, 2
      %v1701 = vsel %vm1698, %v1699, %v1700
      %v1702 = vrot.slane %v1694, 2
      %v1703 = vsel %vm1698, %v1700, %v1702
      %v1706 = vadd.f32 %v1440, %v1701
      %v1707 = vadd.f32 %v1441, %v1703
      %s1708 = sld [smem:[#allocation6 + $0x15]]
      %v1709 = vstv %s1708
      %v1710 = vmul.f32 %v990, %v1709
      %v1711 = vmul.f32 %v991, %v1709
      %v1712 = vmul.f32 %v992, %v1709
      %s1713 = sld [smem:[#allocation6 + $0x46]]
      %v1714 = vstv %s1713
      %v1715 = vmul.f32 %v993, %v1714
      %v1716 = vmul.f32 %v994, %v1714
      %v1717 = vmul.f32 %v995, %v1714
      %v1718 = vadd.f32 %v1710, %v1715
      %v1719 = vadd.f32 %v1711, %v1716
      %v1720 = vadd.f32 %v1712, %v1717
      %s1721 = sld [smem:[#allocation6 + $0x16]]
      %v1722 = vstv %s1721
      %v1723 = vmul.f32 %v990, %v1722
      %v1724 = vmul.f32 %v991, %v1722
      %v1725 = vmul.f32 %v992, %v1722
      %1729 = vrot.lane.b32.xlu0 %v1723, 127
      %v1730 = vpop.permute.xlu0 %1729
      %1731 = vrot.lane.b32.xlu0 %v1724, 127
      %v1732 = vpop.permute.xlu0 %1731
      %1733 = vrot.lane.b32.xlu0 %v1725, 127
      %v1734 = vpop.permute.xlu0 %1733
      %v1738 = vadd.f32 %v1718, %v1730
      %v1739 = vadd.f32 %v1719, %v1732
      %v1740 = vadd.f32 %v1720, %v1734
      %s1741 = sld [smem:[#allocation6 + $0x47]]
      %v1742 = vstv %s1741
      %v1743 = vmul.f32 %v993, %v1742
      %v1744 = vmul.f32 %v994, %v1742
      %v1745 = vmul.f32 %v995, %v1742
      %1749 = vrot.lane.b32.xlu0 %v1743, 127
      %v1750 = vpop.permute.xlu0 %1749
      %1751 = vrot.lane.b32.xlu0 %v1744, 127
      %v1752 = vpop.permute.xlu0 %1751
      %1753 = vrot.lane.b32.xlu0 %v1745, 127
      %v1754 = vpop.permute.xlu0 %1753
      %v1758 = vadd.f32 %v1738, %v1750
      %v1759 = vadd.f32 %v1739, %v1752
      %v1760 = vadd.f32 %v1740, %v1754
      %s1761 = sld [smem:[#allocation6 + $0x17]]
      %v1762 = vstv %s1761
      %v1763 = vmul.f32 %v990, %v1762
      %v1764 = vmul.f32 %v991, %v1762
      %v1765 = vmul.f32 %v992, %v1762
      %1769 = vrot.lane.b32.xlu0 %v1763, 126
      %v1770 = vpop.permute.xlu0 %1769
      %1771 = vrot.lane.b32.xlu0 %v1764, 126
      %v1772 = vpop.permute.xlu0 %1771
      %1773 = vrot.lane.b32.xlu0 %v1765, 126
      %v1774 = vpop.permute.xlu0 %1773
      %v1778 = vadd.f32 %v1758, %v1770
      %v1779 = vadd.f32 %v1759, %v1772
      %v1780 = vadd.f32 %v1760, %v1774
      %s1781 = sld [smem:[#allocation6 + $0x48]]
      %v1782 = vstv %s1781
      %v1783 = vmul.f32 %v993, %v1782
      %v1784 = vmul.f32 %v994, %v1782
      %v1785 = vmul.f32 %v995, %v1782
      %1789 = vrot.lane.b32.xlu0 %v1783, 126
      %v1790 = vpop.permute.xlu0 %1789
      %1791 = vrot.lane.b32.xlu0 %v1784, 126
      %v1792 = vpop.permute.xlu0 %1791
      %1793 = vrot.lane.b32.xlu0 %v1785, 126
      %v1794 = vpop.permute.xlu0 %1793
      %v1798 = vadd.f32 %v1778, %v1790
      %v1799 = vadd.f32 %v1779, %v1792
      %v1800 = vadd.f32 %v1780, %v1794
      %s1801 = sld [smem:[#allocation6 + $0x18]]
      %v1802 = vstv %s1801
      %v1803 = vmul.f32 %v990, %v1802
      %v1804 = vmul.f32 %v991, %v1802
      %v1805 = vmul.f32 %v992, %v1802
      %1809 = vrot.lane.b32.xlu0 %v1803, 125
      %v1810 = vpop.permute.xlu0 %1809
      %1811 = vrot.lane.b32.xlu0 %v1804, 125
      %v1812 = vpop.permute.xlu0 %1811
      %1813 = vrot.lane.b32.xlu0 %v1805, 125
      %v1814 = vpop.permute.xlu0 %1813
      %v1818 = vadd.f32 %v1798, %v1810
      %v1819 = vadd.f32 %v1799, %v1812
      %v1820 = vadd.f32 %v1800, %v1814
      %s1821 = sld [smem:[#allocation6 + $0x49]]
      %v1822 = vstv %s1821
      %v1823 = vmul.f32 %v993, %v1822
      %v1824 = vmul.f32 %v994, %v1822
      %v1825 = vmul.f32 %v995, %v1822
      %1829 = vrot.lane.b32.xlu0 %v1823, 125
      %v1830 = vpop.permute.xlu0 %1829
      %1831 = vrot.lane.b32.xlu0 %v1824, 125
      %v1832 = vpop.permute.xlu0 %1831
      %1833 = vrot.lane.b32.xlu0 %v1825, 125
      %v1834 = vpop.permute.xlu0 %1833
      %v1838 = vadd.f32 %v1818, %v1830
      %v1839 = vadd.f32 %v1819, %v1832
      %v1840 = vadd.f32 %v1820, %v1834
      %s1841 = sld [smem:[#allocation6 + $0x19]]
      %v1842 = vstv %s1841
      %v1843 = vmul.f32 %v990, %v1842
      %v1844 = vmul.f32 %v991, %v1842
      %v1845 = vmul.f32 %v992, %v1842
      %1849 = vrot.lane.b32.xlu0 %v1843, 124
      %v1850 = vpop.permute.xlu0 %1849
      %1851 = vrot.lane.b32.xlu0 %v1844, 124
      %v1852 = vpop.permute.xlu0 %1851
      %1853 = vrot.lane.b32.xlu0 %v1845, 124
      %v1854 = vpop.permute.xlu0 %1853
      %v1858 = vadd.f32 %v1838, %v1850
      %v1859 = vadd.f32 %v1839, %v1852
      %v1860 = vadd.f32 %v1840, %v1854
      %s1861 = sld [smem:[#allocation6 + $0x4a]]
      %v1862 = vstv %s1861
      %v1863 = vmul.f32 %v993, %v1862
      %v1864 = vmul.f32 %v994, %v1862
      %v1865 = vmul.f32 %v995, %v1862
      %1869 = vrot.lane.b32.xlu0 %v1863, 124
      %v1870 = vpop.permute.xlu0 %1869
      %1871 = vrot.lane.b32.xlu0 %v1864, 124
      %v1872 = vpop.permute.xlu0 %1871
      %1873 = vrot.lane.b32.xlu0 %v1865, 124
      %v1874 = vpop.permute.xlu0 %1873
      %v1878 = vadd.f32 %v1858, %v1870
      %v1879 = vadd.f32 %v1859, %v1872
      %v1880 = vadd.f32 %v1860, %v1874
      %s1881 = sld [smem:[#allocation6 + $0x1a]]
      %v1882 = vstv %s1881
      %v1883 = vmul.f32 %v990, %v1882
      %v1884 = vmul.f32 %v991, %v1882
      %v1885 = vmul.f32 %v992, %v1882
      %1889 = vrot.lane.b32.xlu0 %v1883, 123
      %v1890 = vpop.permute.xlu0 %1889
      %1891 = vrot.lane.b32.xlu0 %v1884, 123
      %v1892 = vpop.permute.xlu0 %1891
      %1893 = vrot.lane.b32.xlu0 %v1885, 123
      %v1894 = vpop.permute.xlu0 %1893
      %v1898 = vadd.f32 %v1878, %v1890
      %v1899 = vadd.f32 %v1879, %v1892
      %v1900 = vadd.f32 %v1880, %v1894
      %s1901 = sld [smem:[#allocation6 + $0x4b]]
      %v1902 = vstv %s1901
      %v1903 = vmul.f32 %v993, %v1902
      %v1904 = vmul.f32 %v994, %v1902
      %v1905 = vmul.f32 %v995, %v1902
      %1909 = vrot.lane.b32.xlu0 %v1903, 123
      %v1910 = vpop.permute.xlu0 %1909
      %1911 = vrot.lane.b32.xlu0 %v1904, 123
      %v1912 = vpop.permute.xlu0 %1911
      %1913 = vrot.lane.b32.xlu0 %v1905, 123
      %v1914 = vpop.permute.xlu0 %1913
      %v1918 = vadd.f32 %v1898, %v1910
      %v1919 = vadd.f32 %v1899, %v1912
      %v1920 = vadd.f32 %v1900, %v1914
      %s1921 = sld [smem:[#allocation6 + $0x1b]]
      %v1922 = vstv %s1921
      %v1923 = vmul.f32 %v990, %v1922
      %v1924 = vmul.f32 %v991, %v1922
      %v1925 = vmul.f32 %v992, %v1922
      %1929 = vrot.lane.b32.xlu0 %v1923, 122
      %v1930 = vpop.permute.xlu0 %1929
      %1931 = vrot.lane.b32.xlu0 %v1924, 122
      %v1932 = vpop.permute.xlu0 %1931
      %1933 = vrot.lane.b32.xlu0 %v1925, 122
      %v1934 = vpop.permute.xlu0 %1933
      %v1938 = vadd.f32 %v1918, %v1930
      %v1939 = vadd.f32 %v1919, %v1932
      %v1940 = vadd.f32 %v1920, %v1934
      %s1941 = sld [smem:[#allocation6 + $0x4c]]
      %v1942 = vstv %s1941
      %v1943 = vmul.f32 %v993, %v1942
      %v1944 = vmul.f32 %v994, %v1942
      %v1945 = vmul.f32 %v995, %v1942
      %1949 = vrot.lane.b32.xlu0 %v1943, 122
      %v1950 = vpop.permute.xlu0 %1949
      %1951 = vrot.lane.b32.xlu0 %v1944, 122
      %v1952 = vpop.permute.xlu0 %1951
      %1953 = vrot.lane.b32.xlu0 %v1945, 122
      %v1954 = vpop.permute.xlu0 %1953
      %v1958 = vadd.f32 %v1938, %v1950
      %v1959 = vadd.f32 %v1939, %v1952
      %v1960 = vadd.f32 %v1940, %v1954
      %vm1964 = vcmask 1044480
      %v1965 = vrot.slane %v1958, 3
      %v1966 = vrot.slane %v1959, 3
      %v1967 = vsel %vm1964, %v1965, %v1966
      %v1968 = vrot.slane %v1960, 3
      %v1969 = vsel %vm1964, %v1966, %v1968
      %v1972 = vadd.f32 %v1706, %v1967
      %v1973 = vadd.f32 %v1707, %v1969
      %s1974 = sld [smem:[#allocation6 + $0x1c]]
      %v1975 = vstv %s1974
      %v1976 = vmul.f32 %v990, %v1975
      %v1977 = vmul.f32 %v991, %v1975
      %v1978 = vmul.f32 %v992, %v1975
      %s1979 = sld [smem:[#allocation6 + $0x4d]]
      %v1980 = vstv %s1979
      %v1981 = vmul.f32 %v993, %v1980
      %v1982 = vmul.f32 %v994, %v1980
      %v1983 = vmul.f32 %v995, %v1980
      %v1984 = vadd.f32 %v1976, %v1981
      %v1985 = vadd.f32 %v1977, %v1982
      %v1986 = vadd.f32 %v1978, %v1983
      %s1987 = sld [smem:[#allocation6 + $0x1d]]
      %v1988 = vstv %s1987
      %v1989 = vmul.f32 %v990, %v1988
      %v1990 = vmul.f32 %v991, %v1988
      %v1991 = vmul.f32 %v992, %v1988
      %1995 = vrot.lane.b32.xlu0 %v1989, 127
      %v1996 = vpop.permute.xlu0 %1995
      %1997 = vrot.lane.b32.xlu0 %v1990, 127
      %v1998 = vpop.permute.xlu0 %1997
      %1999 = vrot.lane.b32.xlu0 %v1991, 127
      %v2000 = vpop.permute.xlu0 %1999
      %v2004 = vadd.f32 %v1984, %v1996
      %v2005 = vadd.f32 %v1985, %v1998
      %v2006 = vadd.f32 %v1986, %v2000
      %s2007 = sld [smem:[#allocation6 + $0x4e]]
      %v2008 = vstv %s2007
      %v2009 = vmul.f32 %v993, %v2008
      %v2010 = vmul.f32 %v994, %v2008
      %v2011 = vmul.f32 %v995, %v2008
      %2015 = vrot.lane.b32.xlu0 %v2009, 127
      %v2016 = vpop.permute.xlu0 %2015
      %2017 = vrot.lane.b32.xlu0 %v2010, 127
      %v2018 = vpop.permute.xlu0 %2017
      %2019 = vrot.lane.b32.xlu0 %v2011, 127
      %v2020 = vpop.permute.xlu0 %2019
      %v2024 = vadd.f32 %v2004, %v2016
      %v2025 = vadd.f32 %v2005, %v2018
      %v2026 = vadd.f32 %v2006, %v2020
      %s2027 = sld [smem:[#allocation6 + $0x1e]]
      %v2028 = vstv %s2027
      %v2029 = vmul.f32 %v990, %v2028
      %v2030 = vmul.f32 %v991, %v2028
      %v2031 = vmul.f32 %v992, %v2028
      %2035 = vrot.lane.b32.xlu0 %v2029, 126
      %v2036 = vpop.permute.xlu0 %2035
      %2037 = vrot.lane.b32.xlu0 %v2030, 126
      %v2038 = vpop.permute.xlu0 %2037
      %2039 = vrot.lane.b32.xlu0 %v2031, 126
      %v2040 = vpop.permute.xlu0 %2039
      %v2044 = vadd.f32 %v2024, %v2036
      %v2045 = vadd.f32 %v2025, %v2038
      %v2046 = vadd.f32 %v2026, %v2040
      %s2047 = sld [smem:[#allocation6 + $0x4f]]
      %v2048 = vstv %s2047
      %v2049 = vmul.f32 %v993, %v2048
      %v2050 = vmul.f32 %v994, %v2048
      %v2051 = vmul.f32 %v995, %v2048
      %2055 = vrot.lane.b32.xlu0 %v2049, 126
      %v2056 = vpop.permute.xlu0 %2055
      %2057 = vrot.lane.b32.xlu0 %v2050, 126
      %v2058 = vpop.permute.xlu0 %2057
      %2059 = vrot.lane.b32.xlu0 %v2051, 126
      %v2060 = vpop.permute.xlu0 %2059
      %v2064 = vadd.f32 %v2044, %v2056
      %v2065 = vadd.f32 %v2045, %v2058
      %v2066 = vadd.f32 %v2046, %v2060
      %s2067 = sld [smem:[#allocation6 + $0x1f]]
      %v2068 = vstv %s2067
      %v2069 = vmul.f32 %v990, %v2068
      %v2070 = vmul.f32 %v991, %v2068
      %v2071 = vmul.f32 %v992, %v2068
      %2075 = vrot.lane.b32.xlu0 %v2069, 125
      %v2076 = vpop.permute.xlu0 %2075
      %2077 = vrot.lane.b32.xlu0 %v2070, 125
      %v2078 = vpop.permute.xlu0 %2077
      %2079 = vrot.lane.b32.xlu0 %v2071, 125
      %v2080 = vpop.permute.xlu0 %2079
      %v2084 = vadd.f32 %v2064, %v2076
      %v2085 = vadd.f32 %v2065, %v2078
      %v2086 = vadd.f32 %v2066, %v2080
      %s2087 = sld [smem:[#allocation6 + $0x50]]
      %v2088 = vstv %s2087
      %v2089 = vmul.f32 %v993, %v2088
      %v2090 = vmul.f32 %v994, %v2088
      %v2091 = vmul.f32 %v995, %v2088
      %2095 = vrot.lane.b32.xlu0 %v2089, 125
      %v2096 = vpop.permute.xlu0 %2095
      %2097 = vrot.lane.b32.xlu0 %v2090, 125
      %v2098 = vpop.permute.xlu0 %2097
      %2099 = vrot.lane.b32.xlu0 %v2091, 125
      %v2100 = vpop.permute.xlu0 %2099
      %v2104 = vadd.f32 %v2084, %v2096
      %v2105 = vadd.f32 %v2085, %v2098
      %v2106 = vadd.f32 %v2086, %v2100
      %s2107 = sld [smem:[#allocation6 + $0x20]]
      %v2108 = vstv %s2107
      %v2109 = vmul.f32 %v990, %v2108
      %v2110 = vmul.f32 %v991, %v2108
      %v2111 = vmul.f32 %v992, %v2108
      %2115 = vrot.lane.b32.xlu0 %v2109, 124
      %v2116 = vpop.permute.xlu0 %2115
      %2117 = vrot.lane.b32.xlu0 %v2110, 124
      %v2118 = vpop.permute.xlu0 %2117
      %2119 = vrot.lane.b32.xlu0 %v2111, 124
      %v2120 = vpop.permute.xlu0 %2119
      %v2124 = vadd.f32 %v2104, %v2116
      %v2125 = vadd.f32 %v2105, %v2118
      %v2126 = vadd.f32 %v2106, %v2120
      %s2127 = sld [smem:[#allocation6 + $0x51]]
      %v2128 = vstv %s2127
      %v2129 = vmul.f32 %v993, %v2128
      %v2130 = vmul.f32 %v994, %v2128
      %v2131 = vmul.f32 %v995, %v2128
      %2135 = vrot.lane.b32.xlu0 %v2129, 124
      %v2136 = vpop.permute.xlu0 %2135
      %2137 = vrot.lane.b32.xlu0 %v2130, 124
      %v2138 = vpop.permute.xlu0 %2137
      %2139 = vrot.lane.b32.xlu0 %v2131, 124
      %v2140 = vpop.permute.xlu0 %2139
      %v2144 = vadd.f32 %v2124, %v2136
      %v2145 = vadd.f32 %v2125, %v2138
      %v2146 = vadd.f32 %v2126, %v2140
      %s2147 = sld [smem:[#allocation6 + $0x21]]
      %v2148 = vstv %s2147
      %v2149 = vmul.f32 %v990, %v2148
      %v2150 = vmul.f32 %v991, %v2148
      %v2151 = vmul.f32 %v992, %v2148
      %2155 = vrot.lane.b32.xlu0 %v2149, 123
      %v2156 = vpop.permute.xlu0 %2155
      %2157 = vrot.lane.b32.xlu0 %v2150, 123
      %v2158 = vpop.permute.xlu0 %2157
      %2159 = vrot.lane.b32.xlu0 %v2151, 123
      %v2160 = vpop.permute.xlu0 %2159
      %v2164 = vadd.f32 %v2144, %v2156
      %v2165 = vadd.f32 %v2145, %v2158
      %v2166 = vadd.f32 %v2146, %v2160
      %s2167 = sld [smem:[#allocation6 + $0x52]]
      %v2168 = vstv %s2167
      %v2169 = vmul.f32 %v993, %v2168
      %v2170 = vmul.f32 %v994, %v2168
      %v2171 = vmul.f32 %v995, %v2168
      %2175 = vrot.lane.b32.xlu0 %v2169, 123
      %v2176 = vpop.permute.xlu0 %2175
      %2177 = vrot.lane.b32.xlu0 %v2170, 123
      %v2178 = vpop.permute.xlu0 %2177
      %2179 = vrot.lane.b32.xlu0 %v2171, 123
      %v2180 = vpop.permute.xlu0 %2179
      %v2184 = vadd.f32 %v2164, %v2176
      %v2185 = vadd.f32 %v2165, %v2178
      %v2186 = vadd.f32 %v2166, %v2180
      %s2187 = sld [smem:[#allocation6 + $0x22]]
      %v2188 = vstv %s2187
      %v2189 = vmul.f32 %v990, %v2188
      %v2190 = vmul.f32 %v991, %v2188
      %v2191 = vmul.f32 %v992, %v2188
      %2195 = vrot.lane.b32.xlu0 %v2189, 122
      %v2196 = vpop.permute.xlu0 %2195
      %2197 = vrot.lane.b32.xlu0 %v2190, 122
      %v2198 = vpop.permute.xlu0 %2197
      %2199 = vrot.lane.b32.xlu0 %v2191, 122
      %v2200 = vpop.permute.xlu0 %2199
      %v2204 = vadd.f32 %v2184, %v2196
      %v2205 = vadd.f32 %v2185, %v2198
      %v2206 = vadd.f32 %v2186, %v2200
      %s2207 = sld [smem:[#allocation6 + $0x53]]
      %v2208 = vstv %s2207
      %v2209 = vmul.f32 %v993, %v2208
      %v2210 = vmul.f32 %v994, %v2208
      %v2211 = vmul.f32 %v995, %v2208
      %2215 = vrot.lane.b32.xlu0 %v2209, 122
      %v2216 = vpop.permute.xlu0 %2215
      %2217 = vrot.lane.b32.xlu0 %v2210, 122
      %v2218 = vpop.permute.xlu0 %2217
      %2219 = vrot.lane.b32.xlu0 %v2211, 122
      %v2220 = vpop.permute.xlu0 %2219
      %v2224 = vadd.f32 %v2204, %v2216
      %v2225 = vadd.f32 %v2205, %v2218
      %v2226 = vadd.f32 %v2206, %v2220
      %vm2230 = vcmask 1043456
      %v2231 = vrot.slane %v2224, 4
      %v2232 = vrot.slane %v2225, 4
      %v2233 = vsel %vm2230, %v2231, %v2232
      %v2234 = vrot.slane %v2226, 4
      %v2235 = vsel %vm2230, %v2232, %v2234
      %v2238 = vadd.f32 %v1972, %v2233
      %v2239 = vadd.f32 %v1973, %v2235
      %s2240 = sld [smem:[#allocation6 + $0x23]]
      %v2241 = vstv %s2240
      %v2242 = vmul.f32 %v990, %v2241
      %v2243 = vmul.f32 %v991, %v2241
      %v2244 = vmul.f32 %v992, %v2241
      %s2245 = sld [smem:[#allocation6 + $0x54]]
      %v2246 = vstv %s2245
      %v2247 = vmul.f32 %v993, %v2246
      %v2248 = vmul.f32 %v994, %v2246
      %v2249 = vmul.f32 %v995, %v2246
      %v2250 = vadd.f32 %v2242, %v2247
      %v2251 = vadd.f32 %v2243, %v2248
      %v2252 = vadd.f32 %v2244, %v2249
      %s2253 = sld [smem:[#allocation6 + $0x24]]
      %v2254 = vstv %s2253
      %v2255 = vmul.f32 %v990, %v2254
      %v2256 = vmul.f32 %v991, %v2254
      %v2257 = vmul.f32 %v992, %v2254
      %2261 = vrot.lane.b32.xlu0 %v2255, 127
      %v2262 = vpop.permute.xlu0 %2261
      %2263 = vrot.lane.b32.xlu0 %v2256, 127
      %v2264 = vpop.permute.xlu0 %2263
      %2265 = vrot.lane.b32.xlu0 %v2257, 127
      %v2266 = vpop.permute.xlu0 %2265
      %v2270 = vadd.f32 %v2250, %v2262
      %v2271 = vadd.f32 %v2251, %v2264
      %v2272 = vadd.f32 %v2252, %v2266
      %s2273 = sld [smem:[#allocation6 + $0x55]]
      %v2274 = vstv %s2273
      %v2275 = vmul.f32 %v993, %v2274
      %v2276 = vmul.f32 %v994, %v2274
      %v2277 = vmul.f32 %v995, %v2274
      %2281 = vrot.lane.b32.xlu0 %v2275, 127
      %v2282 = vpop.permute.xlu0 %2281
      %2283 = vrot.lane.b32.xlu0 %v2276, 127
      %v2284 = vpop.permute.xlu0 %2283
      %2285 = vrot.lane.b32.xlu0 %v2277, 127
      %v2286 = vpop.permute.xlu0 %2285
      %v2290 = vadd.f32 %v2270, %v2282
      %v2291 = vadd.f32 %v2271, %v2284
      %v2292 = vadd.f32 %v2272, %v2286
      %s2293 = sld [smem:[#allocation6 + $0x25]]
      %v2294 = vstv %s2293
      %v2295 = vmul.f32 %v990, %v2294
      %v2296 = vmul.f32 %v991, %v2294
      %v2297 = vmul.f32 %v992, %v2294
      %2301 = vrot.lane.b32.xlu0 %v2295, 126
      %v2302 = vpop.permute.xlu0 %2301
      %2303 = vrot.lane.b32.xlu0 %v2296, 126
      %v2304 = vpop.permute.xlu0 %2303
      %2305 = vrot.lane.b32.xlu0 %v2297, 126
      %v2306 = vpop.permute.xlu0 %2305
      %v2310 = vadd.f32 %v2290, %v2302
      %v2311 = vadd.f32 %v2291, %v2304
      %v2312 = vadd.f32 %v2292, %v2306
      %s2313 = sld [smem:[#allocation6 + $0x56]]
      %v2314 = vstv %s2313
      %v2315 = vmul.f32 %v993, %v2314
      %v2316 = vmul.f32 %v994, %v2314
      %v2317 = vmul.f32 %v995, %v2314
      %2321 = vrot.lane.b32.xlu0 %v2315, 126
      %v2322 = vpop.permute.xlu0 %2321
      %2323 = vrot.lane.b32.xlu0 %v2316, 126
      %v2324 = vpop.permute.xlu0 %2323
      %2325 = vrot.lane.b32.xlu0 %v2317, 126
      %v2326 = vpop.permute.xlu0 %2325
      %v2330 = vadd.f32 %v2310, %v2322
      %v2331 = vadd.f32 %v2311, %v2324
      %v2332 = vadd.f32 %v2312, %v2326
      %s2333 = sld [smem:[#allocation6 + $0x26]]
      %v2334 = vstv %s2333
      %v2335 = vmul.f32 %v990, %v2334
      %v2336 = vmul.f32 %v991, %v2334
      %v2337 = vmul.f32 %v992, %v2334
      %2341 = vrot.lane.b32.xlu0 %v2335, 125
      %v2342 = vpop.permute.xlu0 %2341
      %2343 = vrot.lane.b32.xlu0 %v2336, 125
      %v2344 = vpop.permute.xlu0 %2343
      %2345 = vrot.lane.b32.xlu0 %v2337, 125
      %v2346 = vpop.permute.xlu0 %2345
      %v2350 = vadd.f32 %v2330, %v2342
      %v2351 = vadd.f32 %v2331, %v2344
      %v2352 = vadd.f32 %v2332, %v2346
      %s2353 = sld [smem:[#allocation6 + $0x57]]
      %v2354 = vstv %s2353
      %v2355 = vmul.f32 %v993, %v2354
      %v2356 = vmul.f32 %v994, %v2354
      %v2357 = vmul.f32 %v995, %v2354
      %2361 = vrot.lane.b32.xlu0 %v2355, 125
      %v2362 = vpop.permute.xlu0 %2361
      %2363 = vrot.lane.b32.xlu0 %v2356, 125
      %v2364 = vpop.permute.xlu0 %2363
      %2365 = vrot.lane.b32.xlu0 %v2357, 125
      %v2366 = vpop.permute.xlu0 %2365
      %v2370 = vadd.f32 %v2350, %v2362
      %v2371 = vadd.f32 %v2351, %v2364
      %v2372 = vadd.f32 %v2352, %v2366
      %s2373 = sld [smem:[#allocation6 + $0x27]]
      %v2374 = vstv %s2373
      %v2375 = vmul.f32 %v990, %v2374
      %v2376 = vmul.f32 %v991, %v2374
      %v2377 = vmul.f32 %v992, %v2374
      %2381 = vrot.lane.b32.xlu0 %v2375, 124
      %v2382 = vpop.permute.xlu0 %2381
      %2383 = vrot.lane.b32.xlu0 %v2376, 124
      %v2384 = vpop.permute.xlu0 %2383
      %2385 = vrot.lane.b32.xlu0 %v2377, 124
      %v2386 = vpop.permute.xlu0 %2385
      %v2390 = vadd.f32 %v2370, %v2382
      %v2391 = vadd.f32 %v2371, %v2384
      %v2392 = vadd.f32 %v2372, %v2386
      %s2393 = sld [smem:[#allocation6 + $0x58]]
      %v2394 = vstv %s2393
      %v2395 = vmul.f32 %v993, %v2394
      %v2396 = vmul.f32 %v994, %v2394
      %v2397 = vmul.f32 %v995, %v2394
      %2401 = vrot.lane.b32.xlu0 %v2395, 124
      %v2402 = vpop.permute.xlu0 %2401
      %2403 = vrot.lane.b32.xlu0 %v2396, 124
      %v2404 = vpop.permute.xlu0 %2403
      %2405 = vrot.lane.b32.xlu0 %v2397, 124
      %v2406 = vpop.permute.xlu0 %2405
      %v2410 = vadd.f32 %v2390, %v2402
      %v2411 = vadd.f32 %v2391, %v2404
      %v2412 = vadd.f32 %v2392, %v2406
      %s2413 = sld [smem:[#allocation6 + $0x28]]
      %v2414 = vstv %s2413
      %v2415 = vmul.f32 %v990, %v2414
      %v2416 = vmul.f32 %v991, %v2414
      %v2417 = vmul.f32 %v992, %v2414
      %2421 = vrot.lane.b32.xlu0 %v2415, 123
      %v2422 = vpop.permute.xlu0 %2421
      %2423 = vrot.lane.b32.xlu0 %v2416, 123
      %v2424 = vpop.permute.xlu0 %2423
      %2425 = vrot.lane.b32.xlu0 %v2417, 123
      %v2426 = vpop.permute.xlu0 %2425
      %v2430 = vadd.f32 %v2410, %v2422
      %v2431 = vadd.f32 %v2411, %v2424
      %v2432 = vadd.f32 %v2412, %v2426
      %s2433 = sld [smem:[#allocation6 + $0x59]]
      %v2434 = vstv %s2433
      %v2435 = vmul.f32 %v993, %v2434
      %v2436 = vmul.f32 %v994, %v2434
      %v2437 = vmul.f32 %v995, %v2434
      %2441 = vrot.lane.b32.xlu0 %v2435, 123
      %v2442 = vpop.permute.xlu0 %2441
      %2443 = vrot.lane.b32.xlu0 %v2436, 123
      %v2444 = vpop.permute.xlu0 %2443
      %2445 = vrot.lane.b32.xlu0 %v2437, 123
      %v2446 = vpop.permute.xlu0 %2445
      %v2450 = vadd.f32 %v2430, %v2442
      %v2451 = vadd.f32 %v2431, %v2444
      %v2452 = vadd.f32 %v2432, %v2446
      %s2453 = sld [smem:[#allocation6 + $0x29]]
      %v2454 = vstv %s2453
      %v2455 = vmul.f32 %v990, %v2454
      %v2456 = vmul.f32 %v991, %v2454
      %v2457 = vmul.f32 %v992, %v2454
      %2461 = vrot.lane.b32.xlu0 %v2455, 122
      %v2462 = vpop.permute.xlu0 %2461
      %2463 = vrot.lane.b32.xlu0 %v2456, 122
      %v2464 = vpop.permute.xlu0 %2463
      %2465 = vrot.lane.b32.xlu0 %v2457, 122
      %v2466 = vpop.permute.xlu0 %2465
      %v2470 = vadd.f32 %v2450, %v2462
      %v2471 = vadd.f32 %v2451, %v2464
      %v2472 = vadd.f32 %v2452, %v2466
      %s2473 = sld [smem:[#allocation6 + $0x5a]]
      %v2474 = vstv %s2473
      %v2475 = vmul.f32 %v993, %v2474
      %v2476 = vmul.f32 %v994, %v2474
      %v2477 = vmul.f32 %v995, %v2474
      %2481 = vrot.lane.b32.xlu0 %v2475, 122
      %v2482 = vpop.permute.xlu0 %2481
      %2483 = vrot.lane.b32.xlu0 %v2476, 122
      %v2484 = vpop.permute.xlu0 %2483
      %2485 = vrot.lane.b32.xlu0 %v2477, 122
      %v2486 = vpop.permute.xlu0 %2485
      %v2490 = vadd.f32 %v2470, %v2482
      %v2491 = vadd.f32 %v2471, %v2484
      %v2492 = vadd.f32 %v2472, %v2486
      %vm2496 = vcmask 1042432
      %v2497 = vrot.slane %v2490, 5
      %v2498 = vrot.slane %v2491, 5
      %v2499 = vsel %vm2496, %v2497, %v2498
      %v2500 = vrot.slane %v2492, 5
      %v2501 = vsel %vm2496, %v2498, %v2500
      %v2504 = vadd.f32 %v2238, %v2499
      %v2505 = vadd.f32 %v2239, %v2501
      %s2506 = sld [smem:[#allocation6 + $0x2a]]
      %v2507 = vstv %s2506
      %v2508 = vmul.f32 %v990, %v2507
      %v2509 = vmul.f32 %v991, %v2507
      %v2510 = vmul.f32 %v992, %v2507
      %s2511 = sld [smem:[#allocation6 + $0x5b]]
      %v2512 = vstv %s2511
      %v2513 = vmul.f32 %v993, %v2512
      %v2514 = vmul.f32 %v994, %v2512
      %v2515 = vmul.f32 %v995, %v2512
      %v2516 = vadd.f32 %v2508, %v2513
      %v2517 = vadd.f32 %v2509, %v2514
      %v2518 = vadd.f32 %v2510, %v2515
      %s2519 = sld [smem:[#allocation6 + $0x2b]]
      %v2520 = vstv %s2519
      %v2521 = vmul.f32 %v990, %v2520
      %v2522 = vmul.f32 %v991, %v2520
      %v2523 = vmul.f32 %v992, %v2520
      %2527 = vrot.lane.b32.xlu0 %v2521, 127
      %v2528 = vpop.permute.xlu0 %2527
      %2529 = vrot.lane.b32.xlu0 %v2522, 127
      %v2530 = vpop.permute.xlu0 %2529
      %2531 = vrot.lane.b32.xlu0 %v2523, 127
      %v2532 = vpop.permute.xlu0 %2531
      %v2536 = vadd.f32 %v2516, %v2528
      %v2537 = vadd.f32 %v2517, %v2530
      %v2538 = vadd.f32 %v2518, %v2532
      %s2539 = sld [smem:[#allocation6 + $0x5c]]
      %v2540 = vstv %s2539
      %v2541 = vmul.f32 %v993, %v2540
      %v2542 = vmul.f32 %v994, %v2540
      %v2543 = vmul.f32 %v995, %v2540
      %2547 = vrot.lane.b32.xlu0 %v2541, 127
      %v2548 = vpop.permute.xlu0 %2547
      %2549 = vrot.lane.b32.xlu0 %v2542, 127
      %v2550 = vpop.permute.xlu0 %2549
      %2551 = vrot.lane.b32.xlu0 %v2543, 127
      %v2552 = vpop.permute.xlu0 %2551
      %v2556 = vadd.f32 %v2536, %v2548
      %v2557 = vadd.f32 %v2537, %v2550
      %v2558 = vadd.f32 %v2538, %v2552
      %s2559 = sld [smem:[#allocation6 + $0x2c]]
      %v2560 = vstv %s2559
      %v2561 = vmul.f32 %v990, %v2560
      %v2562 = vmul.f32 %v991, %v2560
      %v2563 = vmul.f32 %v992, %v2560
      %2567 = vrot.lane.b32.xlu0 %v2561, 126
      %v2568 = vpop.permute.xlu0 %2567
      %2569 = vrot.lane.b32.xlu0 %v2562, 126
      %v2570 = vpop.permute.xlu0 %2569
      %2571 = vrot.lane.b32.xlu0 %v2563, 126
      %v2572 = vpop.permute.xlu0 %2571
      %v2576 = vadd.f32 %v2556, %v2568
      %v2577 = vadd.f32 %v2557, %v2570
      %v2578 = vadd.f32 %v2558, %v2572
      %s2579 = sld [smem:[#allocation6 + $0x5d]]
      %v2580 = vstv %s2579
      %v2581 = vmul.f32 %v993, %v2580
      %v2582 = vmul.f32 %v994, %v2580
      %v2583 = vmul.f32 %v995, %v2580
      %2587 = vrot.lane.b32.xlu0 %v2581, 126
      %v2588 = vpop.permute.xlu0 %2587
      %2589 = vrot.lane.b32.xlu0 %v2582, 126
      %v2590 = vpop.permute.xlu0 %2589
      %2591 = vrot.lane.b32.xlu0 %v2583, 126
      %v2592 = vpop.permute.xlu0 %2591
      %v2596 = vadd.f32 %v2576, %v2588
      %v2597 = vadd.f32 %v2577, %v2590
      %v2598 = vadd.f32 %v2578, %v2592
      %s2599 = sld [smem:[#allocation6 + $0x2d]]
      %v2600 = vstv %s2599
      %v2601 = vmul.f32 %v990, %v2600
      %v2602 = vmul.f32 %v991, %v2600
      %v2603 = vmul.f32 %v992, %v2600
      %2607 = vrot.lane.b32.xlu0 %v2601, 125
      %v2608 = vpop.permute.xlu0 %2607
      %2609 = vrot.lane.b32.xlu0 %v2602, 125
      %v2610 = vpop.permute.xlu0 %2609
      %2611 = vrot.lane.b32.xlu0 %v2603, 125
      %v2612 = vpop.permute.xlu0 %2611
      %v2616 = vadd.f32 %v2596, %v2608
      %v2617 = vadd.f32 %v2597, %v2610
      %v2618 = vadd.f32 %v2598, %v2612
      %s2619 = sld [smem:[#allocation6 + $0x5e]]
      %v2620 = vstv %s2619
      %v2621 = vmul.f32 %v993, %v2620
      %v2622 = vmul.f32 %v994, %v2620
      %v2623 = vmul.f32 %v995, %v2620
      %2627 = vrot.lane.b32.xlu0 %v2621, 125
      %v2628 = vpop.permute.xlu0 %2627
      %2629 = vrot.lane.b32.xlu0 %v2622, 125
      %v2630 = vpop.permute.xlu0 %2629
      %2631 = vrot.lane.b32.xlu0 %v2623, 125
      %v2632 = vpop.permute.xlu0 %2631
      %v2636 = vadd.f32 %v2616, %v2628
      %v2637 = vadd.f32 %v2617, %v2630
      %v2638 = vadd.f32 %v2618, %v2632
      %s2639 = sld [smem:[#allocation6 + $0x2e]]
      %v2640 = vstv %s2639
      %v2641 = vmul.f32 %v990, %v2640
      %v2642 = vmul.f32 %v991, %v2640
      %v2643 = vmul.f32 %v992, %v2640
      %2647 = vrot.lane.b32.xlu0 %v2641, 124
      %v2648 = vpop.permute.xlu0 %2647
      %2649 = vrot.lane.b32.xlu0 %v2642, 124
      %v2650 = vpop.permute.xlu0 %2649
      %2651 = vrot.lane.b32.xlu0 %v2643, 124
      %v2652 = vpop.permute.xlu0 %2651
      %v2656 = vadd.f32 %v2636, %v2648
      %v2657 = vadd.f32 %v2637, %v2650
      %v2658 = vadd.f32 %v2638, %v2652
      %s2659 = sld [smem:[#allocation6 + $0x5f]]
      %v2660 = vstv %s2659
      %v2661 = vmul.f32 %v993, %v2660
      %v2662 = vmul.f32 %v994, %v2660
      %v2663 = vmul.f32 %v995, %v2660
      %2667 = vrot.lane.b32.xlu0 %v2661, 124
      %v2668 = vpop.permute.xlu0 %2667
      %2669 = vrot.lane.b32.xlu0 %v2662, 124
      %v2670 = vpop.permute.xlu0 %2669
      %2671 = vrot.lane.b32.xlu0 %v2663, 124
      %v2672 = vpop.permute.xlu0 %2671
      %v2676 = vadd.f32 %v2656, %v2668
      %v2677 = vadd.f32 %v2657, %v2670
      %v2678 = vadd.f32 %v2658, %v2672
      %s2679 = sld [smem:[#allocation6 + $0x2f]]
      %v2680 = vstv %s2679
      %v2681 = vmul.f32 %v990, %v2680
      %v2682 = vmul.f32 %v991, %v2680
      %v2683 = vmul.f32 %v992, %v2680
      %2687 = vrot.lane.b32.xlu0 %v2681, 123
      %v2688 = vpop.permute.xlu0 %2687
      %2689 = vrot.lane.b32.xlu0 %v2682, 123
      %v2690 = vpop.permute.xlu0 %2689
      %2691 = vrot.lane.b32.xlu0 %v2683, 123
      %v2692 = vpop.permute.xlu0 %2691
      %v2696 = vadd.f32 %v2676, %v2688
      %v2697 = vadd.f32 %v2677, %v2690
      %v2698 = vadd.f32 %v2678, %v2692
      %s2699 = sld [smem:[#allocation6 + $0x60]]
      %v2700 = vstv %s2699
      %v2701 = vmul.f32 %v993, %v2700
      %v2702 = vmul.f32 %v994, %v2700
      %v2703 = vmul.f32 %v995, %v2700
      %2707 = vrot.lane.b32.xlu0 %v2701, 123
      %v2708 = vpop.permute.xlu0 %2707
      %2709 = vrot.lane.b32.xlu0 %v2702, 123
      %v2710 = vpop.permute.xlu0 %2709
      %2711 = vrot.lane.b32.xlu0 %v2703, 123
      %v2712 = vpop.permute.xlu0 %2711
      %v2716 = vadd.f32 %v2696, %v2708
      %v2717 = vadd.f32 %v2697, %v2710
      %v2718 = vadd.f32 %v2698, %v2712
      %s2719 = sld [smem:[#allocation6 + $0x30]]
      %v2720 = vstv %s2719
      %v2721 = vmul.f32 %v990, %v2720
      %v2722 = vmul.f32 %v991, %v2720
      %v2723 = vmul.f32 %v992, %v2720
      %2727 = vrot.lane.b32.xlu0 %v2721, 122
      %v2728 = vpop.permute.xlu0 %2727
      %2729 = vrot.lane.b32.xlu0 %v2722, 122
      %v2730 = vpop.permute.xlu0 %2729
      %2731 = vrot.lane.b32.xlu0 %v2723, 122
      %v2732 = vpop.permute.xlu0 %2731
      %v2736 = vadd.f32 %v2716, %v2728
      %v2737 = vadd.f32 %v2717, %v2730
      %v2738 = vadd.f32 %v2718, %v2732
      %s2739 = sld [smem:[#allocation6 + $0x61]]
      %v2740 = vstv %s2739
      %v2741 = vmul.f32 %v993, %v2740
      %v2742 = vmul.f32 %v994, %v2740
      %v2743 = vmul.f32 %v995, %v2740
      %2747 = vrot.lane.b32.xlu0 %v2741, 122
      %v2748 = vpop.permute.xlu0 %2747
      %2749 = vrot.lane.b32.xlu0 %v2742, 122
      %v2750 = vpop.permute.xlu0 %2749
      %2751 = vrot.lane.b32.xlu0 %v2743, 122
      %v2752 = vpop.permute.xlu0 %2751
      %v2756 = vadd.f32 %v2736, %v2748
      %v2757 = vadd.f32 %v2737, %v2750
      %v2758 = vadd.f32 %v2738, %v2752
      %vm2762 = vcmask 1041408
      %v2763 = vrot.slane %v2756, 6
      %v2764 = vrot.slane %v2757, 6
      %v2765 = vsel %vm2762, %v2763, %v2764
      %v2766 = vrot.slane %v2758, 6
      %v2767 = vsel %vm2762, %v2764, %v2766
      %v2770 = vadd.f32 %v2504, %v2765
      %v2771 = vadd.f32 %v2505, %v2767
      %v2772 = vxor.u32 %v2770, 2147483648
      %v2773 = vxor.u32 %v2771, 2147483648
      %v2774 = vmul.f32 %v2772, 1.442695
      %v2775 = vpow.pop %v2774
      %v2776 = vmul.f32 %v2773, 1.442695
      %v2777 = vpow.pop %v2776
      %v2778 = vadd.f32 %v2775, 1.0
      %v2779 = vadd.f32 %v2777, 1.0
      %v2780 = vrcp.pop %v2778
      %v2781 = vmul.f32 1.0, %v2780
      %v2782 = vrcp.pop %v2779
      %v2783 = vmul.f32 1.0, %v2782
      %v2784 = vlaneseq
      %vm2785 = vcmp.ge.s32.totalorder %v2784, 0
      %vm2786 = vcmp.lt.s32.totalorder %v2784, 16
      %vm2787 = vmand %vm2785, %vm2786
      %2788 = vst.msk [vmem:[#allocation11] sm:$0x1] %vm2787, %v2781
      %v2791 = vunpack.c.l.s4 1966171168
      %v2792 = vunpack.c.0.s8 %v2791
      %v2793 = vlaneseq
      %v2794 = vshrl.u32 %v2793, 7
      %v2795 = vsub.s32 %v2792, %v2794
      %v2796 = vrot.slane %v2781, %v2795
      %v2797 = vcombine.high %v2796, %v2796
      %v2799 = vunpack.c.l.s4 1966171168
      %v2800 = vunpack.c.0.s8 %v2799
      %v2801 = vlaneseq
      %v2802 = vshrl.u32 %v2801, 7
      %v2803 = vsub.s32 %v2800, %v2802
      %v2804 = vrot.slane %v2796, %v2803
      %v2806 = vunpack.c.l.s4 1966171168
      %v2807 = vunpack.c.0.s8 %v2806
      %v2808 = vlaneseq
      %v2809 = vshrl.u32 %v2808, 7
      %v2810 = vsub.s32 %v2807, %v2809
      %v2811 = vrot.slane %v2797, %v2810
      %2812 = vrot.lane.b32.xlu0 %v2811, 16
      %v2813 = vpop.permute.xlu0 %2812
      %vm2815 = vcmp.ge.s32.totalorder %v2784, 16
      %vm2816 = vcmp.lt.s32.totalorder %v2784, 32
      %vm2817 = vmand %vm2815, %vm2816
      %2818 = vst.msk [vmem:[#allocation11] sm:$0x1] %vm2817, %v2813
      %v2819 = vcombine.high %v2804, %v2804
      %2820 = vrot.lane.b32.xlu0 %v2819, 32
      %v2821 = vpop.permute.xlu0 %2820
      %vm2823 = vcmp.ge.s32.totalorder %v2784, 32
      %vm2824 = vcmp.lt.s32.totalorder %v2784, 48
      %vm2825 = vmand %vm2823, %vm2824
      %2826 = vst.msk [vmem:[#allocation11] sm:$0x1] %vm2825, %v2821
      %v2827 = vcombine.high %v2811, %v2811
      %2828 = vrot.lane.b32.xlu0 %v2827, 48
      %v2829 = vpop.permute.xlu0 %2828
      %vm2831 = vcmp.ge.s32.totalorder %v2784, 48
      %vm2832 = vcmp.lt.s32.totalorder %v2784, 64
      %vm2833 = vmand %vm2831, %vm2832
      %2834 = vst.msk [vmem:[#allocation11] sm:$0x1] %vm2833, %v2829
      %v2835 = vcombine.high %v2781, %v2781
      %v2837 = vunpack.c.l.s4 1966171168
      %v2838 = vunpack.c.0.s8 %v2837
      %v2839 = vlaneseq
      %v2840 = vshrl.u32 %v2839, 7
      %v2841 = vsub.s32 %v2838, %v2840
      %v2842 = vrot.slane %v2835, %v2841
      %v2844 = vunpack.c.l.s4 1966171168
      %v2845 = vunpack.c.0.s8 %v2844
      %v2846 = vlaneseq
      %v2847 = vshrl.u32 %v2846, 7
      %v2848 = vsub.s32 %v2845, %v2847
      %v2849 = vrot.slane %v2842, %v2848
      %2850 = vrot.lane.b32.xlu0 %v2849, 64
      %v2851 = vpop.permute.xlu0 %2850
      %vm2853 = vcmp.ge.s32.totalorder %v2784, 64
      %vm2854 = vcmp.lt.s32.totalorder %v2784, 80
      %vm2855 = vmand %vm2853, %vm2854
      %2856 = vst.msk [vmem:[#allocation11] sm:$0x1] %vm2855, %v2851
      %v2857 = vcombine.high %v2842, %v2842
      %v2859 = vunpack.c.l.s4 1966171168
      %v2860 = vunpack.c.0.s8 %v2859
      %v2861 = vlaneseq
      %v2862 = vshrl.u32 %v2861, 7
      %v2863 = vsub.s32 %v2860, %v2862
      %v2864 = vrot.slane %v2857, %v2863
      %2865 = vrot.lane.b32.xlu0 %v2864, 80
      %v2866 = vpop.permute.xlu0 %2865
      %vm2868 = vcmp.ge.s32.totalorder %v2784, 80
      %vm2869 = vcmp.lt.s32.totalorder %v2784, 96
      %vm2870 = vmand %vm2868, %vm2869
      %2871 = vst.msk [vmem:[#allocation11] sm:$0x1] %vm2870, %v2866
      %v2872 = vcombine.high %v2849, %v2849
      %2873 = vrot.lane.b32.xlu0 %v2872, 96
      %v2874 = vpop.permute.xlu0 %2873
      %vm2876 = vcmp.ge.s32.totalorder %v2784, 96
      %vm2877 = vcmp.lt.s32.totalorder %v2784, 112
      %vm2878 = vmand %vm2876, %vm2877
      %2879 = vst.msk [vmem:[#allocation11] sm:$0x1] %vm2878, %v2874
      %v2880 = vcombine.high %v2864, %v2864
      %2881 = vrot.lane.b32.xlu0 %v2880, 112
      %v2882 = vpop.permute.xlu0 %2881
      %vm2884 = vcmp.ge.s32.totalorder %v2784, 112
      %vm2885 = vcmp.lt.s32.totalorder %v2784, 128
      %vm2886 = vmand %vm2884, %vm2885
      %2887 = vst.msk [vmem:[#allocation11] sm:$0x1] %vm2886, %v2882
      %2888 = vst.msk [vmem:[#allocation11 + $0x1] sm:$0x1] %vm2787, %v2783
      %v2891 = vunpack.c.l.s4 1966171168
      %v2892 = vunpack.c.0.s8 %v2891
      %v2893 = vlaneseq
      %v2894 = vshrl.u32 %v2893, 7
      %v2895 = vsub.s32 %v2892, %v2894
      %v2896 = vrot.slane %v2783, %v2895
      %v2897 = vcombine.high %v2896, %v2896
      %v2899 = vunpack.c.l.s4 1966171168
      %v2900 = vunpack.c.0.s8 %v2899
      %v2901 = vlaneseq
      %v2902 = vshrl.u32 %v2901, 7
      %v2903 = vsub.s32 %v2900, %v2902
      %v2904 = vrot.slane %v2896, %v2903
      %v2906 = vunpack.c.l.s4 1966171168
      %v2907 = vunpack.c.0.s8 %v2906
      %v2908 = vlaneseq
      %v2909 = vshrl.u32 %v2908, 7
      %v2910 = vsub.s32 %v2907, %v2909
      %v2911 = vrot.slane %v2897, %v2910
      %2912 = vrot.lane.b32.xlu0 %v2911, 16
      %v2913 = vpop.permute.xlu0 %2912
      %2915 = vst.msk [vmem:[#allocation11 + $0x1] sm:$0x1] %vm2817, %v2913
      %v2916 = vcombine.high %v2904, %v2904
      %2917 = vrot.lane.b32.xlu0 %v2916, 32
      %v2918 = vpop.permute.xlu0 %2917
      %2920 = vst.msk [vmem:[#allocation11 + $0x1] sm:$0x1] %vm2825, %v2918
      %v2921 = vcombine.high %v2911, %v2911
      %2922 = vrot.lane.b32.xlu0 %v2921, 48
      %v2923 = vpop.permute.xlu0 %2922
      %2925 = vst.msk [vmem:[#allocation11 + $0x1] sm:$0x1] %vm2833, %v2923
      %v2926 = vcombine.high %v2783, %v2783
      %v2928 = vunpack.c.l.s4 1966171168
      %v2929 = vunpack.c.0.s8 %v2928
      %v2930 = vlaneseq
      %v2931 = vshrl.u32 %v2930, 7
      %v2932 = vsub.s32 %v2929, %v2931
      %v2933 = vrot.slane %v2926, %v2932
      %v2935 = vunpack.c.l.s4 1966171168
      %v2936 = vunpack.c.0.s8 %v2935
      %v2937 = vlaneseq
      %v2938 = vshrl.u32 %v2937, 7
      %v2939 = vsub.s32 %v2936, %v2938
      %v2940 = vrot.slane %v2933, %v2939
      %2941 = vrot.lane.b32.xlu0 %v2940, 64
      %v2942 = vpop.permute.xlu0 %2941
      %2944 = vst.msk [vmem:[#allocation11 + $0x1] sm:$0x1] %vm2855, %v2942
      %v2945 = vcombine.high %v2933, %v2933
      %v2947 = vunpack.c.l.s4 1966171168
      %v2948 = vunpack.c.0.s8 %v2947
      %v2949 = vlaneseq
      %v2950 = vshrl.u32 %v2949, 7
      %v2951 = vsub.s32 %v2948, %v2950
      %v2952 = vrot.slane %v2945, %v2951
      %2953 = vrot.lane.b32.xlu0 %v2952, 80
      %v2954 = vpop.permute.xlu0 %2953
      %2956 = vst.msk [vmem:[#allocation11 + $0x1] sm:$0x1] %vm2870, %v2954
      %v2957 = vcombine.high %v2940, %v2940
      %2958 = vrot.lane.b32.xlu0 %v2957, 96
      %v2959 = vpop.permute.xlu0 %2958
      %2961 = vst.msk [vmem:[#allocation11 + $0x1] sm:$0x1] %vm2878, %v2959
      %v2962 = vcombine.high %v2952, %v2952
      %2963 = vrot.lane.b32.xlu0 %v2962, 112
      %v2964 = vpop.permute.xlu0 %2963
      %2966 = vst.msk [vmem:[#allocation11 + $0x1] sm:$0x1] %vm2886, %v2964
      %s2967 = scalar_lea.vmem [#allocation4], 24
      %v2968 = vld [vmem:[%s2967] sm:$0xff]
      %v2969 = vld [vmem:[%s2967 + $0x8] sm:$0xff]
      %v2970 = vld [vmem:[%s2967 + $0x10] sm:$0x3f]
      %s2971 = scalar_lea.vmem [#allocation5], 24
      %v2972 = vld [vmem:[%s2971] sm:$0xff]
      %v2973 = vld [vmem:[%s2971 + $0x8] sm:$0xff]
      %v2974 = vld [vmem:[%s2971 + $0x10] sm:$0x3f]
      %s2975 = sld [smem:[#allocation6]]
      %v2976 = vstv %s2975
      %v2977 = vmul.f32 %v2968, %v2976
      %v2978 = vmul.f32 %v2969, %v2976
      %s2979 = sld [smem:[#allocation6 + $0x31]]
      %v2980 = vstv %s2979
      %v2981 = vmul.f32 %v2972, %v2980
      %v2982 = vmul.f32 %v2973, %v2980
      %v2983 = vadd.f32 %v2977, %v2981
      %v2984 = vadd.f32 %v2978, %v2982
      %s2985 = sld [smem:[#allocation6 + $0x1]]
      %v2986 = vstv %s2985
      %v2987 = vmul.f32 %v2968, %v2986
      %v2988 = vmul.f32 %v2969, %v2986
      %2991 = vrot.lane.b32.xlu0 %v2987, 127
      %v2992 = vpop.permute.xlu0 %2991
      %2993 = vrot.lane.b32.xlu0 %v2988, 127
      %v2994 = vpop.permute.xlu0 %2993
      %v2997 = vadd.f32 %v2983, %v2992
      %v2998 = vadd.f32 %v2984, %v2994
      %s2999 = sld [smem:[#allocation6 + $0x32]]
      %v3000 = vstv %s2999
      %v3001 = vmul.f32 %v2972, %v3000
      %v3002 = vmul.f32 %v2973, %v3000
      %3005 = vrot.lane.b32.xlu0 %v3001, 127
      %v3006 = vpop.permute.xlu0 %3005
      %3007 = vrot.lane.b32.xlu0 %v3002, 127
      %v3008 = vpop.permute.xlu0 %3007
      %v3011 = vadd.f32 %v2997, %v3006
      %v3012 = vadd.f32 %v2998, %v3008
      %s3013 = sld [smem:[#allocation6 + $0x2]]
      %v3014 = vstv %s3013
      %v3015 = vmul.f32 %v2968, %v3014
      %v3016 = vmul.f32 %v2969, %v3014
      %3019 = vrot.lane.b32.xlu0 %v3015, 126
      %v3020 = vpop.permute.xlu0 %3019
      %3021 = vrot.lane.b32.xlu0 %v3016, 126
      %v3022 = vpop.permute.xlu0 %3021
      %v3025 = vadd.f32 %v3011, %v3020
      %v3026 = vadd.f32 %v3012, %v3022
      %s3027 = sld [smem:[#allocation6 + $0x33]]
      %v3028 = vstv %s3027
      %v3029 = vmul.f32 %v2972, %v3028
      %v3030 = vmul.f32 %v2973, %v3028
      %3033 = vrot.lane.b32.xlu0 %v3029, 126
      %v3034 = vpop.permute.xlu0 %3033
      %3035 = vrot.lane.b32.xlu0 %v3030, 126
      %v3036 = vpop.permute.xlu0 %3035
      %v3039 = vadd.f32 %v3025, %v3034
      %v3040 = vadd.f32 %v3026, %v3036
      %s3041 = sld [smem:[#allocation6 + $0x3]]
      %v3042 = vstv %s3041
      %v3043 = vmul.f32 %v2968, %v3042
      %v3044 = vmul.f32 %v2969, %v3042
      %3047 = vrot.lane.b32.xlu0 %v3043, 125
      %v3048 = vpop.permute.xlu0 %3047
      %3049 = vrot.lane.b32.xlu0 %v3044, 125
      %v3050 = vpop.permute.xlu0 %3049
      %v3053 = vadd.f32 %v3039, %v3048
      %v3054 = vadd.f32 %v3040, %v3050
      %s3055 = sld [smem:[#allocation6 + $0x34]]
      %v3056 = vstv %s3055
      %v3057 = vmul.f32 %v2972, %v3056
      %v3058 = vmul.f32 %v2973, %v3056
      %3061 = vrot.lane.b32.xlu0 %v3057, 125
      %v3062 = vpop.permute.xlu0 %3061
      %3063 = vrot.lane.b32.xlu0 %v3058, 125
      %v3064 = vpop.permute.xlu0 %3063
      %v3067 = vadd.f32 %v3053, %v3062
      %v3068 = vadd.f32 %v3054, %v3064
      %s3069 = sld [smem:[#allocation6 + $0x4]]
      %v3070 = vstv %s3069
      %v3071 = vmul.f32 %v2968, %v3070
      %v3072 = vmul.f32 %v2969, %v3070
      %3075 = vrot.lane.b32.xlu0 %v3071, 124
      %v3076 = vpop.permute.xlu0 %3075
      %3077 = vrot.lane.b32.xlu0 %v3072, 124
      %v3078 = vpop.permute.xlu0 %3077
      %v3081 = vadd.f32 %v3067, %v3076
      %v3082 = vadd.f32 %v3068, %v3078
      %s3083 = sld [smem:[#allocation6 + $0x35]]
      %v3084 = vstv %s3083
      %v3085 = vmul.f32 %v2972, %v3084
      %v3086 = vmul.f32 %v2973, %v3084
      %3089 = vrot.lane.b32.xlu0 %v3085, 124
      %v3090 = vpop.permute.xlu0 %3089
      %3091 = vrot.lane.b32.xlu0 %v3086, 124
      %v3092 = vpop.permute.xlu0 %3091
      %v3095 = vadd.f32 %v3081, %v3090
      %v3096 = vadd.f32 %v3082, %v3092
      %s3097 = sld [smem:[#allocation6 + $0x5]]
      %v3098 = vstv %s3097
      %v3099 = vmul.f32 %v2968, %v3098
      %v3100 = vmul.f32 %v2969, %v3098
      %3103 = vrot.lane.b32.xlu0 %v3099, 123
      %v3104 = vpop.permute.xlu0 %3103
      %3105 = vrot.lane.b32.xlu0 %v3100, 123
      %v3106 = vpop.permute.xlu0 %3105
      %v3109 = vadd.f32 %v3095, %v3104
      %v3110 = vadd.f32 %v3096, %v3106
      %s3111 = sld [smem:[#allocation6 + $0x36]]
      %v3112 = vstv %s3111
      %v3113 = vmul.f32 %v2972, %v3112
      %v3114 = vmul.f32 %v2973, %v3112
      %3117 = vrot.lane.b32.xlu0 %v3113, 123
      %v3118 = vpop.permute.xlu0 %3117
      %3119 = vrot.lane.b32.xlu0 %v3114, 123
      %v3120 = vpop.permute.xlu0 %3119
      %v3123 = vadd.f32 %v3109, %v3118
      %v3124 = vadd.f32 %v3110, %v3120
      %s3125 = sld [smem:[#allocation6 + $0x6]]
      %v3126 = vstv %s3125
      %v3127 = vmul.f32 %v2968, %v3126
      %v3128 = vmul.f32 %v2969, %v3126
      %3131 = vrot.lane.b32.xlu0 %v3127, 122
      %v3132 = vpop.permute.xlu0 %3131
      %3133 = vrot.lane.b32.xlu0 %v3128, 122
      %v3134 = vpop.permute.xlu0 %3133
      %v3137 = vadd.f32 %v3123, %v3132
      %v3138 = vadd.f32 %v3124, %v3134
      %s3139 = sld [smem:[#allocation6 + $0x37]]
      %v3140 = vstv %s3139
      %v3141 = vmul.f32 %v2972, %v3140
      %v3142 = vmul.f32 %v2973, %v3140
      %3145 = vrot.lane.b32.xlu0 %v3141, 122
      %v3146 = vpop.permute.xlu0 %3145
      %3147 = vrot.lane.b32.xlu0 %v3142, 122
      %v3148 = vpop.permute.xlu0 %3147
      %v3151 = vadd.f32 %v3137, %v3146
      %v3152 = vadd.f32 %v3138, %v3148
      %v3153 = vadd.f32 %v3151, 0.0
      %v3154 = vadd.f32 %v3152, 0.0
      %s3155 = sld [smem:[#allocation6 + $0x7]]
      %v3156 = vstv %s3155
      %v3157 = vmul.f32 %v2968, %v3156
      %v3158 = vmul.f32 %v2969, %v3156
      %v3159 = vmul.f32 %v2970, %v3156
      %s3160 = sld [smem:[#allocation6 + $0x38]]
      %v3161 = vstv %s3160
      %v3162 = vmul.f32 %v2972, %v3161
      %v3163 = vmul.f32 %v2973, %v3161
      %v3164 = vmul.f32 %v2974, %v3161
      %v3165 = vadd.f32 %v3157, %v3162
      %v3166 = vadd.f32 %v3158, %v3163
      %v3167 = vadd.f32 %v3159, %v3164
      %s3168 = sld [smem:[#allocation6 + $0x8]]
      %v3169 = vstv %s3168
      %v3170 = vmul.f32 %v2968, %v3169
      %v3171 = vmul.f32 %v2969, %v3169
      %v3172 = vmul.f32 %v2970, %v3169
      %3176 = vrot.lane.b32.xlu0 %v3170, 127
      %v3177 = vpop.permute.xlu0 %3176
      %3178 = vrot.lane.b32.xlu0 %v3171, 127
      %v3179 = vpop.permute.xlu0 %3178
      %3180 = vrot.lane.b32.xlu0 %v3172, 127
      %v3181 = vpop.permute.xlu0 %3180
      %v3185 = vadd.f32 %v3165, %v3177
      %v3186 = vadd.f32 %v3166, %v3179
      %v3187 = vadd.f32 %v3167, %v3181
      %s3188 = sld [smem:[#allocation6 + $0x39]]
      %v3189 = vstv %s3188
      %v3190 = vmul.f32 %v2972, %v3189
      %v3191 = vmul.f32 %v2973, %v3189
      %v3192 = vmul.f32 %v2974, %v3189
      %3196 = vrot.lane.b32.xlu0 %v3190, 127
      %v3197 = vpop.permute.xlu0 %3196
      %3198 = vrot.lane.b32.xlu0 %v3191, 127
      %v3199 = vpop.permute.xlu0 %3198
      %3200 = vrot.lane.b32.xlu0 %v3192, 127
      %v3201 = vpop.permute.xlu0 %3200
      %v3205 = vadd.f32 %v3185, %v3197
      %v3206 = vadd.f32 %v3186, %v3199
      %v3207 = vadd.f32 %v3187, %v3201
      %s3208 = sld [smem:[#allocation6 + $0x9]]
      %v3209 = vstv %s3208
      %v3210 = vmul.f32 %v2968, %v3209
      %v3211 = vmul.f32 %v2969, %v3209
      %v3212 = vmul.f32 %v2970, %v3209
      %3216 = vrot.lane.b32.xlu0 %v3210, 126
      %v3217 = vpop.permute.xlu0 %3216
      %3218 = vrot.lane.b32.xlu0 %v3211, 126
      %v3219 = vpop.permute.xlu0 %3218
      %3220 = vrot.lane.b32.xlu0 %v3212, 126
      %v3221 = vpop.permute.xlu0 %3220
      %v3225 = vadd.f32 %v3205, %v3217
      %v3226 = vadd.f32 %v3206, %v3219
      %v3227 = vadd.f32 %v3207, %v3221
      %s3228 = sld [smem:[#allocation6 + $0x3a]]
      %v3229 = vstv %s3228
      %v3230 = vmul.f32 %v2972, %v3229
      %v3231 = vmul.f32 %v2973, %v3229
      %v3232 = vmul.f32 %v2974, %v3229
      %3236 = vrot.lane.b32.xlu0 %v3230, 126
      %v3237 = vpop.permute.xlu0 %3236
      %3238 = vrot.lane.b32.xlu0 %v3231, 126
      %v3239 = vpop.permute.xlu0 %3238
      %3240 = vrot.lane.b32.xlu0 %v3232, 126
      %v3241 = vpop.permute.xlu0 %3240
      %v3245 = vadd.f32 %v3225, %v3237
      %v3246 = vadd.f32 %v3226, %v3239
      %v3247 = vadd.f32 %v3227, %v3241
      %s3248 = sld [smem:[#allocation6 + $0xa]]
      %v3249 = vstv %s3248
      %v3250 = vmul.f32 %v2968, %v3249
      %v3251 = vmul.f32 %v2969, %v3249
      %v3252 = vmul.f32 %v2970, %v3249
      %3256 = vrot.lane.b32.xlu0 %v3250, 125
      %v3257 = vpop.permute.xlu0 %3256
      %3258 = vrot.lane.b32.xlu0 %v3251, 125
      %v3259 = vpop.permute.xlu0 %3258
      %3260 = vrot.lane.b32.xlu0 %v3252, 125
      %v3261 = vpop.permute.xlu0 %3260
      %v3265 = vadd.f32 %v3245, %v3257
      %v3266 = vadd.f32 %v3246, %v3259
      %v3267 = vadd.f32 %v3247, %v3261
      %s3268 = sld [smem:[#allocation6 + $0x3b]]
      %v3269 = vstv %s3268
      %v3270 = vmul.f32 %v2972, %v3269
      %v3271 = vmul.f32 %v2973, %v3269
      %v3272 = vmul.f32 %v2974, %v3269
      %3276 = vrot.lane.b32.xlu0 %v3270, 125
      %v3277 = vpop.permute.xlu0 %3276
      %3278 = vrot.lane.b32.xlu0 %v3271, 125
      %v3279 = vpop.permute.xlu0 %3278
      %3280 = vrot.lane.b32.xlu0 %v3272, 125
      %v3281 = vpop.permute.xlu0 %3280
      %v3285 = vadd.f32 %v3265, %v3277
      %v3286 = vadd.f32 %v3266, %v3279
      %v3287 = vadd.f32 %v3267, %v3281
      %s3288 = sld [smem:[#allocation6 + $0xb]]
      %v3289 = vstv %s3288
      %v3290 = vmul.f32 %v2968, %v3289
      %v3291 = vmul.f32 %v2969, %v3289
      %v3292 = vmul.f32 %v2970, %v3289
      %3296 = vrot.lane.b32.xlu0 %v3290, 124
      %v3297 = vpop.permute.xlu0 %3296
      %3298 = vrot.lane.b32.xlu0 %v3291, 124
      %v3299 = vpop.permute.xlu0 %3298
      %3300 = vrot.lane.b32.xlu0 %v3292, 124
      %v3301 = vpop.permute.xlu0 %3300
      %v3305 = vadd.f32 %v3285, %v3297
      %v3306 = vadd.f32 %v3286, %v3299
      %v3307 = vadd.f32 %v3287, %v3301
      %s3308 = sld [smem:[#allocation6 + $0x3c]]
      %v3309 = vstv %s3308
      %v3310 = vmul.f32 %v2972, %v3309
      %v3311 = vmul.f32 %v2973, %v3309
      %v3312 = vmul.f32 %v2974, %v3309
      %3316 = vrot.lane.b32.xlu0 %v3310, 124
      %v3317 = vpop.permute.xlu0 %3316
      %3318 = vrot.lane.b32.xlu0 %v3311, 124
      %v3319 = vpop.permute.xlu0 %3318
      %3320 = vrot.lane.b32.xlu0 %v3312, 124
      %v3321 = vpop.permute.xlu0 %3320
      %v3325 = vadd.f32 %v3305, %v3317
      %v3326 = vadd.f32 %v3306, %v3319
      %v3327 = vadd.f32 %v3307, %v3321
      %s3328 = sld [smem:[#allocation6 + $0xc]]
      %v3329 = vstv %s3328
      %v3330 = vmul.f32 %v2968, %v3329
      %v3331 = vmul.f32 %v2969, %v3329
      %v3332 = vmul.f32 %v2970, %v3329
      %3336 = vrot.lane.b32.xlu0 %v3330, 123
      %v3337 = vpop.permute.xlu0 %3336
      %3338 = vrot.lane.b32.xlu0 %v3331, 123
      %v3339 = vpop.permute.xlu0 %3338
      %3340 = vrot.lane.b32.xlu0 %v3332, 123
      %v3341 = vpop.permute.xlu0 %3340
      %v3345 = vadd.f32 %v3325, %v3337
      %v3346 = vadd.f32 %v3326, %v3339
      %v3347 = vadd.f32 %v3327, %v3341
      %s3348 = sld [smem:[#allocation6 + $0x3d]]
      %v3349 = vstv %s3348
      %v3350 = vmul.f32 %v2972, %v3349
      %v3351 = vmul.f32 %v2973, %v3349
      %v3352 = vmul.f32 %v2974, %v3349
      %3356 = vrot.lane.b32.xlu0 %v3350, 123
      %v3357 = vpop.permute.xlu0 %3356
      %3358 = vrot.lane.b32.xlu0 %v3351, 123
      %v3359 = vpop.permute.xlu0 %3358
      %3360 = vrot.lane.b32.xlu0 %v3352, 123
      %v3361 = vpop.permute.xlu0 %3360
      %v3365 = vadd.f32 %v3345, %v3357
      %v3366 = vadd.f32 %v3346, %v3359
      %v3367 = vadd.f32 %v3347, %v3361
      %s3368 = sld [smem:[#allocation6 + $0xd]]
      %v3369 = vstv %s3368
      %v3370 = vmul.f32 %v2968, %v3369
      %v3371 = vmul.f32 %v2969, %v3369
      %v3372 = vmul.f32 %v2970, %v3369
      %3376 = vrot.lane.b32.xlu0 %v3370, 122
      %v3377 = vpop.permute.xlu0 %3376
      %3378 = vrot.lane.b32.xlu0 %v3371, 122
      %v3379 = vpop.permute.xlu0 %3378
      %3380 = vrot.lane.b32.xlu0 %v3372, 122
      %v3381 = vpop.permute.xlu0 %3380
      %v3385 = vadd.f32 %v3365, %v3377
      %v3386 = vadd.f32 %v3366, %v3379
      %v3387 = vadd.f32 %v3367, %v3381
      %s3388 = sld [smem:[#allocation6 + $0x3e]]
      %v3389 = vstv %s3388
      %v3390 = vmul.f32 %v2972, %v3389
      %v3391 = vmul.f32 %v2973, %v3389
      %v3392 = vmul.f32 %v2974, %v3389
      %3396 = vrot.lane.b32.xlu0 %v3390, 122
      %v3397 = vpop.permute.xlu0 %3396
      %3398 = vrot.lane.b32.xlu0 %v3391, 122
      %v3399 = vpop.permute.xlu0 %3398
      %3400 = vrot.lane.b32.xlu0 %v3392, 122
      %v3401 = vpop.permute.xlu0 %3400
      %v3405 = vadd.f32 %v3385, %v3397
      %v3406 = vadd.f32 %v3386, %v3399
      %v3407 = vadd.f32 %v3387, %v3401
      %v3411 = vrot.slane %v3405, 1
      %v3412 = vrot.slane %v3406, 1
      %v3413 = vsel %vm1432, %v3411, %v3412
      %v3414 = vrot.slane %v3407, 1
      %v3415 = vsel %vm1432, %v3412, %v3414
      %v3418 = vadd.f32 %v3153, %v3413
      %v3419 = vadd.f32 %v3154, %v3415
      %s3420 = sld [smem:[#allocation6 + $0xe]]
      %v3421 = vstv %s3420
      %v3422 = vmul.f32 %v2968, %v3421
      %v3423 = vmul.f32 %v2969, %v3421
      %v3424 = vmul.f32 %v2970, %v3421
      %s3425 = sld [smem:[#allocation6 + $0x3f]]
      %v3426 = vstv %s3425
      %v3427 = vmul.f32 %v2972, %v3426
      %v3428 = vmul.f32 %v2973, %v3426
      %v3429 = vmul.f32 %v2974, %v3426
      %v3430 = vadd.f32 %v3422, %v3427
      %v3431 = vadd.f32 %v3423, %v3428
      %v3432 = vadd.f32 %v3424, %v3429
      %s3433 = sld [smem:[#allocation6 + $0xf]]
      %v3434 = vstv %s3433
      %v3435 = vmul.f32 %v2968, %v3434
      %v3436 = vmul.f32 %v2969, %v3434
      %v3437 = vmul.f32 %v2970, %v3434
      %3441 = vrot.lane.b32.xlu0 %v3435, 127
      %v3442 = vpop.permute.xlu0 %3441
      %3443 = vrot.lane.b32.xlu0 %v3436, 127
      %v3444 = vpop.permute.xlu0 %3443
      %3445 = vrot.lane.b32.xlu0 %v3437, 127
      %v3446 = vpop.permute.xlu0 %3445
      %v3450 = vadd.f32 %v3430, %v3442
      %v3451 = vadd.f32 %v3431, %v3444
      %v3452 = vadd.f32 %v3432, %v3446
      %s3453 = sld [smem:[#allocation6 + $0x40]]
      %v3454 = vstv %s3453
      %v3455 = vmul.f32 %v2972, %v3454
      %v3456 = vmul.f32 %v2973, %v3454
      %v3457 = vmul.f32 %v2974, %v3454
      %3461 = vrot.lane.b32.xlu0 %v3455, 127
      %v3462 = vpop.permute.xlu0 %3461
      %3463 = vrot.lane.b32.xlu0 %v3456, 127
      %v3464 = vpop.permute.xlu0 %3463
      %3465 = vrot.lane.b32.xlu0 %v3457, 127
      %v3466 = vpop.permute.xlu0 %3465
      %v3470 = vadd.f32 %v3450, %v3462
      %v3471 = vadd.f32 %v3451, %v3464
      %v3472 = vadd.f32 %v3452, %v3466
      %s3473 = sld [smem:[#allocation6 + $0x10]]
      %v3474 = vstv %s3473
      %v3475 = vmul.f32 %v2968, %v3474
      %v3476 = vmul.f32 %v2969, %v3474
      %v3477 = vmul.f32 %v2970, %v3474
      %3481 = vrot.lane.b32.xlu0 %v3475, 126
      %v3482 = vpop.permute.xlu0 %3481
      %3483 = vrot.lane.b32.xlu0 %v3476, 126
      %v3484 = vpop.permute.xlu0 %3483
      %3485 = vrot.lane.b32.xlu0 %v3477, 126
      %v3486 = vpop.permute.xlu0 %3485
      %v3490 = vadd.f32 %v3470, %v3482
      %v3491 = vadd.f32 %v3471, %v3484
      %v3492 = vadd.f32 %v3472, %v3486
      %s3493 = sld [smem:[#allocation6 + $0x41]]
      %v3494 = vstv %s3493
      %v3495 = vmul.f32 %v2972, %v3494
      %v3496 = vmul.f32 %v2973, %v3494
      %v3497 = vmul.f32 %v2974, %v3494
      %3501 = vrot.lane.b32.xlu0 %v3495, 126
      %v3502 = vpop.permute.xlu0 %3501
      %3503 = vrot.lane.b32.xlu0 %v3496, 126
      %v3504 = vpop.permute.xlu0 %3503
      %3505 = vrot.lane.b32.xlu0 %v3497, 126
      %v3506 = vpop.permute.xlu0 %3505
      %v3510 = vadd.f32 %v3490, %v3502
      %v3511 = vadd.f32 %v3491, %v3504
      %v3512 = vadd.f32 %v3492, %v3506
      %s3513 = sld [smem:[#allocation6 + $0x11]]
      %v3514 = vstv %s3513
      %v3515 = vmul.f32 %v2968, %v3514
      %v3516 = vmul.f32 %v2969, %v3514
      %v3517 = vmul.f32 %v2970, %v3514
      %3521 = vrot.lane.b32.xlu0 %v3515, 125
      %v3522 = vpop.permute.xlu0 %3521
      %3523 = vrot.lane.b32.xlu0 %v3516, 125
      %v3524 = vpop.permute.xlu0 %3523
      %3525 = vrot.lane.b32.xlu0 %v3517, 125
      %v3526 = vpop.permute.xlu0 %3525
      %v3530 = vadd.f32 %v3510, %v3522
      %v3531 = vadd.f32 %v3511, %v3524
      %v3532 = vadd.f32 %v3512, %v3526
      %s3533 = sld [smem:[#allocation6 + $0x42]]
      %v3534 = vstv %s3533
      %v3535 = vmul.f32 %v2972, %v3534
      %v3536 = vmul.f32 %v2973, %v3534
      %v3537 = vmul.f32 %v2974, %v3534
      %3541 = vrot.lane.b32.xlu0 %v3535, 125
      %v3542 = vpop.permute.xlu0 %3541
      %3543 = vrot.lane.b32.xlu0 %v3536, 125
      %v3544 = vpop.permute.xlu0 %3543
      %3545 = vrot.lane.b32.xlu0 %v3537, 125
      %v3546 = vpop.permute.xlu0 %3545
      %v3550 = vadd.f32 %v3530, %v3542
      %v3551 = vadd.f32 %v3531, %v3544
      %v3552 = vadd.f32 %v3532, %v3546
      %s3553 = sld [smem:[#allocation6 + $0x12]]
      %v3554 = vstv %s3553
      %v3555 = vmul.f32 %v2968, %v3554
      %v3556 = vmul.f32 %v2969, %v3554
      %v3557 = vmul.f32 %v2970, %v3554
      %3561 = vrot.lane.b32.xlu0 %v3555, 124
      %v3562 = vpop.permute.xlu0 %3561
      %3563 = vrot.lane.b32.xlu0 %v3556, 124
      %v3564 = vpop.permute.xlu0 %3563
      %3565 = vrot.lane.b32.xlu0 %v3557, 124
      %v3566 = vpop.permute.xlu0 %3565
      %v3570 = vadd.f32 %v3550, %v3562
      %v3571 = vadd.f32 %v3551, %v3564
      %v3572 = vadd.f32 %v3552, %v3566
      %s3573 = sld [smem:[#allocation6 + $0x43]]
      %v3574 = vstv %s3573
      %v3575 = vmul.f32 %v2972, %v3574
      %v3576 = vmul.f32 %v2973, %v3574
      %v3577 = vmul.f32 %v2974, %v3574
      %3581 = vrot.lane.b32.xlu0 %v3575, 124
      %v3582 = vpop.permute.xlu0 %3581
      %3583 = vrot.lane.b32.xlu0 %v3576, 124
      %v3584 = vpop.permute.xlu0 %3583
      %3585 = vrot.lane.b32.xlu0 %v3577, 124
      %v3586 = vpop.permute.xlu0 %3585
      %v3590 = vadd.f32 %v3570, %v3582
      %v3591 = vadd.f32 %v3571, %v3584
      %v3592 = vadd.f32 %v3572, %v3586
      %s3593 = sld [smem:[#allocation6 + $0x13]]
      %v3594 = vstv %s3593
      %v3595 = vmul.f32 %v2968, %v3594
      %v3596 = vmul.f32 %v2969, %v3594
      %v3597 = vmul.f32 %v2970, %v3594
      %3601 = vrot.lane.b32.xlu0 %v3595, 123
      %v3602 = vpop.permute.xlu0 %3601
      %3603 = vrot.lane.b32.xlu0 %v3596, 123
      %v3604 = vpop.permute.xlu0 %3603
      %3605 = vrot.lane.b32.xlu0 %v3597, 123
      %v3606 = vpop.permute.xlu0 %3605
      %v3610 = vadd.f32 %v3590, %v3602
      %v3611 = vadd.f32 %v3591, %v3604
      %v3612 = vadd.f32 %v3592, %v3606
      %s3613 = sld [smem:[#allocation6 + $0x44]]
      %v3614 = vstv %s3613
      %v3615 = vmul.f32 %v2972, %v3614
      %v3616 = vmul.f32 %v2973, %v3614
      %v3617 = vmul.f32 %v2974, %v3614
      %3621 = vrot.lane.b32.xlu0 %v3615, 123
      %v3622 = vpop.permute.xlu0 %3621
      %3623 = vrot.lane.b32.xlu0 %v3616, 123
      %v3624 = vpop.permute.xlu0 %3623
      %3625 = vrot.lane.b32.xlu0 %v3617, 123
      %v3626 = vpop.permute.xlu0 %3625
      %v3630 = vadd.f32 %v3610, %v3622
      %v3631 = vadd.f32 %v3611, %v3624
      %v3632 = vadd.f32 %v3612, %v3626
      %s3633 = sld [smem:[#allocation6 + $0x14]]
      %v3634 = vstv %s3633
      %v3635 = vmul.f32 %v2968, %v3634
      %v3636 = vmul.f32 %v2969, %v3634
      %v3637 = vmul.f32 %v2970, %v3634
      %3641 = vrot.lane.b32.xlu0 %v3635, 122
      %v3642 = vpop.permute.xlu0 %3641
      %3643 = vrot.lane.b32.xlu0 %v3636, 122
      %v3644 = vpop.permute.xlu0 %3643
      %3645 = vrot.lane.b32.xlu0 %v3637, 122
      %v3646 = vpop.permute.xlu0 %3645
      %v3650 = vadd.f32 %v3630, %v3642
      %v3651 = vadd.f32 %v3631, %v3644
      %v3652 = vadd.f32 %v3632, %v3646
      %s3653 = sld [smem:[#allocation6 + $0x45]]
      %v3654 = vstv %s3653
      %v3655 = vmul.f32 %v2972, %v3654
      %v3656 = vmul.f32 %v2973, %v3654
      %v3657 = vmul.f32 %v2974, %v3654
      %3661 = vrot.lane.b32.xlu0 %v3655, 122
      %v3662 = vpop.permute.xlu0 %3661
      %3663 = vrot.lane.b32.xlu0 %v3656, 122
      %v3664 = vpop.permute.xlu0 %3663
      %3665 = vrot.lane.b32.xlu0 %v3657, 122
      %v3666 = vpop.permute.xlu0 %3665
      %v3670 = vadd.f32 %v3650, %v3662
      %v3671 = vadd.f32 %v3651, %v3664
      %v3672 = vadd.f32 %v3652, %v3666
      %v3676 = vrot.slane %v3670, 2
      %v3677 = vrot.slane %v3671, 2
      %v3678 = vsel %vm1698, %v3676, %v3677
      %v3679 = vrot.slane %v3672, 2
      %v3680 = vsel %vm1698, %v3677, %v3679
      %v3683 = vadd.f32 %v3418, %v3678
      %v3684 = vadd.f32 %v3419, %v3680
      %s3685 = sld [smem:[#allocation6 + $0x15]]
      %v3686 = vstv %s3685
      %v3687 = vmul.f32 %v2968, %v3686
      %v3688 = vmul.f32 %v2969, %v3686
      %v3689 = vmul.f32 %v2970, %v3686
      %s3690 = sld [smem:[#allocation6 + $0x46]]
      %v3691 = vstv %s3690
      %v3692 = vmul.f32 %v2972, %v3691
      %v3693 = vmul.f32 %v2973, %v3691
      %v3694 = vmul.f32 %v2974, %v3691
      %v3695 = vadd.f32 %v3687, %v3692
      %v3696 = vadd.f32 %v3688, %v3693
      %v3697 = vadd.f32 %v3689, %v3694
      %s3698 = sld [smem:[#allocation6 + $0x16]]
      %v3699 = vstv %s3698
      %v3700 = vmul.f32 %v2968, %v3699
      %v3701 = vmul.f32 %v2969, %v3699
      %v3702 = vmul.f32 %v2970, %v3699
      %3706 = vrot.lane.b32.xlu0 %v3700, 127
      %v3707 = vpop.permute.xlu0 %3706
      %3708 = vrot.lane.b32.xlu0 %v3701, 127
      %v3709 = vpop.permute.xlu0 %3708
      %3710 = vrot.lane.b32.xlu0 %v3702, 127
      %v3711 = vpop.permute.xlu0 %3710
      %v3715 = vadd.f32 %v3695, %v3707
      %v3716 = vadd.f32 %v3696, %v3709
      %v3717 = vadd.f32 %v3697, %v3711
      %s3718 = sld [smem:[#allocation6 + $0x47]]
      %v3719 = vstv %s3718
      %v3720 = vmul.f32 %v2972, %v3719
      %v3721 = vmul.f32 %v2973, %v3719
      %v3722 = vmul.f32 %v2974, %v3719
      %3726 = vrot.lane.b32.xlu0 %v3720, 127
      %v3727 = vpop.permute.xlu0 %3726
      %3728 = vrot.lane.b32.xlu0 %v3721, 127
      %v3729 = vpop.permute.xlu0 %3728
      %3730 = vrot.lane.b32.xlu0 %v3722, 127
      %v3731 = vpop.permute.xlu0 %3730
      %v3735 = vadd.f32 %v3715, %v3727
      %v3736 = vadd.f32 %v3716, %v3729
      %v3737 = vadd.f32 %v3717, %v3731
      %s3738 = sld [smem:[#allocation6 + $0x17]]
      %v3739 = vstv %s3738
      %v3740 = vmul.f32 %v2968, %v3739
      %v3741 = vmul.f32 %v2969, %v3739
      %v3742 = vmul.f32 %v2970, %v3739
      %3746 = vrot.lane.b32.xlu0 %v3740, 126
      %v3747 = vpop.permute.xlu0 %3746
      %3748 = vrot.lane.b32.xlu0 %v3741, 126
      %v3749 = vpop.permute.xlu0 %3748
      %3750 = vrot.lane.b32.xlu0 %v3742, 126
      %v3751 = vpop.permute.xlu0 %3750
      %v3755 = vadd.f32 %v3735, %v3747
      %v3756 = vadd.f32 %v3736, %v3749
      %v3757 = vadd.f32 %v3737, %v3751
      %s3758 = sld [smem:[#allocation6 + $0x48]]
      %v3759 = vstv %s3758
      %v3760 = vmul.f32 %v2972, %v3759
      %v3761 = vmul.f32 %v2973, %v3759
      %v3762 = vmul.f32 %v2974, %v3759
      %3766 = vrot.lane.b32.xlu0 %v3760, 126
      %v3767 = vpop.permute.xlu0 %3766
      %3768 = vrot.lane.b32.xlu0 %v3761, 126
      %v3769 = vpop.permute.xlu0 %3768
      %3770 = vrot.lane.b32.xlu0 %v3762, 126
      %v3771 = vpop.permute.xlu0 %3770
      %v3775 = vadd.f32 %v3755, %v3767
      %v3776 = vadd.f32 %v3756, %v3769
      %v3777 = vadd.f32 %v3757, %v3771
      %s3778 = sld [smem:[#allocation6 + $0x18]]
      %v3779 = vstv %s3778
      %v3780 = vmul.f32 %v2968, %v3779
      %v3781 = vmul.f32 %v2969, %v3779
      %v3782 = vmul.f32 %v2970, %v3779
      %3786 = vrot.lane.b32.xlu0 %v3780, 125
      %v3787 = vpop.permute.xlu0 %3786
      %3788 = vrot.lane.b32.xlu0 %v3781, 125
      %v3789 = vpop.permute.xlu0 %3788
      %3790 = vrot.lane.b32.xlu0 %v3782, 125
      %v3791 = vpop.permute.xlu0 %3790
      %v3795 = vadd.f32 %v3775, %v3787
      %v3796 = vadd.f32 %v3776, %v3789
      %v3797 = vadd.f32 %v3777, %v3791
      %s3798 = sld [smem:[#allocation6 + $0x49]]
      %v3799 = vstv %s3798
      %v3800 = vmul.f32 %v2972, %v3799
      %v3801 = vmul.f32 %v2973, %v3799
      %v3802 = vmul.f32 %v2974, %v3799
      %3806 = vrot.lane.b32.xlu0 %v3800, 125
      %v3807 = vpop.permute.xlu0 %3806
      %3808 = vrot.lane.b32.xlu0 %v3801, 125
      %v3809 = vpop.permute.xlu0 %3808
      %3810 = vrot.lane.b32.xlu0 %v3802, 125
      %v3811 = vpop.permute.xlu0 %3810
      %v3815 = vadd.f32 %v3795, %v3807
      %v3816 = vadd.f32 %v3796, %v3809
      %v3817 = vadd.f32 %v3797, %v3811
      %s3818 = sld [smem:[#allocation6 + $0x19]]
      %v3819 = vstv %s3818
      %v3820 = vmul.f32 %v2968, %v3819
      %v3821 = vmul.f32 %v2969, %v3819
      %v3822 = vmul.f32 %v2970, %v3819
      %3826 = vrot.lane.b32.xlu0 %v3820, 124
      %v3827 = vpop.permute.xlu0 %3826
      %3828 = vrot.lane.b32.xlu0 %v3821, 124
      %v3829 = vpop.permute.xlu0 %3828
      %3830 = vrot.lane.b32.xlu0 %v3822, 124
      %v3831 = vpop.permute.xlu0 %3830
      %v3835 = vadd.f32 %v3815, %v3827
      %v3836 = vadd.f32 %v3816, %v3829
      %v3837 = vadd.f32 %v3817, %v3831
      %s3838 = sld [smem:[#allocation6 + $0x4a]]
      %v3839 = vstv %s3838
      %v3840 = vmul.f32 %v2972, %v3839
      %v3841 = vmul.f32 %v2973, %v3839
      %v3842 = vmul.f32 %v2974, %v3839
      %3846 = vrot.lane.b32.xlu0 %v3840, 124
      %v3847 = vpop.permute.xlu0 %3846
      %3848 = vrot.lane.b32.xlu0 %v3841, 124
      %v3849 = vpop.permute.xlu0 %3848
      %3850 = vrot.lane.b32.xlu0 %v3842, 124
      %v3851 = vpop.permute.xlu0 %3850
      %v3855 = vadd.f32 %v3835, %v3847
      %v3856 = vadd.f32 %v3836, %v3849
      %v3857 = vadd.f32 %v3837, %v3851
      %s3858 = sld [smem:[#allocation6 + $0x1a]]
      %v3859 = vstv %s3858
      %v3860 = vmul.f32 %v2968, %v3859
      %v3861 = vmul.f32 %v2969, %v3859
      %v3862 = vmul.f32 %v2970, %v3859
      %3866 = vrot.lane.b32.xlu0 %v3860, 123
      %v3867 = vpop.permute.xlu0 %3866
      %3868 = vrot.lane.b32.xlu0 %v3861, 123
      %v3869 = vpop.permute.xlu0 %3868
      %3870 = vrot.lane.b32.xlu0 %v3862, 123
      %v3871 = vpop.permute.xlu0 %3870
      %v3875 = vadd.f32 %v3855, %v3867
      %v3876 = vadd.f32 %v3856, %v3869
      %v3877 = vadd.f32 %v3857, %v3871
      %s3878 = sld [smem:[#allocation6 + $0x4b]]
      %v3879 = vstv %s3878
      %v3880 = vmul.f32 %v2972, %v3879
      %v3881 = vmul.f32 %v2973, %v3879
      %v3882 = vmul.f32 %v2974, %v3879
      %3886 = vrot.lane.b32.xlu0 %v3880, 123
      %v3887 = vpop.permute.xlu0 %3886
      %3888 = vrot.lane.b32.xlu0 %v3881, 123
      %v3889 = vpop.permute.xlu0 %3888
      %3890 = vrot.lane.b32.xlu0 %v3882, 123
      %v3891 = vpop.permute.xlu0 %3890
      %v3895 = vadd.f32 %v3875, %v3887
      %v3896 = vadd.f32 %v3876, %v3889
      %v3897 = vadd.f32 %v3877, %v3891
      %s3898 = sld [smem:[#allocation6 + $0x1b]]
      %v3899 = vstv %s3898
      %v3900 = vmul.f32 %v2968, %v3899
      %v3901 = vmul.f32 %v2969, %v3899
      %v3902 = vmul.f32 %v2970, %v3899
      %3906 = vrot.lane.b32.xlu0 %v3900, 122
      %v3907 = vpop.permute.xlu0 %3906
      %3908 = vrot.lane.b32.xlu0 %v3901, 122
      %v3909 = vpop.permute.xlu0 %3908
      %3910 = vrot.lane.b32.xlu0 %v3902, 122
      %v3911 = vpop.permute.xlu0 %3910
      %v3915 = vadd.f32 %v3895, %v3907
      %v3916 = vadd.f32 %v3896, %v3909
      %v3917 = vadd.f32 %v3897, %v3911
      %s3918 = sld [smem:[#allocation6 + $0x4c]]
      %v3919 = vstv %s3918
      %v3920 = vmul.f32 %v2972, %v3919
      %v3921 = vmul.f32 %v2973, %v3919
      %v3922 = vmul.f32 %v2974, %v3919
      %3926 = vrot.lane.b32.xlu0 %v3920, 122
      %v3927 = vpop.permute.xlu0 %3926
      %3928 = vrot.lane.b32.xlu0 %v3921, 122
      %v3929 = vpop.permute.xlu0 %3928
      %3930 = vrot.lane.b32.xlu0 %v3922, 122
      %v3931 = vpop.permute.xlu0 %3930
      %v3935 = vadd.f32 %v3915, %v3927
      %v3936 = vadd.f32 %v3916, %v3929
      %v3937 = vadd.f32 %v3917, %v3931
      %v3941 = vrot.slane %v3935, 3
      %v3942 = vrot.slane %v3936, 3
      %v3943 = vsel %vm1964, %v3941, %v3942
      %v3944 = vrot.slane %v3937, 3
      %v3945 = vsel %vm1964, %v3942, %v3944
      %v3948 = vadd.f32 %v3683, %v3943
      %v3949 = vadd.f32 %v3684, %v3945
      %s3950 = sld [smem:[#allocation6 + $0x1c]]
      %v3951 = vstv %s3950
      %v3952 = vmul.f32 %v2968, %v3951
      %v3953 = vmul.f32 %v2969, %v3951
      %v3954 = vmul.f32 %v2970, %v3951
      %s3955 = sld [smem:[#allocation6 + $0x4d]]
      %v3956 = vstv %s3955
      %v3957 = vmul.f32 %v2972, %v3956
      %v3958 = vmul.f32 %v2973, %v3956
      %v3959 = vmul.f32 %v2974, %v3956
      %v3960 = vadd.f32 %v3952, %v3957
      %v3961 = vadd.f32 %v3953, %v3958
      %v3962 = vadd.f32 %v3954, %v3959
      %s3963 = sld [smem:[#allocation6 + $0x1d]]
      %v3964 = vstv %s3963
      %v3965 = vmul.f32 %v2968, %v3964
      %v3966 = vmul.f32 %v2969, %v3964
      %v3967 = vmul.f32 %v2970, %v3964
      %3971 = vrot.lane.b32.xlu0 %v3965, 127
      %v3972 = vpop.permute.xlu0 %3971
      %3973 = vrot.lane.b32.xlu0 %v3966, 127
      %v3974 = vpop.permute.xlu0 %3973
      %3975 = vrot.lane.b32.xlu0 %v3967, 127
      %v3976 = vpop.permute.xlu0 %3975
      %v3980 = vadd.f32 %v3960, %v3972
      %v3981 = vadd.f32 %v3961, %v3974
      %v3982 = vadd.f32 %v3962, %v3976
      %s3983 = sld [smem:[#allocation6 + $0x4e]]
      %v3984 = vstv %s3983
      %v3985 = vmul.f32 %v2972, %v3984
      %v3986 = vmul.f32 %v2973, %v3984
      %v3987 = vmul.f32 %v2974, %v3984
      %3991 = vrot.lane.b32.xlu0 %v3985, 127
      %v3992 = vpop.permute.xlu0 %3991
      %3993 = vrot.lane.b32.xlu0 %v3986, 127
      %v3994 = vpop.permute.xlu0 %3993
      %3995 = vrot.lane.b32.xlu0 %v3987, 127
      %v3996 = vpop.permute.xlu0 %3995
      %v4000 = vadd.f32 %v3980, %v3992
      %v4001 = vadd.f32 %v3981, %v3994
      %v4002 = vadd.f32 %v3982, %v3996
      %s4003 = sld [smem:[#allocation6 + $0x1e]]
      %v4004 = vstv %s4003
      %v4005 = vmul.f32 %v2968, %v4004
      %v4006 = vmul.f32 %v2969, %v4004
      %v4007 = vmul.f32 %v2970, %v4004
      %4011 = vrot.lane.b32.xlu0 %v4005, 126
      %v4012 = vpop.permute.xlu0 %4011
      %4013 = vrot.lane.b32.xlu0 %v4006, 126
      %v4014 = vpop.permute.xlu0 %4013
      %4015 = vrot.lane.b32.xlu0 %v4007, 126
      %v4016 = vpop.permute.xlu0 %4015
      %v4020 = vadd.f32 %v4000, %v4012
      %v4021 = vadd.f32 %v4001, %v4014
      %v4022 = vadd.f32 %v4002, %v4016
      %s4023 = sld [smem:[#allocation6 + $0x4f]]
      %v4024 = vstv %s4023
      %v4025 = vmul.f32 %v2972, %v4024
      %v4026 = vmul.f32 %v2973, %v4024
      %v4027 = vmul.f32 %v2974, %v4024
      %4031 = vrot.lane.b32.xlu0 %v4025, 126
      %v4032 = vpop.permute.xlu0 %4031
      %4033 = vrot.lane.b32.xlu0 %v4026, 126
      %v4034 = vpop.permute.xlu0 %4033
      %4035 = vrot.lane.b32.xlu0 %v4027, 126
      %v4036 = vpop.permute.xlu0 %4035
      %v4040 = vadd.f32 %v4020, %v4032
      %v4041 = vadd.f32 %v4021, %v4034
      %v4042 = vadd.f32 %v4022, %v4036
      %s4043 = sld [smem:[#allocation6 + $0x1f]]
      %v4044 = vstv %s4043
      %v4045 = vmul.f32 %v2968, %v4044
      %v4046 = vmul.f32 %v2969, %v4044
      %v4047 = vmul.f32 %v2970, %v4044
      %4051 = vrot.lane.b32.xlu0 %v4045, 125
      %v4052 = vpop.permute.xlu0 %4051
      %4053 = vrot.lane.b32.xlu0 %v4046, 125
      %v4054 = vpop.permute.xlu0 %4053
      %4055 = vrot.lane.b32.xlu0 %v4047, 125
      %v4056 = vpop.permute.xlu0 %4055
      %v4060 = vadd.f32 %v4040, %v4052
      %v4061 = vadd.f32 %v4041, %v4054
      %v4062 = vadd.f32 %v4042, %v4056
      %s4063 = sld [smem:[#allocation6 + $0x50]]
      %v4064 = vstv %s4063
      %v4065 = vmul.f32 %v2972, %v4064
      %v4066 = vmul.f32 %v2973, %v4064
      %v4067 = vmul.f32 %v2974, %v4064
      %4071 = vrot.lane.b32.xlu0 %v4065, 125
      %v4072 = vpop.permute.xlu0 %4071
      %4073 = vrot.lane.b32.xlu0 %v4066, 125
      %v4074 = vpop.permute.xlu0 %4073
      %4075 = vrot.lane.b32.xlu0 %v4067, 125
      %v4076 = vpop.permute.xlu0 %4075
      %v4080 = vadd.f32 %v4060, %v4072
      %v4081 = vadd.f32 %v4061, %v4074
      %v4082 = vadd.f32 %v4062, %v4076
      %s4083 = sld [smem:[#allocation6 + $0x20]]
      %v4084 = vstv %s4083
      %v4085 = vmul.f32 %v2968, %v4084
      %v4086 = vmul.f32 %v2969, %v4084
      %v4087 = vmul.f32 %v2970, %v4084
      %4091 = vrot.lane.b32.xlu0 %v4085, 124
      %v4092 = vpop.permute.xlu0 %4091
      %4093 = vrot.lane.b32.xlu0 %v4086, 124
      %v4094 = vpop.permute.xlu0 %4093
      %4095 = vrot.lane.b32.xlu0 %v4087, 124
      %v4096 = vpop.permute.xlu0 %4095
      %v4100 = vadd.f32 %v4080, %v4092
      %v4101 = vadd.f32 %v4081, %v4094
      %v4102 = vadd.f32 %v4082, %v4096
      %s4103 = sld [smem:[#allocation6 + $0x51]]
      %v4104 = vstv %s4103
      %v4105 = vmul.f32 %v2972, %v4104
      %v4106 = vmul.f32 %v2973, %v4104
      %v4107 = vmul.f32 %v2974, %v4104
      %4111 = vrot.lane.b32.xlu0 %v4105, 124
      %v4112 = vpop.permute.xlu0 %4111
      %4113 = vrot.lane.b32.xlu0 %v4106, 124
      %v4114 = vpop.permute.xlu0 %4113
      %4115 = vrot.lane.b32.xlu0 %v4107, 124
      %v4116 = vpop.permute.xlu0 %4115
      %v4120 = vadd.f32 %v4100, %v4112
      %v4121 = vadd.f32 %v4101, %v4114
      %v4122 = vadd.f32 %v4102, %v4116
      %s4123 = sld [smem:[#allocation6 + $0x21]]
      %v4124 = vstv %s4123
      %v4125 = vmul.f32 %v2968, %v4124
      %v4126 = vmul.f32 %v2969, %v4124
      %v4127 = vmul.f32 %v2970, %v4124
      %4131 = vrot.lane.b32.xlu0 %v4125, 123
      %v4132 = vpop.permute.xlu0 %4131
      %4133 = vrot.lane.b32.xlu0 %v4126, 123
      %v4134 = vpop.permute.xlu0 %4133
      %4135 = vrot.lane.b32.xlu0 %v4127, 123
      %v4136 = vpop.permute.xlu0 %4135
      %v4140 = vadd.f32 %v4120, %v4132
      %v4141 = vadd.f32 %v4121, %v4134
      %v4142 = vadd.f32 %v4122, %v4136
      %s4143 = sld [smem:[#allocation6 + $0x52]]
      %v4144 = vstv %s4143
      %v4145 = vmul.f32 %v2972, %v4144
      %v4146 = vmul.f32 %v2973, %v4144
      %v4147 = vmul.f32 %v2974, %v4144
      %4151 = vrot.lane.b32.xlu0 %v4145, 123
      %v4152 = vpop.permute.xlu0 %4151
      %4153 = vrot.lane.b32.xlu0 %v4146, 123
      %v4154 = vpop.permute.xlu0 %4153
      %4155 = vrot.lane.b32.xlu0 %v4147, 123
      %v4156 = vpop.permute.xlu0 %4155
      %v4160 = vadd.f32 %v4140, %v4152
      %v4161 = vadd.f32 %v4141, %v4154
      %v4162 = vadd.f32 %v4142, %v4156
      %s4163 = sld [smem:[#allocation6 + $0x22]]
      %v4164 = vstv %s4163
      %v4165 = vmul.f32 %v2968, %v4164
      %v4166 = vmul.f32 %v2969, %v4164
      %v4167 = vmul.f32 %v2970, %v4164
      %4171 = vrot.lane.b32.xlu0 %v4165, 122
      %v4172 = vpop.permute.xlu0 %4171
      %4173 = vrot.lane.b32.xlu0 %v4166, 122
      %v4174 = vpop.permute.xlu0 %4173
      %4175 = vrot.lane.b32.xlu0 %v4167, 122
      %v4176 = vpop.permute.xlu0 %4175
      %v4180 = vadd.f32 %v4160, %v4172
      %v4181 = vadd.f32 %v4161, %v4174
      %v4182 = vadd.f32 %v4162, %v4176
      %s4183 = sld [smem:[#allocation6 + $0x53]]
      %v4184 = vstv %s4183
      %v4185 = vmul.f32 %v2972, %v4184
      %v4186 = vmul.f32 %v2973, %v4184
      %v4187 = vmul.f32 %v2974, %v4184
      %4191 = vrot.lane.b32.xlu0 %v4185, 122
      %v4192 = vpop.permute.xlu0 %4191
      %4193 = vrot.lane.b32.xlu0 %v4186, 122
      %v4194 = vpop.permute.xlu0 %4193
      %4195 = vrot.lane.b32.xlu0 %v4187, 122
      %v4196 = vpop.permute.xlu0 %4195
      %v4200 = vadd.f32 %v4180, %v4192
      %v4201 = vadd.f32 %v4181, %v4194
      %v4202 = vadd.f32 %v4182, %v4196
      %v4206 = vrot.slane %v4200, 4
      %v4207 = vrot.slane %v4201, 4
      %v4208 = vsel %vm2230, %v4206, %v4207
      %v4209 = vrot.slane %v4202, 4
      %v4210 = vsel %vm2230, %v4207, %v4209
      %v4213 = vadd.f32 %v3948, %v4208
      %v4214 = vadd.f32 %v3949, %v4210
      %s4215 = sld [smem:[#allocation6 + $0x23]]
      %v4216 = vstv %s4215
      %v4217 = vmul.f32 %v2968, %v4216
      %v4218 = vmul.f32 %v2969, %v4216
      %v4219 = vmul.f32 %v2970, %v4216
      %s4220 = sld [smem:[#allocation6 + $0x54]]
      %v4221 = vstv %s4220
      %v4222 = vmul.f32 %v2972, %v4221
      %v4223 = vmul.f32 %v2973, %v4221
      %v4224 = vmul.f32 %v2974, %v4221
      %v4225 = vadd.f32 %v4217, %v4222
      %v4226 = vadd.f32 %v4218, %v4223
      %v4227 = vadd.f32 %v4219, %v4224
      %s4228 = sld [smem:[#allocation6 + $0x24]]
      %v4229 = vstv %s4228
      %v4230 = vmul.f32 %v2968, %v4229
      %v4231 = vmul.f32 %v2969, %v4229
      %v4232 = vmul.f32 %v2970, %v4229
      %4236 = vrot.lane.b32.xlu0 %v4230, 127
      %v4237 = vpop.permute.xlu0 %4236
      %4238 = vrot.lane.b32.xlu0 %v4231, 127
      %v4239 = vpop.permute.xlu0 %4238
      %4240 = vrot.lane.b32.xlu0 %v4232, 127
      %v4241 = vpop.permute.xlu0 %4240
      %v4245 = vadd.f32 %v4225, %v4237
      %v4246 = vadd.f32 %v4226, %v4239
      %v4247 = vadd.f32 %v4227, %v4241
      %s4248 = sld [smem:[#allocation6 + $0x55]]
      %v4249 = vstv %s4248
      %v4250 = vmul.f32 %v2972, %v4249
      %v4251 = vmul.f32 %v2973, %v4249
      %v4252 = vmul.f32 %v2974, %v4249
      %4256 = vrot.lane.b32.xlu0 %v4250, 127
      %v4257 = vpop.permute.xlu0 %4256
      %4258 = vrot.lane.b32.xlu0 %v4251, 127
      %v4259 = vpop.permute.xlu0 %4258
      %4260 = vrot.lane.b32.xlu0 %v4252, 127
      %v4261 = vpop.permute.xlu0 %4260
      %v4265 = vadd.f32 %v4245, %v4257
      %v4266 = vadd.f32 %v4246, %v4259
      %v4267 = vadd.f32 %v4247, %v4261
      %s4268 = sld [smem:[#allocation6 + $0x25]]
      %v4269 = vstv %s4268
      %v4270 = vmul.f32 %v2968, %v4269
      %v4271 = vmul.f32 %v2969, %v4269
      %v4272 = vmul.f32 %v2970, %v4269
      %4276 = vrot.lane.b32.xlu0 %v4270, 126
      %v4277 = vpop.permute.xlu0 %4276
      %4278 = vrot.lane.b32.xlu0 %v4271, 126
      %v4279 = vpop.permute.xlu0 %4278
      %4280 = vrot.lane.b32.xlu0 %v4272, 126
      %v4281 = vpop.permute.xlu0 %4280
      %v4285 = vadd.f32 %v4265, %v4277
      %v4286 = vadd.f32 %v4266, %v4279
      %v4287 = vadd.f32 %v4267, %v4281
      %s4288 = sld [smem:[#allocation6 + $0x56]]
      %v4289 = vstv %s4288
      %v4290 = vmul.f32 %v2972, %v4289
      %v4291 = vmul.f32 %v2973, %v4289
      %v4292 = vmul.f32 %v2974, %v4289
      %4296 = vrot.lane.b32.xlu0 %v4290, 126
      %v4297 = vpop.permute.xlu0 %4296
      %4298 = vrot.lane.b32.xlu0 %v4291, 126
      %v4299 = vpop.permute.xlu0 %4298
      %4300 = vrot.lane.b32.xlu0 %v4292, 126
      %v4301 = vpop.permute.xlu0 %4300
      %v4305 = vadd.f32 %v4285, %v4297
      %v4306 = vadd.f32 %v4286, %v4299
      %v4307 = vadd.f32 %v4287, %v4301
      %s4308 = sld [smem:[#allocation6 + $0x26]]
      %v4309 = vstv %s4308
      %v4310 = vmul.f32 %v2968, %v4309
      %v4311 = vmul.f32 %v2969, %v4309
      %v4312 = vmul.f32 %v2970, %v4309
      %4316 = vrot.lane.b32.xlu0 %v4310, 125
      %v4317 = vpop.permute.xlu0 %4316
      %4318 = vrot.lane.b32.xlu0 %v4311, 125
      %v4319 = vpop.permute.xlu0 %4318
      %4320 = vrot.lane.b32.xlu0 %v4312, 125
      %v4321 = vpop.permute.xlu0 %4320
      %v4325 = vadd.f32 %v4305, %v4317
      %v4326 = vadd.f32 %v4306, %v4319
      %v4327 = vadd.f32 %v4307, %v4321
      %s4328 = sld [smem:[#allocation6 + $0x57]]
      %v4329 = vstv %s4328
      %v4330 = vmul.f32 %v2972, %v4329
      %v4331 = vmul.f32 %v2973, %v4329
      %v4332 = vmul.f32 %v2974, %v4329
      %4336 = vrot.lane.b32.xlu0 %v4330, 125
      %v4337 = vpop.permute.xlu0 %4336
      %4338 = vrot.lane.b32.xlu0 %v4331, 125
      %v4339 = vpop.permute.xlu0 %4338
      %4340 = vrot.lane.b32.xlu0 %v4332, 125
      %v4341 = vpop.permute.xlu0 %4340
      %v4345 = vadd.f32 %v4325, %v4337
      %v4346 = vadd.f32 %v4326, %v4339
      %v4347 = vadd.f32 %v4327, %v4341
      %s4348 = sld [smem:[#allocation6 + $0x27]]
      %v4349 = vstv %s4348
      %v4350 = vmul.f32 %v2968, %v4349
      %v4351 = vmul.f32 %v2969, %v4349
      %v4352 = vmul.f32 %v2970, %v4349
      %4356 = vrot.lane.b32.xlu0 %v4350, 124
      %v4357 = vpop.permute.xlu0 %4356
      %4358 = vrot.lane.b32.xlu0 %v4351, 124
      %v4359 = vpop.permute.xlu0 %4358
      %4360 = vrot.lane.b32.xlu0 %v4352, 124
      %v4361 = vpop.permute.xlu0 %4360
      %v4365 = vadd.f32 %v4345, %v4357
      %v4366 = vadd.f32 %v4346, %v4359
      %v4367 = vadd.f32 %v4347, %v4361
      %s4368 = sld [smem:[#allocation6 + $0x58]]
      %v4369 = vstv %s4368
      %v4370 = vmul.f32 %v2972, %v4369
      %v4371 = vmul.f32 %v2973, %v4369
      %v4372 = vmul.f32 %v2974, %v4369
      %4376 = vrot.lane.b32.xlu0 %v4370, 124
      %v4377 = vpop.permute.xlu0 %4376
      %4378 = vrot.lane.b32.xlu0 %v4371, 124
      %v4379 = vpop.permute.xlu0 %4378
      %4380 = vrot.lane.b32.xlu0 %v4372, 124
      %v4381 = vpop.permute.xlu0 %4380
      %v4385 = vadd.f32 %v4365, %v4377
      %v4386 = vadd.f32 %v4366, %v4379
      %v4387 = vadd.f32 %v4367, %v4381
      %s4388 = sld [smem:[#allocation6 + $0x28]]
      %v4389 = vstv %s4388
      %v4390 = vmul.f32 %v2968, %v4389
      %v4391 = vmul.f32 %v2969, %v4389
      %v4392 = vmul.f32 %v2970, %v4389
      %4396 = vrot.lane.b32.xlu0 %v4390, 123
      %v4397 = vpop.permute.xlu0 %4396
      %4398 = vrot.lane.b32.xlu0 %v4391, 123
      %v4399 = vpop.permute.xlu0 %4398
      %4400 = vrot.lane.b32.xlu0 %v4392, 123
      %v4401 = vpop.permute.xlu0 %4400
      %v4405 = vadd.f32 %v4385, %v4397
      %v4406 = vadd.f32 %v4386, %v4399
      %v4407 = vadd.f32 %v4387, %v4401
      %s4408 = sld [smem:[#allocation6 + $0x59]]
      %v4409 = vstv %s4408
      %v4410 = vmul.f32 %v2972, %v4409
      %v4411 = vmul.f32 %v2973, %v4409
      %v4412 = vmul.f32 %v2974, %v4409
      %4416 = vrot.lane.b32.xlu0 %v4410, 123
      %v4417 = vpop.permute.xlu0 %4416
      %4418 = vrot.lane.b32.xlu0 %v4411, 123
      %v4419 = vpop.permute.xlu0 %4418
      %4420 = vrot.lane.b32.xlu0 %v4412, 123
      %v4421 = vpop.permute.xlu0 %4420
      %v4425 = vadd.f32 %v4405, %v4417
      %v4426 = vadd.f32 %v4406, %v4419
      %v4427 = vadd.f32 %v4407, %v4421
      %s4428 = sld [smem:[#allocation6 + $0x29]]
      %v4429 = vstv %s4428
      %v4430 = vmul.f32 %v2968, %v4429
      %v4431 = vmul.f32 %v2969, %v4429
      %v4432 = vmul.f32 %v2970, %v4429
      %4436 = vrot.lane.b32.xlu0 %v4430, 122
      %v4437 = vpop.permute.xlu0 %4436
      %4438 = vrot.lane.b32.xlu0 %v4431, 122
      %v4439 = vpop.permute.xlu0 %4438
      %4440 = vrot.lane.b32.xlu0 %v4432, 122
      %v4441 = vpop.permute.xlu0 %4440
      %v4445 = vadd.f32 %v4425, %v4437
      %v4446 = vadd.f32 %v4426, %v4439
      %v4447 = vadd.f32 %v4427, %v4441
      %s4448 = sld [smem:[#allocation6 + $0x5a]]
      %v4449 = vstv %s4448
      %v4450 = vmul.f32 %v2972, %v4449
      %v4451 = vmul.f32 %v2973, %v4449
      %v4452 = vmul.f32 %v2974, %v4449
      %4456 = vrot.lane.b32.xlu0 %v4450, 122
      %v4457 = vpop.permute.xlu0 %4456
      %4458 = vrot.lane.b32.xlu0 %v4451, 122
      %v4459 = vpop.permute.xlu0 %4458
      %4460 = vrot.lane.b32.xlu0 %v4452, 122
      %v4461 = vpop.permute.xlu0 %4460
      %v4465 = vadd.f32 %v4445, %v4457
      %v4466 = vadd.f32 %v4446, %v4459
      %v4467 = vadd.f32 %v4447, %v4461
      %v4471 = vrot.slane %v4465, 5
      %v4472 = vrot.slane %v4466, 5
      %v4473 = vsel %vm2496, %v4471, %v4472
      %v4474 = vrot.slane %v4467, 5
      %v4475 = vsel %vm2496, %v4472, %v4474
      %v4478 = vadd.f32 %v4213, %v4473
      %v4479 = vadd.f32 %v4214, %v4475
      %s4480 = sld [smem:[#allocation6 + $0x2a]]
      %v4481 = vstv %s4480
      %v4482 = vmul.f32 %v2968, %v4481
      %v4483 = vmul.f32 %v2969, %v4481
      %v4484 = vmul.f32 %v2970, %v4481
      %s4485 = sld [smem:[#allocation6 + $0x5b]]
      %v4486 = vstv %s4485
      %v4487 = vmul.f32 %v2972, %v4486
      %v4488 = vmul.f32 %v2973, %v4486
      %v4489 = vmul.f32 %v2974, %v4486
      %v4490 = vadd.f32 %v4482, %v4487
      %v4491 = vadd.f32 %v4483, %v4488
      %v4492 = vadd.f32 %v4484, %v4489
      %s4493 = sld [smem:[#allocation6 + $0x2b]]
      %v4494 = vstv %s4493
      %v4495 = vmul.f32 %v2968, %v4494
      %v4496 = vmul.f32 %v2969, %v4494
      %v4497 = vmul.f32 %v2970, %v4494
      %4501 = vrot.lane.b32.xlu0 %v4495, 127
      %v4502 = vpop.permute.xlu0 %4501
      %4503 = vrot.lane.b32.xlu0 %v4496, 127
      %v4504 = vpop.permute.xlu0 %4503
      %4505 = vrot.lane.b32.xlu0 %v4497, 127
      %v4506 = vpop.permute.xlu0 %4505
      %v4510 = vadd.f32 %v4490, %v4502
      %v4511 = vadd.f32 %v4491, %v4504
      %v4512 = vadd.f32 %v4492, %v4506
      %s4513 = sld [smem:[#allocation6 + $0x5c]]
      %v4514 = vstv %s4513
      %v4515 = vmul.f32 %v2972, %v4514
      %v4516 = vmul.f32 %v2973, %v4514
      %v4517 = vmul.f32 %v2974, %v4514
      %4521 = vrot.lane.b32.xlu0 %v4515, 127
      %v4522 = vpop.permute.xlu0 %4521
      %4523 = vrot.lane.b32.xlu0 %v4516, 127
      %v4524 = vpop.permute.xlu0 %4523
      %4525 = vrot.lane.b32.xlu0 %v4517, 127
      %v4526 = vpop.permute.xlu0 %4525
      %v4530 = vadd.f32 %v4510, %v4522
      %v4531 = vadd.f32 %v4511, %v4524
      %v4532 = vadd.f32 %v4512, %v4526
      %s4533 = sld [smem:[#allocation6 + $0x2c]]
      %v4534 = vstv %s4533
      %v4535 = vmul.f32 %v2968, %v4534
      %v4536 = vmul.f32 %v2969, %v4534
      %v4537 = vmul.f32 %v2970, %v4534
      %4541 = vrot.lane.b32.xlu0 %v4535, 126
      %v4542 = vpop.permute.xlu0 %4541
      %4543 = vrot.lane.b32.xlu0 %v4536, 126
      %v4544 = vpop.permute.xlu0 %4543
      %4545 = vrot.lane.b32.xlu0 %v4537, 126
      %v4546 = vpop.permute.xlu0 %4545
      %v4550 = vadd.f32 %v4530, %v4542
      %v4551 = vadd.f32 %v4531, %v4544
      %v4552 = vadd.f32 %v4532, %v4546
      %s4553 = sld [smem:[#allocation6 + $0x5d]]
      %v4554 = vstv %s4553
      %v4555 = vmul.f32 %v2972, %v4554
      %v4556 = vmul.f32 %v2973, %v4554
      %v4557 = vmul.f32 %v2974, %v4554
      %4561 = vrot.lane.b32.xlu0 %v4555, 126
      %v4562 = vpop.permute.xlu0 %4561
      %4563 = vrot.lane.b32.xlu0 %v4556, 126
      %v4564 = vpop.permute.xlu0 %4563
      %4565 = vrot.lane.b32.xlu0 %v4557, 126
      %v4566 = vpop.permute.xlu0 %4565
      %v4570 = vadd.f32 %v4550, %v4562
      %v4571 = vadd.f32 %v4551, %v4564
      %v4572 = vadd.f32 %v4552, %v4566
      %s4573 = sld [smem:[#allocation6 + $0x2d]]
      %v4574 = vstv %s4573
      %v4575 = vmul.f32 %v2968, %v4574
      %v4576 = vmul.f32 %v2969, %v4574
      %v4577 = vmul.f32 %v2970, %v4574
      %4581 = vrot.lane.b32.xlu0 %v4575, 125
      %v4582 = vpop.permute.xlu0 %4581
      %4583 = vrot.lane.b32.xlu0 %v4576, 125
      %v4584 = vpop.permute.xlu0 %4583
      %4585 = vrot.lane.b32.xlu0 %v4577, 125
      %v4586 = vpop.permute.xlu0 %4585
      %v4590 = vadd.f32 %v4570, %v4582
      %v4591 = vadd.f32 %v4571, %v4584
      %v4592 = vadd.f32 %v4572, %v4586
      %s4593 = sld [smem:[#allocation6 + $0x5e]]
      %v4594 = vstv %s4593
      %v4595 = vmul.f32 %v2972, %v4594
      %v4596 = vmul.f32 %v2973, %v4594
      %v4597 = vmul.f32 %v2974, %v4594
      %4601 = vrot.lane.b32.xlu0 %v4595, 125
      %v4602 = vpop.permute.xlu0 %4601
      %4603 = vrot.lane.b32.xlu0 %v4596, 125
      %v4604 = vpop.permute.xlu0 %4603
      %4605 = vrot.lane.b32.xlu0 %v4597, 125
      %v4606 = vpop.permute.xlu0 %4605
      %v4610 = vadd.f32 %v4590, %v4602
      %v4611 = vadd.f32 %v4591, %v4604
      %v4612 = vadd.f32 %v4592, %v4606
      %s4613 = sld [smem:[#allocation6 + $0x2e]]
      %v4614 = vstv %s4613
      %v4615 = vmul.f32 %v2968, %v4614
      %v4616 = vmul.f32 %v2969, %v4614
      %v4617 = vmul.f32 %v2970, %v4614
      %4621 = vrot.lane.b32.xlu0 %v4615, 124
      %v4622 = vpop.permute.xlu0 %4621
      %4623 = vrot.lane.b32.xlu0 %v4616, 124
      %v4624 = vpop.permute.xlu0 %4623
      %4625 = vrot.lane.b32.xlu0 %v4617, 124
      %v4626 = vpop.permute.xlu0 %4625
      %v4630 = vadd.f32 %v4610, %v4622
      %v4631 = vadd.f32 %v4611, %v4624
      %v4632 = vadd.f32 %v4612, %v4626
      %s4633 = sld [smem:[#allocation6 + $0x5f]]
      %v4634 = vstv %s4633
      %v4635 = vmul.f32 %v2972, %v4634
      %v4636 = vmul.f32 %v2973, %v4634
      %v4637 = vmul.f32 %v2974, %v4634
      %4641 = vrot.lane.b32.xlu0 %v4635, 124
      %v4642 = vpop.permute.xlu0 %4641
      %4643 = vrot.lane.b32.xlu0 %v4636, 124
      %v4644 = vpop.permute.xlu0 %4643
      %4645 = vrot.lane.b32.xlu0 %v4637, 124
      %v4646 = vpop.permute.xlu0 %4645
      %v4650 = vadd.f32 %v4630, %v4642
      %v4651 = vadd.f32 %v4631, %v4644
      %v4652 = vadd.f32 %v4632, %v4646
      %s4653 = sld [smem:[#allocation6 + $0x2f]]
      %v4654 = vstv %s4653
      %v4655 = vmul.f32 %v2968, %v4654
      %v4656 = vmul.f32 %v2969, %v4654
      %v4657 = vmul.f32 %v2970, %v4654
      %4661 = vrot.lane.b32.xlu0 %v4655, 123
      %v4662 = vpop.permute.xlu0 %4661
      %4663 = vrot.lane.b32.xlu0 %v4656, 123
      %v4664 = vpop.permute.xlu0 %4663
      %4665 = vrot.lane.b32.xlu0 %v4657, 123
      %v4666 = vpop.permute.xlu0 %4665
      %v4670 = vadd.f32 %v4650, %v4662
      %v4671 = vadd.f32 %v4651, %v4664
      %v4672 = vadd.f32 %v4652, %v4666
      %s4673 = sld [smem:[#allocation6 + $0x60]]
      %v4674 = vstv %s4673
      %v4675 = vmul.f32 %v2972, %v4674
      %v4676 = vmul.f32 %v2973, %v4674
      %v4677 = vmul.f32 %v2974, %v4674
      %4681 = vrot.lane.b32.xlu0 %v4675, 123
      %v4682 = vpop.permute.xlu0 %4681
      %4683 = vrot.lane.b32.xlu0 %v4676, 123
      %v4684 = vpop.permute.xlu0 %4683
      %4685 = vrot.lane.b32.xlu0 %v4677, 123
      %v4686 = vpop.permute.xlu0 %4685
      %v4690 = vadd.f32 %v4670, %v4682
      %v4691 = vadd.f32 %v4671, %v4684
      %v4692 = vadd.f32 %v4672, %v4686
      %s4693 = sld [smem:[#allocation6 + $0x30]]
      %v4694 = vstv %s4693
      %v4695 = vmul.f32 %v2968, %v4694
      %v4696 = vmul.f32 %v2969, %v4694
      %v4697 = vmul.f32 %v2970, %v4694
      %4701 = vrot.lane.b32.xlu0 %v4695, 122
      %v4702 = vpop.permute.xlu0 %4701
      %4703 = vrot.lane.b32.xlu0 %v4696, 122
      %v4704 = vpop.permute.xlu0 %4703
      %4705 = vrot.lane.b32.xlu0 %v4697, 122
      %v4706 = vpop.permute.xlu0 %4705
      %v4710 = vadd.f32 %v4690, %v4702
      %v4711 = vadd.f32 %v4691, %v4704
      %v4712 = vadd.f32 %v4692, %v4706
      %s4713 = sld [smem:[#allocation6 + $0x61]]
      %v4714 = vstv %s4713
      %v4715 = vmul.f32 %v2972, %v4714
      %v4716 = vmul.f32 %v2973, %v4714
      %v4717 = vmul.f32 %v2974, %v4714
      %4721 = vrot.lane.b32.xlu0 %v4715, 122
      %v4722 = vpop.permute.xlu0 %4721
      %4723 = vrot.lane.b32.xlu0 %v4716, 122
      %v4724 = vpop.permute.xlu0 %4723
      %4725 = vrot.lane.b32.xlu0 %v4717, 122
      %v4726 = vpop.permute.xlu0 %4725
      %v4730 = vadd.f32 %v4710, %v4722
      %v4731 = vadd.f32 %v4711, %v4724
      %v4732 = vadd.f32 %v4712, %v4726
      %v4736 = vrot.slane %v4730, 6
      %v4737 = vrot.slane %v4731, 6
      %v4738 = vsel %vm2762, %v4736, %v4737
      %v4739 = vrot.slane %v4732, 6
      %v4740 = vsel %vm2762, %v4737, %v4739
      %v4743 = vadd.f32 %v4478, %v4738
      %v4744 = vadd.f32 %v4479, %v4740
      %v4745 = vxor.u32 %v4743, 2147483648
      %v4746 = vxor.u32 %v4744, 2147483648
      %v4747 = vmul.f32 %v4745, 1.442695
      %v4748 = vpow.pop %v4747
      %v4749 = vmul.f32 %v4746, 1.442695
      %v4750 = vpow.pop %v4749
      %v4751 = vadd.f32 %v4748, 1.0
      %v4752 = vadd.f32 %v4750, 1.0
      %v4753 = vrcp.pop %v4751
      %v4754 = vmul.f32 1.0, %v4753
      %v4755 = vrcp.pop %v4752
      %v4756 = vmul.f32 1.0, %v4755
      %s4757 = scalar_lea.vmem [#allocation11], 2
      %4758 = vst.msk [vmem:[%s4757] sm:$0x1] %vm2787, %v4754
      %v4761 = vunpack.c.l.s4 1966171168
      %v4762 = vunpack.c.0.s8 %v4761
      %v4763 = vlaneseq
      %v4764 = vshrl.u32 %v4763, 7
      %v4765 = vsub.s32 %v4762, %v4764
      %v4766 = vrot.slane %v4754, %v4765
      %v4767 = vcombine.high %v4766, %v4766
      %v4769 = vunpack.c.l.s4 1966171168
      %v4770 = vunpack.c.0.s8 %v4769
      %v4771 = vlaneseq
      %v4772 = vshrl.u32 %v4771, 7
      %v4773 = vsub.s32 %v4770, %v4772
      %v4774 = vrot.slane %v4766, %v4773
      %v4776 = vunpack.c.l.s4 1966171168
      %v4777 = vunpack.c.0.s8 %v4776
      %v4778 = vlaneseq
      %v4779 = vshrl.u32 %v4778, 7
      %v4780 = vsub.s32 %v4777, %v4779
      %v4781 = vrot.slane %v4767, %v4780
      %4782 = vrot.lane.b32.xlu0 %v4781, 16
      %v4783 = vpop.permute.xlu0 %4782
      %4785 = vst.msk [vmem:[%s4757] sm:$0x1] %vm2817, %v4783
      %v4786 = vcombine.high %v4774, %v4774
      %4787 = vrot.lane.b32.xlu0 %v4786, 32
      %v4788 = vpop.permute.xlu0 %4787
      %4790 = vst.msk [vmem:[%s4757] sm:$0x1] %vm2825, %v4788
      %v4791 = vcombine.high %v4781, %v4781
      %4792 = vrot.lane.b32.xlu0 %v4791, 48
      %v4793 = vpop.permute.xlu0 %4792
      %4795 = vst.msk [vmem:[%s4757] sm:$0x1] %vm2833, %v4793
      %v4796 = vcombine.high %v4754, %v4754
      %v4798 = vunpack.c.l.s4 1966171168
      %v4799 = vunpack.c.0.s8 %v4798
      %v4800 = vlaneseq
      %v4801 = vshrl.u32 %v4800, 7
      %v4802 = vsub.s32 %v4799, %v4801
      %v4803 = vrot.slane %v4796, %v4802
      %v4805 = vunpack.c.l.s4 1966171168
      %v4806 = vunpack.c.0.s8 %v4805
      %v4807 = vlaneseq
      %v4808 = vshrl.u32 %v4807, 7
      %v4809 = vsub.s32 %v4806, %v4808
      %v4810 = vrot.slane %v4803, %v4809
      %4811 = vrot.lane.b32.xlu0 %v4810, 64
      %v4812 = vpop.permute.xlu0 %4811
      %4814 = vst.msk [vmem:[%s4757] sm:$0x1] %vm2855, %v4812
      %v4815 = vcombine.high %v4803, %v4803
      %v4817 = vunpack.c.l.s4 1966171168
      %v4818 = vunpack.c.0.s8 %v4817
      %v4819 = vlaneseq
      %v4820 = vshrl.u32 %v4819, 7
      %v4821 = vsub.s32 %v4818, %v4820
      %v4822 = vrot.slane %v4815, %v4821
      %4823 = vrot.lane.b32.xlu0 %v4822, 80
      %v4824 = vpop.permute.xlu0 %4823
      %4826 = vst.msk [vmem:[%s4757] sm:$0x1] %vm2870, %v4824
      %v4827 = vcombine.high %v4810, %v4810
      %4828 = vrot.lane.b32.xlu0 %v4827, 96
      %v4829 = vpop.permute.xlu0 %4828
      %4831 = vst.msk [vmem:[%s4757] sm:$0x1] %vm2878, %v4829
      %v4832 = vcombine.high %v4822, %v4822
      %4833 = vrot.lane.b32.xlu0 %v4832, 112
      %v4834 = vpop.permute.xlu0 %4833
      %4836 = vst.msk [vmem:[%s4757] sm:$0x1] %vm2886, %v4834
      %4837 = vst.msk [vmem:[%s4757 + $0x1] sm:$0x1] %vm2787, %v4756
      %v4840 = vunpack.c.l.s4 1966171168
      %v4841 = vunpack.c.0.s8 %v4840
      %v4842 = vlaneseq
      %v4843 = vshrl.u32 %v4842, 7
      %v4844 = vsub.s32 %v4841, %v4843
      %v4845 = vrot.slane %v4756, %v4844
      %v4846 = vcombine.high %v4845, %v4845
      %v4848 = vunpack.c.l.s4 1966171168
      %v4849 = vunpack.c.0.s8 %v4848
      %v4850 = vlaneseq
      %v4851 = vshrl.u32 %v4850, 7
      %v4852 = vsub.s32 %v4849, %v4851
      %v4853 = vrot.slane %v4845, %v4852
      %v4855 = vunpack.c.l.s4 1966171168
      %v4856 = vunpack.c.0.s8 %v4855
      %v4857 = vlaneseq
      %v4858 = vshrl.u32 %v4857, 7
      %v4859 = vsub.s32 %v4856, %v4858
      %v4860 = vrot.slane %v4846, %v4859
      %4861 = vrot.lane.b32.xlu0 %v4860, 16
      %v4862 = vpop.permute.xlu0 %4861
      %4864 = vst.msk [vmem:[%s4757 + $0x1] sm:$0x1] %vm2817, %v4862
      %v4865 = vcombine.high %v4853, %v4853
      %4866 = vrot.lane.b32.xlu0 %v4865, 32
      %v4867 = vpop.permute.xlu0 %4866
      %4869 = vst.msk [vmem:[%s4757 + $0x1] sm:$0x1] %vm2825, %v4867
      %v4870 = vcombine.high %v4860, %v4860
      %4871 = vrot.lane.b32.xlu0 %v4870, 48
      %v4872 = vpop.permute.xlu0 %4871
      %4874 = vst.msk [vmem:[%s4757 + $0x1] sm:$0x1] %vm2833, %v4872
      %v4875 = vcombine.high %v4756, %v4756
      %v4877 = vunpack.c.l.s4 1966171168
      %v4878 = vunpack.c.0.s8 %v4877
      %v4879 = vlaneseq
      %v4880 = vshrl.u32 %v4879, 7
      %v4881 = vsub.s32 %v4878, %v4880
      %v4882 = vrot.slane %v4875, %v4881
      %v4884 = vunpack.c.l.s4 1966171168
      %v4885 = vunpack.c.0.s8 %v4884
      %v4886 = vlaneseq
      %v4887 = vshrl.u32 %v4886, 7
      %v4888 = vsub.s32 %v4885, %v4887
      %v4889 = vrot.slane %v4882, %v4888
      %4890 = vrot.lane.b32.xlu0 %v4889, 64
      %v4891 = vpop.permute.xlu0 %4890
      %4893 = vst.msk [vmem:[%s4757 + $0x1] sm:$0x1] %vm2855, %v4891
      %v4894 = vcombine.high %v4882, %v4882
      %v4896 = vunpack.c.l.s4 1966171168
      %v4897 = vunpack.c.0.s8 %v4896
      %v4898 = vlaneseq
      %v4899 = vshrl.u32 %v4898, 7
      %v4900 = vsub.s32 %v4897, %v4899
      %v4901 = vrot.slane %v4894, %v4900
      %4902 = vrot.lane.b32.xlu0 %v4901, 80
      %v4903 = vpop.permute.xlu0 %4902
      %4905 = vst.msk [vmem:[%s4757 + $0x1] sm:$0x1] %vm2870, %v4903
      %v4906 = vcombine.high %v4889, %v4889
      %4907 = vrot.lane.b32.xlu0 %v4906, 96
      %v4908 = vpop.permute.xlu0 %4907
      %4910 = vst.msk [vmem:[%s4757 + $0x1] sm:$0x1] %vm2878, %v4908
      %v4911 = vcombine.high %v4901, %v4901
      %4912 = vrot.lane.b32.xlu0 %v4911, 112
      %v4913 = vpop.permute.xlu0 %4912
      %4915 = vst.msk [vmem:[%s4757 + $0x1] sm:$0x1] %vm2886, %v4913
    $region29: #{tpu_custom_call.1} parent=1 // pred_fallthru
      _
    // Predicated region
    $region30: #{tpu_custom_call.1} parent=1 // pred_check
      _
    $region31: #{tpu_custom_call.1} parent=1 // pred_check_branch
      %4917 = sbr.rel (0) target = $region33
    $region32: #{tpu_custom_call.1} parent=1 // pred_region
      %s4919 = ssub.s32 64, 64
      %4920 = vsyncadd [#allocation8], %s4919
      %s4921 = sshll.u32 [#allocation11], 4
      %s4922 = int_to_ptr.vmem [resolvable:$true] %s4921
      %4927 = dma.vmem_to_hbm [thread:$0]  %s4922, 64, %s2, [#allocation8], 32, 32, 2
    $region33: #{tpu_custom_call.1} parent=1 // pred_fallthru
      _
    // Predicated region
    $region34: #{tpu_custom_call.1} parent=1 // pred_check
      _
    $region35: #{tpu_custom_call.1} parent=1 // pred_check_branch
      %4929 = sbr.rel (0) target = $region37
    $region36: #{tpu_custom_call.1} parent=1 // pred_region
      %4930 = dma.done [#allocation8], 64
    $region37: #{tpu_custom_call.1} parent=1 // pred_fallthru
      _
    %4931 = vsyncpa [#allocation7], 1
    %4932 = vsyncpa [#allocation8], 1
    %4933 = vsyncpa [#allocation9], 1

</llo_original>
